<compile_context>
chip_gen: v5e
topology: v5e:2x2
jax: 0.10.0
libtpu: 0.0.40
codegen_flags: <defaults>
</compile_context>

<pallas_src>
import functools

import jax
import jax.numpy as jnp
from jax.experimental import pallas as pl
from jax.experimental.pallas import tpu as pltpu


def downblock_kernel(x_ref, w1_ref, b1_ref, w2_ref, b2_ref, c_ref, p_ref,
                     *, bt, H, W, Cin, Cout):
    """DownBlock on `bt` images.

    x_ref  : (bt, H+4, W*Cin)    bf16  input rows, vertically zero-padded by 2 each side,
                                       (width, channel) flattened into the lane axis
    w1_ref : (3, W*Cin,  W*Cout) bf16  banded conv1 weights (one band per kernel row dy)
    b1_ref : (1, W*Cout)         f32   conv1 bias tiled across width
    w2_ref : (3, W*Cout, W*Cout) bf16  banded conv2 weights
    b2_ref : (1, W*Cout)         f32
    c_ref  : (bt, H,    W*Cout)  f32   conv output (written exactly once, 128-lane store)
    p_ref  : (bt, H//2, W*Cout)  f32   pooled rows at full lane width; the valid pooled
                                       values sit in the odd Cout-groups (decimated in
                                       the wrapper)
    """
    WCo = W * Cout
    Hp = H + 2   # conv1 is evaluated on one extra (padding) row per side for conv2's halo

    def band_matmul(x3d, w_ref, n_rows):
        # out[b, y] = sum_dy x3d[b, y + dy, :] @ w_ref[dy]
        # LHS-shifted accumulation: three statically shifted row windows of the same slab
        # feed three MXU matmuls that accumulate into a single f32 value (interleaved so
        # only one accumulator tile is live -> low vreg pressure, no output shifting).
        L = x3d.shape[-1]
        acc = jnp.dot(x3d[:, 0:n_rows, :].reshape(bt * n_rows, L), w_ref[0],
                      preferred_element_type=jnp.float32)
        acc = acc + jnp.dot(x3d[:, 1:1 + n_rows, :].reshape(bt * n_rows, L), w_ref[1],
                            preferred_element_type=jnp.float32)
        acc = acc + jnp.dot(x3d[:, 2:2 + n_rows, :].reshape(bt * n_rows, L), w_ref[2],
                            preferred_element_type=jnp.float32)
        return acc.reshape(bt, n_rows, WCo)

    # ---- conv1 + bias + ReLU (computed on H+2 rows so rows 0 / H+1 become conv2's halo)
    x = x_ref[...]                                                     # (bt, H+4, W*Cin) bf16
    h1 = jnp.maximum(band_matmul(x, w1_ref, Hp) + b1_ref[...], 0.0)    # (bt, H+2, WCo) f32
    # Rows 0 and H+1 were evaluated over the padding region; zero them so they act as
    # conv2's vertical zero padding (value-level mask, no VMEM RMW).
    row = jax.lax.broadcasted_iota(jnp.int32, (bt, Hp, WCo), 1)
    h1 = jnp.where((row >= 1) & (row <= H), h1, 0.0).astype(jnp.bfloat16)

    # ---- conv2 + bias + ReLU ----
    h2 = jnp.maximum(band_matmul(h1, w2_ref, H) + b2_ref[...], 0.0)    # (bt, H, WCo) f32

    c_ref[...] = h2.astype(c_ref.dtype)        # single unmasked 128-lane store

    # ---- 2x2 max-pool, stride 2 ----
    half = h2.reshape(bt, H // 2, 2, WCo)
    rmax = jnp.maximum(half[:, :, 0, :], half[:, :, 1, :])             # row-pair max (VPU)
    rmax2 = rmax.reshape(bt * (H // 2), WCo)
    # Column-pair max: one XLU lane rotate + one VPU max.  pltpu.roll follows jnp.roll
    # semantics: rolled[:, i] = rmax2[:, i - Cout], so lane group (2x+1) of pmax holds
    # max(column 2x, column 2x+1) -> the pooled value for output column x (odd groups).
    rolled = pltpu.roll(rmax2, shift=Cout, axis=1)
    pmax = jnp.maximum(rmax2, rolled)
    p_ref[...] = pmax.reshape(bt, H // 2, WCo).astype(p_ref.dtype)     # lane-dense store


def _band_per_dy(w, W):
    """OIHW conv weights -> banded matmul matrices, one per kernel row dy.

    Returns M of shape (3, W*Cin, W*Cout) such that for an un-padded input row slab
    x_row (flattened (width, channel) lanes):
        conv_out[y] = sum_dy  x_row[y + dy - 1] @ M[dy]
    with out-of-range rows contributing zero (horizontal padding is already encoded as
    structural zeros inside the band).
    """
    Cout, Cin, KH, KW = w.shape
    wt = jnp.transpose(w, (2, 3, 1, 0)).astype(jnp.float32)          # (KH, KW, Cin, Cout)
    band = jnp.zeros((KH, W, Cin, W, Cout), jnp.float32)             # [dy, c, ci, x, co]
    for dx in range(KW):
        # band[dy, x+dx-1, ci, x, co] += w[co, ci, dy, dx]   (only valid columns)
        eye = jnp.eye(W, W, k=1 - dx, dtype=jnp.float32)             # eye[c, x]=1 iff c=x+dx-1
        band = band + jnp.einsum("cx,dio->dcixo", eye, wt[:, dx])
    return band.reshape(KH, W * Cin, W * Cout)


def prepare_down_block_params(params, W, mxu_dtype=jnp.bfloat16):
    """Build banded weights / tiled biases once per parameter set (hoisted out of the
    per-call path)."""
    w1, b1, w2, b2 = params
    Cout = w1.shape[0]
    w1band = _band_per_dy(w1, W).astype(mxu_dtype)                   # (3, W*Cin,  W*Cout)
    w2band = _band_per_dy(w2, W).astype(mxu_dtype)                   # (3, W*Cout, W*Cout)
    b1t = jnp.tile(b1.astype(jnp.float32), W).reshape(1, W * Cout)
    b2t = jnp.tile(b2.astype(jnp.float32), W).reshape(1, W * Cout)
    return (w1band, b1t, w2band, b2t)


def _pick_bt(B, H):
    """Largest batch tile that keeps >=2 grid steps (v7x megacore) and a bounded M dim."""
    best = 1
    for d in range(1, B + 1):
        if B % d:
            continue
        if B >= 2 and B // d < 2:      # keep both v7x TensorCores busy
            continue
        if d * H > 1024:               # cap matmul M / VMEM footprint
            continue
        best = d
    return best


def down_block(x_nchw, prepared, *, bt=None, mxu_dtype=jnp.bfloat16):
    """Pallas implementation of DownBlock.forward; returns (c, p) in NCHW (f32 compute)."""
    w1band, b1t, w2band, b2t = prepared
    B, Cin, H, W = x_nchw.shape
    WCo = b1t.shape[-1]
    Cout = WCo // W
    assert H % 2 == 0 and W % 2 == 0
    assert w1band.shape == (3, W * Cin, WCo) and w2band.shape == (3, WCo, WCo)
    if bt is None:
        bt = _pick_bt(B, H)
    assert B % bt == 0

    # NCHW -> (B, H, W*Cin) rows (lane-dense DMA), zero-pad 2 rows per side for the
    # in-kernel LHS-shifted accumulation, and cast the MXU operand to bf16.
    x_rows = jnp.transpose(x_nchw, (0, 2, 3, 1)).reshape(B, H, W * Cin).astype(jnp.float32)
    x_rows = jnp.pad(x_rows, ((0, 0), (2, 2), (0, 0))).astype(mxu_dtype)   # (B, H+4, W*Cin)

    kernel = functools.partial(downblock_kernel, bt=bt, H=H, W=W, Cin=Cin, Cout=Cout)

    c_flat, p_packed = pl.pallas_call(
        kernel,
        out_shape=(
            jax.ShapeDtypeStruct((B, H, WCo), jnp.float32),
            jax.ShapeDtypeStruct((B, H // 2, WCo), jnp.float32),
        ),
        grid_spec=pltpu.PrefetchScalarGridSpec(
            num_scalar_prefetch=0,
            grid=(B // bt,),
            in_specs=[
                pl.BlockSpec((bt, H + 4, W * Cin), lambda i: (i, 0, 0)),
                pl.BlockSpec(w1band.shape, lambda i: (0, 0, 0)),
                pl.BlockSpec(b1t.shape, lambda i: (0, 0)),
                pl.BlockSpec(w2band.shape, lambda i: (0, 0, 0)),
                pl.BlockSpec(b2t.shape, lambda i: (0, 0)),
            ],
            out_specs=[
                pl.BlockSpec((bt, H, WCo), lambda i: (i, 0, 0)),
                pl.BlockSpec((bt, H // 2, WCo), lambda i: (i, 0, 0)),
            ],
        ),
        compiler_params=pltpu.CompilerParams(
            dimension_semantics=("parallel",),        # batch blocks -> megacore on v7x
            vmem_limit_bytes=32 * 1024 * 1024,
        ),
    )(x_rows, w1band, b1t, w2band, b2t)

    c = jnp.transpose(c_flat.reshape(B, H, W, Cout), (0, 3, 1, 2)).astype(x_nchw.dtype)
    # The pooled rows were stored at full 128-lane width; the valid pooled values live in
    # the odd Cout-groups -> decimate with a wrapper-side reshape (layout plumbing only).
    p = p_packed.reshape(B, H // 2, W // 2, 2, Cout)[:, :, :, 1, :]
    p = jnp.transpose(p, (0, 3, 1, 2)).astype(x_nchw.dtype)
    return c, p


def ref_forward(x, params):
    """Pure-JAX reference matching the PyTorch module (NCHW, f32)."""
    w1, b1, w2, b2 = params
    dn = jax.lax.conv_dimension_numbers(x.shape, w1.shape, ("NCHW", "OIHW", "NCHW"))
    c = jax.lax.conv_general_dilated(x, w1, (1, 1), ((1, 1), (1, 1)),
                                     dimension_numbers=dn)
    c = jax.nn.relu(c + b1[None, :, None, None])
    c = jax.lax.conv_general_dilated(c, w2, (1, 1), ((1, 1), (1, 1)),
                                     dimension_numbers=dn)
    c = jax.nn.relu(c + b2[None, :, None, None])
    p = jax.lax.reduce_window(c, -jnp.inf, jax.lax.max,
                              (1, 1, 2, 2), (1, 1, 2, 2), "VALID")
    return c, p


if __name__ == "__main__":
    # Small shapes; batch 16 so the kernel can use bt=8 (M = bt*H = 128) with a 2-step
    # parallel grid (keeps both v7x TensorCores busy).
    B, Cin, Cout, H, W = 16, 4, 8, 16, 16
    key = jax.random.PRNGKey(0)
    k1, k2, k3, k4, kx = jax.random.split(key, 5)

    # Deterministic synthetic parameters (shapes from nn.Conv2d(in_ch, out_ch, 3, padding=1)).
    w1 = 0.1 * jax.random.normal(k1, (Cout, Cin, 3, 3), jnp.float32)
    b1 = 0.1 * jax.random.normal(k2, (Cout,), jnp.float32)
    w2 = 0.1 * jax.random.normal(k3, (Cout, Cout, 3, 3), jnp.float32)
    b2 = 0.1 * jax.random.normal(k4, (Cout,), jnp.float32)
    params = (w1, b1, w2, b2)

    x = jax.random.normal(kx, (B, Cin, H, W), jnp.float32)

    prepared = prepare_down_block_params(params, W)       # banded weights built once
    c, p = down_block(x, prepared)                        # auto-picks bt=8, grid=(2,)
    jax.block_until_ready((c, p))

    c_ref, p_ref = ref_forward(x, params)
    assert c.shape == (B, Cout, H, W) and p.shape == (B, Cout, H // 2, W // 2)
    # bf16 MXU operands (f32 accumulation) -> relaxed tolerance vs the f32 reference.
    assert jnp.allclose(c, c_ref, atol=2e-2, rtol=2e-2), float(jnp.max(jnp.abs(c - c_ref)))
    assert jnp.allclose(p, p_ref, atol=2e-2, rtol=2e-2), float(jnp.max(jnp.abs(p - p_ref)))

    print("KERNEL_OK")
</pallas_src>

<mosaic_0001>
module attributes {stable_mosaic.version = 11 : i64} {
  func.func @downblock_kernel(%arg0: i32, %arg1: memref<8x20x64xbf16, #tpu.memory_space<vmem>>, %arg2: memref<3x64x128xbf16, #tpu.memory_space<vmem>>, %arg3: memref<1x128xf32, #tpu.memory_space<vmem>>, %arg4: memref<3x128x128xbf16, #tpu.memory_space<vmem>>, %arg5: memref<1x128xf32, #tpu.memory_space<vmem>>, %arg6: memref<8x16x128xf32, #tpu.memory_space<vmem>>, %arg7: memref<8x8x128xf32, #tpu.memory_space<vmem>>) attributes {dimension_semantics = [#tpu.dimension_semantics<parallel>], iteration_bounds = array<i64: 2>, scalar_prefetch = 0 : i64, scratch_operands = 0 : i64, tpu.core_type = #tpu.core_type<tc>, window_params = [{transform_indices = @transform_0, window_bounds = array<i64: 8, 20, 64>}, {pipeline_mode = #tpu.pipeline_mode<synchronous>, transform_indices = @transform_1, window_bounds = array<i64: 3, 64, 128>}, {pipeline_mode = #tpu.pipeline_mode<synchronous>, transform_indices = @transform_2, window_bounds = array<i64: 1, 128>}, {pipeline_mode = #tpu.pipeline_mode<synchronous>, transform_indices = @transform_3, window_bounds = array<i64: 3, 128, 128>}, {pipeline_mode = #tpu.pipeline_mode<synchronous>, transform_indices = @transform_4, window_bounds = array<i64: 1, 128>}, {transform_indices = @transform_5, window_bounds = array<i64: 8, 16, 128>}, {transform_indices = @transform_6, window_bounds = array<i64: 8, 8, 128>}]} {
    %c0 = arith.constant 0 : index
    %c0_0 = arith.constant 0 : index
    %c0_1 = arith.constant 0 : index
    %0 = vector.load %arg1[%c0, %c0_0, %c0_1] : memref<8x20x64xbf16, #tpu.memory_space<vmem>>, vector<8x20x64xbf16>
    %1 = vector.extract_strided_slice %0 {offsets = [0, 0, 0], sizes = [8, 18, 64], strides = [1, 1, 1]} : vector<8x20x64xbf16> to vector<8x18x64xbf16>
    %2 = vector.shape_cast %1 : vector<8x18x64xbf16> to vector<144x64xbf16>
    %c0_2 = arith.constant 0 : index
    %c0_3 = arith.constant 0 : index
    %c0_4 = arith.constant 0 : index
    %3 = vector.load %arg2[%c0_2, %c0_3, %c0_4] : memref<3x64x128xbf16, #tpu.memory_space<vmem>>, vector<1x64x128xbf16>
    %4 = vector.shape_cast %3 : vector<1x64x128xbf16> to vector<64x128xbf16>
    %cst = arith.constant dense<0.000000e+00> : vector<144x128xf32>
    %5 = tpu.matmul %2, %4, %cst {dimension_numbers = #tpu.dot_dimension_numbers<[1], [0], [0], [1], [0, 0, 1, 1], [], []>} : vector<144x64xbf16>, vector<64x128xbf16>, vector<144x128xf32> -> vector<144x128xf32>
    %6 = vector.extract_strided_slice %0 {offsets = [0, 1, 0], sizes = [8, 18, 64], strides = [1, 1, 1]} : vector<8x20x64xbf16> to vector<8x18x64xbf16>
    %7 = vector.shape_cast %6 : vector<8x18x64xbf16> to vector<144x64xbf16>
    %c1 = arith.constant 1 : index
    %c0_5 = arith.constant 0 : index
    %c0_6 = arith.constant 0 : index
    %8 = vector.load %arg2[%c1, %c0_5, %c0_6] : memref<3x64x128xbf16, #tpu.memory_space<vmem>>, vector<1x64x128xbf16>
    %9 = vector.shape_cast %8 : vector<1x64x128xbf16> to vector<64x128xbf16>
    %cst_7 = arith.constant dense<0.000000e+00> : vector<144x128xf32>
    %10 = tpu.matmul %7, %9, %cst_7 {dimension_numbers = #tpu.dot_dimension_numbers<[1], [0], [0], [1], [0, 0, 1, 1], [], []>} : vector<144x64xbf16>, vector<64x128xbf16>, vector<144x128xf32> -> vector<144x128xf32>
    %11 = arith.addf %5, %10 : vector<144x128xf32>
    %12 = vector.extract_strided_slice %0 {offsets = [0, 2, 0], sizes = [8, 18, 64], strides = [1, 1, 1]} : vector<8x20x64xbf16> to vector<8x18x64xbf16>
    %13 = vector.shape_cast %12 : vector<8x18x64xbf16> to vector<144x64xbf16>
    %c2 = arith.constant 2 : index
    %c0_8 = arith.constant 0 : index
    %c0_9 = arith.constant 0 : index
    %14 = vector.load %arg2[%c2, %c0_8, %c0_9] : memref<3x64x128xbf16, #tpu.memory_space<vmem>>, vector<1x64x128xbf16>
    %15 = vector.shape_cast %14 : vector<1x64x128xbf16> to vector<64x128xbf16>
    %cst_10 = arith.constant dense<0.000000e+00> : vector<144x128xf32>
    %16 = tpu.matmul %13, %15, %cst_10 {dimension_numbers = #tpu.dot_dimension_numbers<[1], [0], [0], [1], [0, 0, 1, 1], [], []>} : vector<144x64xbf16>, vector<64x128xbf16>, vector<144x128xf32> -> vector<144x128xf32>
    %17 = arith.addf %11, %16 : vector<144x128xf32>
    %18 = vector.shape_cast %17 : vector<144x128xf32> to vector<8x18x128xf32>
    %c0_11 = arith.constant 0 : index
    %c0_12 = arith.constant 0 : index
    %19 = vector.load %arg3[%c0_11, %c0_12] : memref<1x128xf32, #tpu.memory_space<vmem>>, vector<1x128xf32>
    %20 = vector.shape_cast %19 : vector<1x128xf32> to vector<1x1x128xf32>
    %21 = vector.broadcast %20 : vector<1x1x128xf32> to vector<8x18x128xf32>
    %22 = arith.addf %18, %21 : vector<8x18x128xf32>
    %cst_13 = arith.constant 0.000000e+00 : f32
    %23 = vector.broadcast %cst_13 : f32 to vector<8x18x128xf32>
    %24 = arith.maximumf %22, %23 : vector<8x18x128xf32>
    %25 = tpu.iota {dimensions = array<i32: 1>} : vector<8x18x128xi32>
    %c1_i32 = arith.constant 1 : i32
    %26 = vector.broadcast %c1_i32 : i32 to vector<8x18x128xi32>
    %27 = arith.cmpi sge, %25, %26 : vector<8x18x128xi32>
    %c16_i32 = arith.constant 16 : i32
    %28 = vector.broadcast %c16_i32 : i32 to vector<8x18x128xi32>
    %29 = arith.cmpi sle, %25, %28 : vector<8x18x128xi32>
    %30 = arith.andi %27, %29 : vector<8x18x128xi1>
    %cst_14 = arith.constant 0.000000e+00 : f32
    %31 = vector.broadcast %cst_14 : f32 to vector<8x18x128xf32>
    %32 = arith.select %30, %24, %31 : vector<8x18x128xi1>, vector<8x18x128xf32>
    %33 = arith.truncf %32 : vector<8x18x128xf32> to vector<8x18x128xbf16>
    %34 = vector.extract_strided_slice %33 {offsets = [0, 0, 0], sizes = [8, 16, 128], strides = [1, 1, 1]} : vector<8x18x128xbf16> to vector<8x16x128xbf16>
    %35 = vector.shape_cast %34 : vector<8x16x128xbf16> to vector<128x128xbf16>
    %c0_15 = arith.constant 0 : index
    %c0_16 = arith.constant 0 : index
    %c0_17 = arith.constant 0 : index
    %36 = vector.load %arg4[%c0_15, %c0_16, %c0_17] : memref<3x128x128xbf16, #tpu.memory_space<vmem>>, vector<1x128x128xbf16>
    %37 = vector.shape_cast %36 : vector<1x128x128xbf16> to vector<128x128xbf16>
    %cst_18 = arith.constant dense<0.000000e+00> : vector<128x128xf32>
    %38 = tpu.matmul %35, %37, %cst_18 {dimension_numbers = #tpu.dot_dimension_numbers<[1], [0], [0], [1], [0, 0, 1, 1], [], []>} : vector<128x128xbf16>, vector<128x128xbf16>, vector<128x128xf32> -> vector<128x128xf32>
    %39 = vector.extract_strided_slice %33 {offsets = [0, 1, 0], sizes = [8, 16, 128], strides = [1, 1, 1]} : vector<8x18x128xbf16> to vector<8x16x128xbf16>
    %40 = vector.shape_cast %39 : vector<8x16x128xbf16> to vector<128x128xbf16>
    %c1_19 = arith.constant 1 : index
    %c0_20 = arith.constant 0 : index
    %c0_21 = arith.constant 0 : index
    %41 = vector.load %arg4[%c1_19, %c0_20, %c0_21] : memref<3x128x128xbf16, #tpu.memory_space<vmem>>, vector<1x128x128xbf16>
    %42 = vector.shape_cast %41 : vector<1x128x128xbf16> to vector<128x128xbf16>
    %cst_22 = arith.constant dense<0.000000e+00> : vector<128x128xf32>
    %43 = tpu.matmul %40, %42, %cst_22 {dimension_numbers = #tpu.dot_dimension_numbers<[1], [0], [0], [1], [0, 0, 1, 1], [], []>} : vector<128x128xbf16>, vector<128x128xbf16>, vector<128x128xf32> -> vector<128x128xf32>
    %44 = arith.addf %38, %43 : vector<128x128xf32>
    %45 = vector.extract_strided_slice %33 {offsets = [0, 2, 0], sizes = [8, 16, 128], strides = [1, 1, 1]} : vector<8x18x128xbf16> to vector<8x16x128xbf16>
    %46 = vector.shape_cast %45 : vector<8x16x128xbf16> to vector<128x128xbf16>
    %c2_23 = arith.constant 2 : index
    %c0_24 = arith.constant 0 : index
    %c0_25 = arith.constant 0 : index
    %47 = vector.load %arg4[%c2_23, %c0_24, %c0_25] : memref<3x128x128xbf16, #tpu.memory_space<vmem>>, vector<1x128x128xbf16>
    %48 = vector.shape_cast %47 : vector<1x128x128xbf16> to vector<128x128xbf16>
    %cst_26 = arith.constant dense<0.000000e+00> : vector<128x128xf32>
    %49 = tpu.matmul %46, %48, %cst_26 {dimension_numbers = #tpu.dot_dimension_numbers<[1], [0], [0], [1], [0, 0, 1, 1], [], []>} : vector<128x128xbf16>, vector<128x128xbf16>, vector<128x128xf32> -> vector<128x128xf32>
    %50 = arith.addf %44, %49 : vector<128x128xf32>
    %51 = vector.shape_cast %50 : vector<128x128xf32> to vector<8x16x128xf32>
    %c0_27 = arith.constant 0 : index
    %c0_28 = arith.constant 0 : index
    %52 = vector.load %arg5[%c0_27, %c0_28] : memref<1x128xf32, #tpu.memory_space<vmem>>, vector<1x128xf32>
    %53 = vector.shape_cast %52 : vector<1x128xf32> to vector<1x1x128xf32>
    %54 = vector.broadcast %53 : vector<1x1x128xf32> to vector<8x16x128xf32>
    %55 = arith.addf %51, %54 : vector<8x16x128xf32>
    %cst_29 = arith.constant 0.000000e+00 : f32
    %56 = vector.broadcast %cst_29 : f32 to vector<8x16x128xf32>
    %57 = arith.maximumf %55, %56 : vector<8x16x128xf32>
    %c0_30 = arith.constant 0 : index
    %c0_31 = arith.constant 0 : index
    %c0_32 = arith.constant 0 : index
    %58 = vector.load %arg6[%c0_30, %c0_31, %c0_32] : memref<8x16x128xf32, #tpu.memory_space<vmem>>, vector<8x16x128xf32>
    tpu.vector_store %arg6[%c0_30, %c0_31, %c0_32], %57 {strides = array<i32>} : memref<8x16x128xf32, #tpu.memory_space<vmem>>, vector<8x16x128xf32>,
    %59 = vector.shape_cast %57 : vector<8x16x128xf32> to vector<8x8x2x128xf32>
    %60 = vector.extract_strided_slice %59 {offsets = [0, 0, 0, 0], sizes = [8, 8, 1, 128], strides = [1, 1, 1, 1]} : vector<8x8x2x128xf32> to vector<8x8x1x128xf32>
    %61 = vector.shape_cast %60 : vector<8x8x1x128xf32> to vector<8x8x128xf32>
    %62 = vector.extract_strided_slice %59 {offsets = [0, 0, 1, 0], sizes = [8, 8, 1, 128], strides = [1, 1, 1, 1]} : vector<8x8x2x128xf32> to vector<8x8x1x128xf32>
    %63 = vector.shape_cast %62 : vector<8x8x1x128xf32> to vector<8x8x128xf32>
    %64 = arith.maximumf %61, %63 : vector<8x8x128xf32>
    %65 = vector.shape_cast %64 : vector<8x8x128xf32> to vector<64x128xf32>
    %c8_i32 = arith.constant 8 : i32
    %66 = tpu.dynamic_rotate %65 by %c8_i32 dim 1 : vector<64x128xf32>, i32 -> vector<64x128xf32>
    %67 = arith.maximumf %65, %66 : vector<64x128xf32>
    %68 = vector.shape_cast %67 : vector<64x128xf32> to vector<8x8x128xf32>
    %c0_33 = arith.constant 0 : index
    %c0_34 = arith.constant 0 : index
    %c0_35 = arith.constant 0 : index
    %69 = vector.load %arg7[%c0_33, %c0_34, %c0_35] : memref<8x8x128xf32, #tpu.memory_space<vmem>>, vector<8x8x128xf32>
    tpu.vector_store %arg7[%c0_33, %c0_34, %c0_35], %68 {strides = array<i32>} : memref<8x8x128xf32, #tpu.memory_space<vmem>>, vector<8x8x128xf32>,
    return
  }
  func.func @transform_0(%arg0: i32) -> (i32, i32, i32) {
    %c0_i32 = arith.constant 0 : i32
    %c0_i32_0 = arith.constant 0 : i32
    %c0_i32_1 = arith.constant 0 : i32
    return %arg0, %c0_i32, %c0_i32_0 : i32, i32, i32
  }
  func.func @transform_1(%arg0: i32) -> (i32, i32, i32) {
    %c0_i32 = arith.constant 0 : i32
    %c0_i32_0 = arith.constant 0 : i32
    %c0_i32_1 = arith.constant 0 : i32
    %c0_i32_2 = arith.constant 0 : i32
    return %c0_i32, %c0_i32_0, %c0_i32_1 : i32, i32, i32
  }
  func.func @transform_2(%arg0: i32) -> (i32, i32) {
    %c0_i32 = arith.constant 0 : i32
    %c0_i32_0 = arith.constant 0 : i32
    %c0_i32_1 = arith.constant 0 : i32
    return %c0_i32, %c0_i32_0 : i32, i32
  }
  func.func @transform_3(%arg0: i32) -> (i32, i32, i32) {
    %c0_i32 = arith.constant 0 : i32
    %c0_i32_0 = arith.constant 0 : i32
    %c0_i32_1 = arith.constant 0 : i32
    %c0_i32_2 = arith.constant 0 : i32
    return %c0_i32, %c0_i32_0, %c0_i32_1 : i32, i32, i32
  }
  func.func @transform_4(%arg0: i32) -> (i32, i32) {
    %c0_i32 = arith.constant 0 : i32
    %c0_i32_0 = arith.constant 0 : i32
    %c0_i32_1 = arith.constant 0 : i32
    return %c0_i32, %c0_i32_0 : i32, i32
  }
  func.func @transform_5(%arg0: i32) -> (i32, i32, i32) {
    %c0_i32 = arith.constant 0 : i32
    %c0_i32_0 = arith.constant 0 : i32
    %c0_i32_1 = arith.constant 0 : i32
    return %arg0, %c0_i32, %c0_i32_0 : i32, i32, i32
  }
  func.func @transform_6(%arg0: i32) -> (i32, i32, i32) {
    %c0_i32 = arith.constant 0 : i32
    %c0_i32_0 = arith.constant 0 : i32
    %c0_i32_1 = arith.constant 0 : i32
    return %arg0, %c0_i32, %c0_i32_0 : i32, i32, i32
  }
}

</mosaic_0001>

<llo_original>
// kernel: tpu_custom_call.1
$region0: #{tpu_custom_call.1}
  #allocation0 [shape = 'u32[]', space=smem, size = 0x4, offset = 0x4, fixed_abs, tag = 'smem constant byte address 0x4 - core index']
  #allocation1 [shape = 'u32[72,128]{1,0:T(1,128)}', space=vmem, size = 0x9000, scoped, tag = 'internal scratch']
  %s0 = inlined_call_operand.vmem [shape: bf16[16,20,64], index: 0, kind: input, shape index: {}]
  %s1 = inlined_call_operand.vmem [shape: bf16[3,64,128], index: 1, kind: input, shape index: {}]
  %s2 = inlined_call_operand.vmem [shape: f32[1,128], index: 2, kind: input, shape index: {}]
  %s3 = inlined_call_operand.vmem [shape: bf16[3,128,128], index: 3, kind: input, shape index: {}]
  %s4 = inlined_call_operand.vmem [shape: f32[1,128], index: 4, kind: input, shape index: {}]
  %s5 = inlined_call_operand.hbm [shape: f32[16,16,128], index: 5, kind: output, shape index: {0}]
  %s6 = inlined_call_operand.hbm [shape: f32[16,8,128], index: 6, kind: output, shape index: {1}]
  %7 = xla_tuple %s5, %s6
  %s8 = sld [smem:[#allocation0]]
  $region61: #{tpu_custom_call.1} parent=0
    _
  %s10 = ssub.s32 1, %s8
  %s11 = scalar_select 0, %s10, %s8
  $region1: #{tpu_custom_call.1} parent=0
    #allocation2 [shape = 'u8[131072]{0}', space=vmem, size = 0x20000, scoped, tag = 'output window, operand 0']
    #allocation3 [shape = 's32[2]{0}', space=sflag, size = 0x8, scoped, tag = 'scoped memory for tpu_custom_call.1']
    #allocation4 [shape = 'u8[65536]{0}', space=vmem, size = 0x10000, scoped, tag = 'output window, operand 1']
    #allocation5 [shape = 's32[2]{0}', space=sflag, size = 0x8, scoped, tag = 'scoped memory for tpu_custom_call.1']
    %12 = vsyncpa [#allocation3], 0
    %s13 = scalar_lea.sflag [#allocation3], 1
    %14 = vsyncpa %s13, 0
    %15 = vsyncpa [#allocation5], 0
    %s16 = scalar_lea.sflag [#allocation5], 1
    %17 = vsyncpa %s16, 0
    loop: start=0, step=1, limit=4
    $region2: #{tpu_custom_call.1} parent=1 // loop_pre_header
      _
    $region3: #{tpu_custom_call.1} parent=1 // loop_header
      %s19 = sphi 0, %s23
      %p20 = scmp.ge.s32.totalorder %s19, 4
      %s29 = sphi 0, %s31
      %s32 = sphi 0, %s29
      %s33 = sphi 0, %s32
      %s49 = sphi 0, %s33
      %s53 = sphi 0, %s53
      %s55 = sphi 0, %s53
      %s56 = sphi 0, %s55
      %s70 = sphi 0, %s56
      %s74 = sphi 0, %s74
      %s76 = sphi 0, %s74
      %s77 = sphi 0, %s76
      %s91 = sphi 0, %s77
      %s95 = sphi 0, %s95
      %s97 = sphi 0, %s95
      %s98 = sphi 0, %s97
      %s112 = sphi 0, %s98
      %s116 = sphi 0, %s116
      %s118 = sphi 0, %s116
      %s119 = sphi 0, %s118
      %s133 = sphi 0, %s119
      %s139 = sphi 0, %s141
      %s142 = sphi 0, %s139
      %s143 = sphi 0, %s142
      %s159 = sphi 0, %s143
      %s165 = sphi 0, %s167
      %s168 = sphi 0, %s165
      %s169 = sphi 0, %s168
      %s185 = sphi 0, %s169
    $region4: #{tpu_custom_call.1} parent=1 // loop_header_branch
      %22 = sbr.rel (%p20) target = $region8
    $region5: #{tpu_custom_call.1} parent=1 // loop_body
      %s24 = ssub.s32 %s19, 1
      %s25 = ssub.s32 %s19, 2
      %s26 = sadd.s32 %s19, 1
      %s27 = ssub.s32 %s19, %s26
      %p28 = scmp.eq.s32.totalorder %s27, 0
      %s30 = sadd.s32 %s29, 1
      %s31 = scalar_select %p28, %s29, %s30
      %p34 = pneg %p28
      %p35 = scmp.eq.s32.totalorder %s19, 1
      %p36 = por %p34, %p35
      %p37 = scmp.ne.s32.totalorder %s29, %s32
      %p38 = scmp.eq.s32.totalorder %s19, 0
      %p39 = por %p37, %p38
      %p40 = scmp.ne.s32.totalorder %s29, %s32
      %p41 = scmp.eq.s32.totalorder %s24, 1
      %p42 = por %p40, %p41
      %p43 = scmp.ne.s32.totalorder %s32, %s33
      %p44 = scmp.eq.s32.totalorder %s24, 0
      %p45 = por %p43, %p44
      %p46 = scmp.ne.s32.totalorder %s32, %s33
      %p47 = scmp.eq.s32.totalorder %s25, 1
      %p48 = por %p46, %p47
      %p50 = scmp.ne.s32.totalorder %s33, %s49
      %p51 = scmp.eq.s32.totalorder %s25, 0
      %p52 = por %p50, %p51
      %s54 = sadd.s32 %s53, 1
      %p57 = scmp.eq.s32.totalorder %s19, 1
      %p58 = scmp.ne.s32.totalorder %s53, %s55
      %p59 = scmp.eq.s32.totalorder %s19, 0
      %p60 = por %p58, %p59
      %p61 = scmp.ne.s32.totalorder %s53, %s55
      %p62 = scmp.eq.s32.totalorder %s24, 1
      %p63 = por %p61, %p62
      %p64 = scmp.ne.s32.totalorder %s55, %s56
      %p65 = scmp.eq.s32.totalorder %s24, 0
      %p66 = por %p64, %p65
      %p67 = scmp.ne.s32.totalorder %s55, %s56
      %p68 = scmp.eq.s32.totalorder %s25, 1
      %p69 = por %p67, %p68
      %p71 = scmp.ne.s32.totalorder %s56, %s70
      %p72 = scmp.eq.s32.totalorder %s25, 0
      %p73 = por %p71, %p72
      %s75 = sadd.s32 %s74, 1
      %p78 = scmp.eq.s32.totalorder %s19, 1
      %p79 = scmp.ne.s32.totalorder %s74, %s76
      %p80 = scmp.eq.s32.totalorder %s19, 0
      %p81 = por %p79, %p80
      %p82 = scmp.ne.s32.totalorder %s74, %s76
      %p83 = scmp.eq.s32.totalorder %s24, 1
      %p84 = por %p82, %p83
      %p85 = scmp.ne.s32.totalorder %s76, %s77
      %p86 = scmp.eq.s32.totalorder %s24, 0
      %p87 = por %p85, %p86
      %p88 = scmp.ne.s32.totalorder %s76, %s77
      %p89 = scmp.eq.s32.totalorder %s25, 1
      %p90 = por %p88, %p89
      %p92 = scmp.ne.s32.totalorder %s77, %s91
      %p93 = scmp.eq.s32.totalorder %s25, 0
      %p94 = por %p92, %p93
      %s96 = sadd.s32 %s95, 1
      %p99 = scmp.eq.s32.totalorder %s19, 1
      %p100 = scmp.ne.s32.totalorder %s95, %s97
      %p101 = scmp.eq.s32.totalorder %s19, 0
      %p102 = por %p100, %p101
      %p103 = scmp.ne.s32.totalorder %s95, %s97
      %p104 = scmp.eq.s32.totalorder %s24, 1
      %p105 = por %p103, %p104
      %p106 = scmp.ne.s32.totalorder %s97, %s98
      %p107 = scmp.eq.s32.totalorder %s24, 0
      %p108 = por %p106, %p107
      %p109 = scmp.ne.s32.totalorder %s97, %s98
      %p110 = scmp.eq.s32.totalorder %s25, 1
      %p111 = por %p109, %p110
      %p113 = scmp.ne.s32.totalorder %s98, %s112
      %p114 = scmp.eq.s32.totalorder %s25, 0
      %p115 = por %p113, %p114
      %s117 = sadd.s32 %s116, 1
      %p120 = scmp.eq.s32.totalorder %s19, 1
      %p121 = scmp.ne.s32.totalorder %s116, %s118
      %p122 = scmp.eq.s32.totalorder %s19, 0
      %p123 = por %p121, %p122
      %p124 = scmp.ne.s32.totalorder %s116, %s118
      %p125 = scmp.eq.s32.totalorder %s24, 1
      %p126 = por %p124, %p125
      %p127 = scmp.ne.s32.totalorder %s118, %s119
      %p128 = scmp.eq.s32.totalorder %s24, 0
      %p129 = por %p127, %p128
      %p130 = scmp.ne.s32.totalorder %s118, %s119
      %p131 = scmp.eq.s32.totalorder %s25, 1
      %p132 = por %p130, %p131
      %p134 = scmp.ne.s32.totalorder %s119, %s133
      %p135 = scmp.eq.s32.totalorder %s25, 0
      %p136 = por %p134, %p135
      %s137 = ssub.s32 %s19, %s26
      %p138 = scmp.eq.s32.totalorder %s137, 0
      %s140 = sadd.s32 %s139, 1
      %s141 = scalar_select %p138, %s139, %s140
      %p144 = pneg %p138
      %p145 = scmp.eq.s32.totalorder %s19, 1
      %p146 = por %p144, %p145
      %p147 = scmp.ne.s32.totalorder %s139, %s142
      %p148 = scmp.eq.s32.totalorder %s19, 0
      %p149 = por %p147, %p148
      %p150 = scmp.ne.s32.totalorder %s139, %s142
      %p151 = scmp.eq.s32.totalorder %s24, 1
      %p152 = por %p150, %p151
      %p153 = scmp.ne.s32.totalorder %s142, %s143
      %p154 = scmp.eq.s32.totalorder %s24, 0
      %p155 = por %p153, %p154
      %p156 = scmp.ne.s32.totalorder %s142, %s143
      %p157 = scmp.eq.s32.totalorder %s25, 1
      %p158 = por %p156, %p157
      %p160 = scmp.ne.s32.totalorder %s143, %s159
      %p161 = scmp.eq.s32.totalorder %s25, 0
      %p162 = por %p160, %p161
      %s163 = ssub.s32 %s19, %s26
      %p164 = scmp.eq.s32.totalorder %s163, 0
      %s166 = sadd.s32 %s165, 1
      %s167 = scalar_select %p164, %s165, %s166
      %p170 = pneg %p164
      %p171 = scmp.eq.s32.totalorder %s19, 1
      %p172 = por %p170, %p171
      %p173 = scmp.ne.s32.totalorder %s165, %s168
      %p174 = scmp.eq.s32.totalorder %s19, 0
      %p175 = por %p173, %p174
      %p176 = scmp.ne.s32.totalorder %s165, %s168
      %p177 = scmp.eq.s32.totalorder %s24, 1
      %p178 = por %p176, %p177
      %p179 = scmp.ne.s32.totalorder %s168, %s169
      %p180 = scmp.eq.s32.totalorder %s24, 0
      %p181 = por %p179, %p180
      %p182 = scmp.ne.s32.totalorder %s168, %s169
      %p183 = scmp.eq.s32.totalorder %s25, 1
      %p184 = por %p182, %p183
      %p186 = scmp.ne.s32.totalorder %s169, %s185
      %p187 = scmp.eq.s32.totalorder %s25, 0
      %p188 = por %p186, %p187
      %p189 = scmp.le.s32.totalorder 1, %s19
      %p190 = scmp.lt.s32.totalorder %s19, 3
      %p191 = pnand %p189, %p190
      %p192 = pneg %p191
      // Predicated region
      $region9: #{tpu_custom_call.1} parent=5 // pred_check
        _
      $region10: #{tpu_custom_call.1} parent=5 // pred_check_branch
        %194 = sbr.rel (%p191) target = $region12
      $region11: #{tpu_custom_call.1} parent=5 // pred_region
        %s195 = ssub.s32 %s19, 1
        // Predicated region
        $region13: #{tpu_custom_call.1} parent=11 // pred_check
          %p196 = pneg %p66
        $region14: #{tpu_custom_call.1} parent=11 // pred_check_branch
          %198 = sbr.rel (%p196) target = $region16
        $region15: #{tpu_custom_call.1} parent=11 // pred_region
          _
        $region16: #{tpu_custom_call.1} parent=11 // pred_fallthru
          _
        // Predicated region
        $region17: #{tpu_custom_call.1} parent=11 // pred_check
          %p199 = pneg %p87
        $region18: #{tpu_custom_call.1} parent=11 // pred_check_branch
          %201 = sbr.rel (%p199) target = $region20
        $region19: #{tpu_custom_call.1} parent=11 // pred_region
          _
        $region20: #{tpu_custom_call.1} parent=11 // pred_fallthru
          _
        // Predicated region
        $region21: #{tpu_custom_call.1} parent=11 // pred_check
          %p202 = pneg %p108
        $region22: #{tpu_custom_call.1} parent=11 // pred_check_branch
          %204 = sbr.rel (%p202) target = $region24
        $region23: #{tpu_custom_call.1} parent=11 // pred_region
          _
        $region24: #{tpu_custom_call.1} parent=11 // pred_fallthru
          _
        // Predicated region
        $region25: #{tpu_custom_call.1} parent=11 // pred_check
          %p205 = pneg %p129
        $region26: #{tpu_custom_call.1} parent=11 // pred_check_branch
          %207 = sbr.rel (%p205) target = $region28
        $region27: #{tpu_custom_call.1} parent=11 // pred_region
          _
        $region28: #{tpu_custom_call.1} parent=11 // pred_fallthru
          _
      $region12: #{tpu_custom_call.1} parent=5 // pred_fallthru
        _
      %p208 = scmp.lt.s32.totalorder %s19, 2
      // Predicated region
      $region29: #{tpu_custom_call.1} parent=5 // pred_check
        %p209 = pneg %p208
      $region30: #{tpu_custom_call.1} parent=5 // pred_check_branch
        %211 = sbr.rel (%p209) target = $region32
      $region31: #{tpu_custom_call.1} parent=5 // pred_region
        // Predicated region
        $region33: #{tpu_custom_call.1} parent=31 // pred_check
          %p212 = pneg %p39
        $region34: #{tpu_custom_call.1} parent=31 // pred_check_branch
          %214 = sbr.rel (%p212) target = $region36
        $region35: #{tpu_custom_call.1} parent=31 // pred_region
          %s215 = smul.u32 8, %s19
          %p216 = scmp.lt.s32.totalorder %s215, 15
          %s217 = scalar_select %p216, %s215, 15
          %s218 = smul.addr %s217, 3
          %s219 = smul.addr %s218, 4
          %s220 = scalar_lea.vmem %s0, %s219
          %s221 = smul.u32 8, %s19
        $region36: #{tpu_custom_call.1} parent=31 // pred_fallthru
          _
      $region32: #{tpu_custom_call.1} parent=5 // pred_fallthru
        _
      %p222 = scmp.le.s32.totalorder 1, %s19
      %p223 = scmp.lt.s32.totalorder %s19, 3
      %p224 = pnand %p222, %p223
      %p225 = pneg %p224
      // Predicated region
      $region37: #{tpu_custom_call.1} parent=5 // pred_check
        _
      $region38: #{tpu_custom_call.1} parent=5 // pred_check_branch
        %227 = sbr.rel (%p224) target = $region40
      $region39: #{tpu_custom_call.1} parent=5 // pred_region
        %s228 = ssub.s32 %s19, 1
        %s229 = smul.u32 8, %s24
        %p230 = scmp.lt.s32.totalorder %s229, 15
        %s231 = scalar_select %p230, %s229, 15
        %s232 = smul.addr %s231, 3
        %s233 = smul.addr %s232, 4
        %s234 = scalar_lea.vmem %s0, %s233
        %p235 = pneg %p45
        %p236 = pneg %p42
        %p237 = pneg %p66
        %p238 = pneg %p63
        %p239 = pneg %p87
        %p240 = pneg %p84
        %p241 = pneg %p108
        %p242 = pneg %p105
        %p243 = pneg %p129
        %p244 = pneg %p126
        %p245 = pneg %p155
        %p246 = pneg %p152
        %s247 = sand.u32 %s142, 1
        %s248 = scalar_lea.sflag [#allocation3], %s247
        %s249 = sand.u32 %s142, 1
        %s250 = smul.addr %s249, 128
        %s251 = scalar_lea.vmem [#allocation2], %s250
        %p252 = pneg %p181
        %p253 = pneg %p178
        %s254 = sand.u32 %s168, 1
        %s255 = scalar_lea.sflag [#allocation5], %s254
        %s256 = sand.u32 %s168, 1
        %s257 = smul.addr %s256, 64
        %s258 = scalar_lea.vmem [#allocation4], %s257
        %s259 = smul.u32 8, %s24
        %p260 = scmp.lt.s32.totalorder %s259, 15
        %s261 = scalar_select %p260, %s259, 15
        %s262 = smul.addr %s261, 3
        %s263 = smul.addr %s262, 4
        %s264 = scalar_lea.vmem %s0, %s263
        %s265 = smul.u32 8, %s24
        %s266 = smul.u32 8, %s24
        %s267 = smul.u32 8, %s24
        %v269 = vld [vmem:[%s264] sm:$0xf]
        %v270 = vld [vmem:[%s264 + $0x4] sm:$0xf]
        %v271 = vld [vmem:[%s264 + $0x8] sm:$0x3]
        %v272 = vld [vmem:[%s264 + $0xc] sm:$0xf]
        %v273 = vld [vmem:[%s264 + $0x10] sm:$0xf]
        %v274 = vld [vmem:[%s264 + $0x14] sm:$0x3]
        %v275 = vld [vmem:[%s264 + $0x18] sm:$0xf]
        %v276 = vld [vmem:[%s264 + $0x1c] sm:$0xf]
        %v277 = vld [vmem:[%s264 + $0x20] sm:$0x3]
        %v278 = vld [vmem:[%s264 + $0x24] sm:$0xf]
        %v279 = vld [vmem:[%s264 + $0x28] sm:$0xf]
        %v280 = vld [vmem:[%s264 + $0x2c] sm:$0x3]
        %v281 = vld [vmem:[%s264 + $0x30] sm:$0xf]
        %v282 = vld [vmem:[%s264 + $0x34] sm:$0xf]
        %v283 = vld [vmem:[%s264 + $0x38] sm:$0x3]
        %v284 = vld [vmem:[%s264 + $0x3c] sm:$0xf]
        %v285 = vld [vmem:[%s264 + $0x40] sm:$0xf]
        %v286 = vld [vmem:[%s264 + $0x44] sm:$0x3]
        %v287 = vld [vmem:[%s264 + $0x48] sm:$0xf]
        %v288 = vld [vmem:[%s264 + $0x4c] sm:$0xf]
        %v289 = vld [vmem:[%s264 + $0x50] sm:$0x3]
        %v290 = vld [vmem:[%s264 + $0x54] sm:$0xf]
        %v291 = vld [vmem:[%s264 + $0x58] sm:$0xf]
        %v292 = vld [vmem:[%s264 + $0x5c] sm:$0x3]
        %v317 = vrot.slane %v269, 3
        %v318 = vrot.slane %v270, 3
        %v319 = vrot.slane %v271, 3
        %v320 = vrot.slane %v272, 3
        %v321 = vrot.slane %v273, 3
        %v322 = vrot.slane %v274, 3
        %v323 = vrot.slane %v275, 3
        %v324 = vrot.slane %v276, 3
        %v325 = vrot.slane %v277, 3
        %v326 = vrot.slane %v278, 3
        %v327 = vrot.slane %v279, 3
        %v328 = vrot.slane %v280, 3
        %v329 = vrot.slane %v281, 3
        %v330 = vrot.slane %v282, 3
        %v331 = vrot.slane %v283, 3
        %v332 = vrot.slane %v284, 3
        %v333 = vrot.slane %v285, 3
        %v334 = vrot.slane %v286, 3
        %v335 = vrot.slane %v287, 3
        %v336 = vrot.slane %v288, 3
        %v337 = vrot.slane %v289, 3
        %v338 = vrot.slane %v290, 3
        %v339 = vrot.slane %v291, 3
        %v340 = vrot.slane %v292, 3
        %vm341 = vcmask 1040384
        %v344 = vsel %vm341, %v269, %v317
        %vm345 = vcmask 1041409
        %v346 = vsel %vm345, %v269, %v317
        %v348 = vrot.slane %v346, 1
        %vm349 = vcmask 1042434
        %v350 = vsel %vm349, %v269, %v317
        %v352 = vrot.slane %v350, 2
        %vm353 = vcmask 1043459
        %v354 = vsel %vm353, %v269, %v317
        %v356 = vrot.slane %v354, 3
        %v359 = vsel %vm341, %v270, %v318
        %v360 = vsel %vm345, %v270, %v318
        %v362 = vrot.slane %v360, 1
        %v363 = vsel %vm349, %v270, %v318
        %v365 = vrot.slane %v363, 2
        %v366 = vsel %vm353, %v270, %v318
        %v368 = vrot.slane %v366, 3
        %v371 = vsel %vm341, %v271, %v319
        %v374 = vsel %vm341, %v272, %v320
        %v375 = vsel %vm345, %v272, %v320
        %v377 = vrot.slane %v375, 1
        %v378 = vsel %vm349, %v272, %v320
        %v380 = vrot.slane %v378, 2
        %v381 = vsel %vm353, %v272, %v320
        %v383 = vrot.slane %v381, 3
        %v386 = vsel %vm341, %v273, %v321
        %v387 = vsel %vm345, %v273, %v321
        %v389 = vrot.slane %v387, 1
        %v390 = vsel %vm349, %v273, %v321
        %v392 = vrot.slane %v390, 2
        %v393 = vsel %vm353, %v273, %v321
        %v395 = vrot.slane %v393, 3
        %v398 = vsel %vm341, %v274, %v322
        %v401 = vsel %vm341, %v275, %v323
        %v402 = vsel %vm345, %v275, %v323
        %v404 = vrot.slane %v402, 1
        %v405 = vsel %vm349, %v275, %v323
        %v407 = vrot.slane %v405, 2
        %v408 = vsel %vm353, %v275, %v323
        %v410 = vrot.slane %v408, 3
        %v413 = vsel %vm341, %v276, %v324
        %v414 = vsel %vm345, %v276, %v324
        %v416 = vrot.slane %v414, 1
        %v417 = vsel %vm349, %v276, %v324
        %v419 = vrot.slane %v417, 2
        %v420 = vsel %vm353, %v276, %v324
        %v422 = vrot.slane %v420, 3
        %v425 = vsel %vm341, %v277, %v325
        %v428 = vsel %vm341, %v278, %v326
        %v429 = vsel %vm345, %v278, %v326
        %v431 = vrot.slane %v429, 1
        %v432 = vsel %vm349, %v278, %v326
        %v434 = vrot.slane %v432, 2
        %v435 = vsel %vm353, %v278, %v326
        %v437 = vrot.slane %v435, 3
        %v440 = vsel %vm341, %v279, %v327
        %v441 = vsel %vm345, %v279, %v327
        %v443 = vrot.slane %v441, 1
        %v444 = vsel %vm349, %v279, %v327
        %v446 = vrot.slane %v444, 2
        %v447 = vsel %vm353, %v279, %v327
        %v449 = vrot.slane %v447, 3
        %v452 = vsel %vm341, %v280, %v328
        %v455 = vsel %vm341, %v281, %v329
        %v456 = vsel %vm345, %v281, %v329
        %v458 = vrot.slane %v456, 1
        %v459 = vsel %vm349, %v281, %v329
        %v461 = vrot.slane %v459, 2
        %v462 = vsel %vm353, %v281, %v329
        %v464 = vrot.slane %v462, 3
        %v467 = vsel %vm341, %v282, %v330
        %v468 = vsel %vm345, %v282, %v330
        %v470 = vrot.slane %v468, 1
        %v471 = vsel %vm349, %v282, %v330
        %v473 = vrot.slane %v471, 2
        %v474 = vsel %vm353, %v282, %v330
        %v476 = vrot.slane %v474, 3
        %v479 = vsel %vm341, %v283, %v331
        %v482 = vsel %vm341, %v284, %v332
        %v483 = vsel %vm345, %v284, %v332
        %v485 = vrot.slane %v483, 1
        %v486 = vsel %vm349, %v284, %v332
        %v488 = vrot.slane %v486, 2
        %v489 = vsel %vm353, %v284, %v332
        %v491 = vrot.slane %v489, 3
        %v494 = vsel %vm341, %v285, %v333
        %v495 = vsel %vm345, %v285, %v333
        %v497 = vrot.slane %v495, 1
        %v498 = vsel %vm349, %v285, %v333
        %v500 = vrot.slane %v498, 2
        %v501 = vsel %vm353, %v285, %v333
        %v503 = vrot.slane %v501, 3
        %v506 = vsel %vm341, %v286, %v334
        %v509 = vsel %vm341, %v287, %v335
        %v510 = vsel %vm345, %v287, %v335
        %v512 = vrot.slane %v510, 1
        %v513 = vsel %vm349, %v287, %v335
        %v515 = vrot.slane %v513, 2
        %v516 = vsel %vm353, %v287, %v335
        %v518 = vrot.slane %v516, 3
        %v521 = vsel %vm341, %v288, %v336
        %v522 = vsel %vm345, %v288, %v336
        %v524 = vrot.slane %v522, 1
        %v525 = vsel %vm349, %v288, %v336
        %v527 = vrot.slane %v525, 2
        %v528 = vsel %vm353, %v288, %v336
        %v530 = vrot.slane %v528, 3
        %v533 = vsel %vm341, %v289, %v337
        %v536 = vsel %vm341, %v290, %v338
        %v537 = vsel %vm345, %v290, %v338
        %v539 = vrot.slane %v537, 1
        %v540 = vsel %vm349, %v290, %v338
        %v542 = vrot.slane %v540, 2
        %v543 = vsel %vm353, %v290, %v338
        %v545 = vrot.slane %v543, 3
        %v548 = vsel %vm341, %v291, %v339
        %v549 = vsel %vm345, %v291, %v339
        %v551 = vrot.slane %v549, 1
        %v552 = vsel %vm349, %v291, %v339
        %v554 = vrot.slane %v552, 2
        %v555 = vsel %vm353, %v291, %v339
        %v557 = vrot.slane %v555, 3
        %v560 = vsel %vm341, %v292, %v340
        %v561 = vld [vmem:[%s1] sm:$0xf]
        %v562 = vld [vmem:[%s1 + $0x4] sm:$0xf]
        %v563 = vld [vmem:[%s1 + $0x8] sm:$0xf]
        %v564 = vld [vmem:[%s1 + $0xc] sm:$0xf]
        %v565 = vld [vmem:[%s1 + $0x10] sm:$0xf]
        %v566 = vld [vmem:[%s1 + $0x14] sm:$0xf]
        %v567 = vld [vmem:[%s1 + $0x18] sm:$0xf]
        %v568 = vld [vmem:[%s1 + $0x1c] sm:$0xf]
        %v569 = vsel %vm345, %v271, %v319
        %v571 = vrot.slane %v569, 1
        %v572 = vsel %vm345, %v274, %v322
        %v574 = vrot.slane %v572, 1
        %v575 = vsel %vm345, %v277, %v325
        %v577 = vrot.slane %v575, 1
        %v578 = vsel %vm345, %v280, %v328
        %v580 = vrot.slane %v578, 1
        %v581 = vsel %vm345, %v283, %v331
        %v583 = vrot.slane %v581, 1
        %v584 = vsel %vm345, %v286, %v334
        %v586 = vrot.slane %v584, 1
        %v587 = vsel %vm345, %v289, %v337
        %v589 = vrot.slane %v587, 1
        %v590 = vsel %vm345, %v292, %v340
        %v592 = vrot.slane %v590, 1
        %vm593 = vsmask.f32 256
        %vm594 = vsmask.f32 1284
        %vm595 = vmor %vm593, %vm594
        %vm596 = vsmask.f32 2312
        %vm597 = vmor %vm595, %vm596
        %vm598 = vsmask.f32 3340
        %vm599 = vmor %vm597, %vm598
        %vm600 = vsmask.f32 4368
        %vm601 = vmor %vm599, %vm600
        %vm602 = vsmask.f32 5396
        %vm603 = vmor %vm601, %vm602
        %vm604 = vsmask.f32 6424
        %vm605 = vmor %vm603, %vm604
        %vm606 = vsmask.f32 7452
        %vm607 = vmor %vm605, %vm606
        %v608 = vshrl.u32 %v344, 16
        %v610 = vrot.slane %v608, 7
        %v611 = vrot.slane %v610, 1
        %v613 = vshll.u32 %v348, 16
        %v615 = vsel %vm607, %v611, %v613
        %v616 = vshrl.u32 %v348, 16
        %v618 = vrot.slane %v616, 7
        %v619 = vrot.slane %v618, 1
        %v621 = vshll.u32 %v352, 16
        %v623 = vsel %vm607, %v619, %v621
        %v624 = vshrl.u32 %v352, 16
        %v626 = vrot.slane %v624, 7
        %v627 = vrot.slane %v626, 1
        %v629 = vshll.u32 %v356, 16
        %v631 = vsel %vm607, %v627, %v629
        %v632 = vshrl.u32 %v356, 16
        %v634 = vrot.slane %v632, 7
        %v635 = vrot.slane %v634, 1
        %v636 = vshll.u32 %v359, 16
        %v638 = vsel %vm607, %v635, %v636
        %v639 = vshrl.u32 %v359, 16
        %v641 = vrot.slane %v639, 7
        %v642 = vrot.slane %v641, 1
        %v644 = vshll.u32 %v362, 16
        %v646 = vsel %vm607, %v642, %v644
        %v647 = vshrl.u32 %v362, 16
        %v649 = vrot.slane %v647, 7
        %v650 = vrot.slane %v649, 1
        %v652 = vshll.u32 %v365, 16
        %v654 = vsel %vm607, %v650, %v652
        %v655 = vshrl.u32 %v365, 16
        %v657 = vrot.slane %v655, 7
        %v658 = vrot.slane %v657, 1
        %v660 = vshll.u32 %v368, 16
        %v662 = vsel %vm607, %v658, %v660
        %v663 = vshrl.u32 %v368, 16
        %v665 = vrot.slane %v663, 7
        %v666 = vrot.slane %v665, 1
        %v667 = vshll.u32 %v371, 16
        %v669 = vsel %vm607, %v666, %v667
        %v670 = vshrl.u32 %v371, 16
        %v672 = vrot.slane %v670, 7
        %v673 = vrot.slane %v672, 1
        %v675 = vshll.u32 %v571, 16
        %v677 = vsel %vm607, %v673, %v675
        %v678 = vshrl.u32 %v374, 16
        %v680 = vrot.slane %v678, 7
        %v681 = vrot.slane %v680, 1
        %v683 = vshll.u32 %v377, 16
        %v685 = vsel %vm607, %v681, %v683
        %v686 = vshrl.u32 %v377, 16
        %v688 = vrot.slane %v686, 7
        %v689 = vrot.slane %v688, 1
        %v691 = vshll.u32 %v380, 16
        %v693 = vsel %vm607, %v689, %v691
        %v694 = vshrl.u32 %v380, 16
        %v696 = vrot.slane %v694, 7
        %v697 = vrot.slane %v696, 1
        %v699 = vshll.u32 %v383, 16
        %v701 = vsel %vm607, %v697, %v699
        %v702 = vshrl.u32 %v383, 16
        %v704 = vrot.slane %v702, 7
        %v705 = vrot.slane %v704, 1
        %v706 = vshll.u32 %v386, 16
        %v708 = vsel %vm607, %v705, %v706
        %v709 = vshrl.u32 %v386, 16
        %v711 = vrot.slane %v709, 7
        %v712 = vrot.slane %v711, 1
        %v714 = vshll.u32 %v389, 16
        %v716 = vsel %vm607, %v712, %v714
        %v717 = vshrl.u32 %v389, 16
        %v719 = vrot.slane %v717, 7
        %v720 = vrot.slane %v719, 1
        %v722 = vshll.u32 %v392, 16
        %v724 = vsel %vm607, %v720, %v722
        %v725 = vshrl.u32 %v392, 16
        %v727 = vrot.slane %v725, 7
        %v728 = vrot.slane %v727, 1
        %v730 = vshll.u32 %v395, 16
        %v732 = vsel %vm607, %v728, %v730
        %v733 = vshrl.u32 %v395, 16
        %v735 = vrot.slane %v733, 7
        %v736 = vrot.slane %v735, 1
        %v737 = vshll.u32 %v398, 16
        %v739 = vsel %vm607, %v736, %v737
        %v740 = vshrl.u32 %v398, 16
        %v742 = vrot.slane %v740, 7
        %v743 = vrot.slane %v742, 1
        %v745 = vshll.u32 %v574, 16
        %v747 = vsel %vm607, %v743, %v745
        %v748 = vshrl.u32 %v401, 16
        %v750 = vrot.slane %v748, 7
        %v751 = vrot.slane %v750, 1
        %v753 = vshll.u32 %v404, 16
        %v755 = vsel %vm607, %v751, %v753
        %v756 = vshrl.u32 %v404, 16
        %v758 = vrot.slane %v756, 7
        %v759 = vrot.slane %v758, 1
        %v761 = vshll.u32 %v407, 16
        %v763 = vsel %vm607, %v759, %v761
        %v764 = vshrl.u32 %v407, 16
        %v766 = vrot.slane %v764, 7
        %v767 = vrot.slane %v766, 1
        %v769 = vshll.u32 %v410, 16
        %v771 = vsel %vm607, %v767, %v769
        %v772 = vshrl.u32 %v410, 16
        %v774 = vrot.slane %v772, 7
        %v775 = vrot.slane %v774, 1
        %v776 = vshll.u32 %v413, 16
        %v778 = vsel %vm607, %v775, %v776
        %v779 = vshrl.u32 %v413, 16
        %v781 = vrot.slane %v779, 7
        %v782 = vrot.slane %v781, 1
        %v784 = vshll.u32 %v416, 16
        %v786 = vsel %vm607, %v782, %v784
        %v787 = vshrl.u32 %v416, 16
        %v789 = vrot.slane %v787, 7
        %v790 = vrot.slane %v789, 1
        %v792 = vshll.u32 %v419, 16
        %v794 = vsel %vm607, %v790, %v792
        %v795 = vshrl.u32 %v419, 16
        %v797 = vrot.slane %v795, 7
        %v798 = vrot.slane %v797, 1
        %v800 = vshll.u32 %v422, 16
        %v802 = vsel %vm607, %v798, %v800
        %v803 = vshrl.u32 %v422, 16
        %v805 = vrot.slane %v803, 7
        %v806 = vrot.slane %v805, 1
        %v807 = vshll.u32 %v425, 16
        %v809 = vsel %vm607, %v806, %v807
        %v810 = vshrl.u32 %v425, 16
        %v812 = vrot.slane %v810, 7
        %v813 = vrot.slane %v812, 1
        %v815 = vshll.u32 %v577, 16
        %v817 = vsel %vm607, %v813, %v815
        %v818 = vshrl.u32 %v428, 16
        %v820 = vrot.slane %v818, 7
        %v821 = vrot.slane %v820, 1
        %v823 = vshll.u32 %v431, 16
        %v825 = vsel %vm607, %v821, %v823
        %v826 = vshrl.u32 %v431, 16
        %v828 = vrot.slane %v826, 7
        %v829 = vrot.slane %v828, 1
        %v831 = vshll.u32 %v434, 16
        %v833 = vsel %vm607, %v829, %v831
        %v834 = vshrl.u32 %v434, 16
        %v836 = vrot.slane %v834, 7
        %v837 = vrot.slane %v836, 1
        %v839 = vshll.u32 %v437, 16
        %v841 = vsel %vm607, %v837, %v839
        %v842 = vshrl.u32 %v437, 16
        %v844 = vrot.slane %v842, 7
        %v845 = vrot.slane %v844, 1
        %v846 = vshll.u32 %v440, 16
        %v848 = vsel %vm607, %v845, %v846
        %v849 = vshrl.u32 %v440, 16
        %v851 = vrot.slane %v849, 7
        %v852 = vrot.slane %v851, 1
        %v854 = vshll.u32 %v443, 16
        %v856 = vsel %vm607, %v852, %v854
        %v857 = vshrl.u32 %v443, 16
        %v859 = vrot.slane %v857, 7
        %v860 = vrot.slane %v859, 1
        %v862 = vshll.u32 %v446, 16
        %v864 = vsel %vm607, %v860, %v862
        %v865 = vshrl.u32 %v446, 16
        %v867 = vrot.slane %v865, 7
        %v868 = vrot.slane %v867, 1
        %v870 = vshll.u32 %v449, 16
        %v872 = vsel %vm607, %v868, %v870
        %v873 = vshrl.u32 %v449, 16
        %v875 = vrot.slane %v873, 7
        %v876 = vrot.slane %v875, 1
        %v877 = vshll.u32 %v452, 16
        %v879 = vsel %vm607, %v876, %v877
        %v880 = vshrl.u32 %v452, 16
        %v882 = vrot.slane %v880, 7
        %v883 = vrot.slane %v882, 1
        %v885 = vshll.u32 %v580, 16
        %v887 = vsel %vm607, %v883, %v885
        %v888 = vshrl.u32 %v455, 16
        %v890 = vrot.slane %v888, 7
        %v891 = vrot.slane %v890, 1
        %v893 = vshll.u32 %v458, 16
        %v895 = vsel %vm607, %v891, %v893
        %v896 = vshrl.u32 %v458, 16
        %v898 = vrot.slane %v896, 7
        %v899 = vrot.slane %v898, 1
        %v901 = vshll.u32 %v461, 16
        %v903 = vsel %vm607, %v899, %v901
        %v904 = vshrl.u32 %v461, 16
        %v906 = vrot.slane %v904, 7
        %v907 = vrot.slane %v906, 1
        %v909 = vshll.u32 %v464, 16
        %v911 = vsel %vm607, %v907, %v909
        %v912 = vshrl.u32 %v464, 16
        %v914 = vrot.slane %v912, 7
        %v915 = vrot.slane %v914, 1
        %v916 = vshll.u32 %v467, 16
        %v918 = vsel %vm607, %v915, %v916
        %v919 = vshrl.u32 %v467, 16
        %v921 = vrot.slane %v919, 7
        %v922 = vrot.slane %v921, 1
        %v924 = vshll.u32 %v470, 16
        %v926 = vsel %vm607, %v922, %v924
        %v927 = vshrl.u32 %v470, 16
        %v929 = vrot.slane %v927, 7
        %v930 = vrot.slane %v929, 1
        %v932 = vshll.u32 %v473, 16
        %v934 = vsel %vm607, %v930, %v932
        %v935 = vshrl.u32 %v473, 16
        %v937 = vrot.slane %v935, 7
        %v938 = vrot.slane %v937, 1
        %v940 = vshll.u32 %v476, 16
        %v942 = vsel %vm607, %v938, %v940
        %v943 = vshrl.u32 %v476, 16
        %v945 = vrot.slane %v943, 7
        %v946 = vrot.slane %v945, 1
        %v947 = vshll.u32 %v479, 16
        %v949 = vsel %vm607, %v946, %v947
        %v950 = vshrl.u32 %v479, 16
        %v952 = vrot.slane %v950, 7
        %v953 = vrot.slane %v952, 1
        %v955 = vshll.u32 %v583, 16
        %v957 = vsel %vm607, %v953, %v955
        %v958 = vshrl.u32 %v482, 16
        %v960 = vrot.slane %v958, 7
        %v961 = vrot.slane %v960, 1
        %v963 = vshll.u32 %v485, 16
        %v965 = vsel %vm607, %v961, %v963
        %v966 = vshrl.u32 %v485, 16
        %v968 = vrot.slane %v966, 7
        %v969 = vrot.slane %v968, 1
        %v971 = vshll.u32 %v488, 16
        %v973 = vsel %vm607, %v969, %v971
        %v974 = vshrl.u32 %v488, 16
        %v976 = vrot.slane %v974, 7
        %v977 = vrot.slane %v976, 1
        %v979 = vshll.u32 %v491, 16
        %v981 = vsel %vm607, %v977, %v979
        %v982 = vshrl.u32 %v491, 16
        %v984 = vrot.slane %v982, 7
        %v985 = vrot.slane %v984, 1
        %v986 = vshll.u32 %v494, 16
        %v988 = vsel %vm607, %v985, %v986
        %v989 = vshrl.u32 %v494, 16
        %v991 = vrot.slane %v989, 7
        %v992 = vrot.slane %v991, 1
        %v994 = vshll.u32 %v497, 16
        %v996 = vsel %vm607, %v992, %v994
        %v997 = vshrl.u32 %v497, 16
        %v999 = vrot.slane %v997, 7
        %v1000 = vrot.slane %v999, 1
        %v1002 = vshll.u32 %v500, 16
        %v1004 = vsel %vm607, %v1000, %v1002
        %v1005 = vshrl.u32 %v500, 16
        %v1007 = vrot.slane %v1005, 7
        %v1008 = vrot.slane %v1007, 1
        %v1010 = vshll.u32 %v503, 16
        %v1012 = vsel %vm607, %v1008, %v1010
        %v1013 = vshrl.u32 %v503, 16
        %v1015 = vrot.slane %v1013, 7
        %v1016 = vrot.slane %v1015, 1
        %v1017 = vshll.u32 %v506, 16
        %v1019 = vsel %vm607, %v1016, %v1017
        %v1020 = vshrl.u32 %v506, 16
        %v1022 = vrot.slane %v1020, 7
        %v1023 = vrot.slane %v1022, 1
        %v1025 = vshll.u32 %v586, 16
        %v1027 = vsel %vm607, %v1023, %v1025
        %v1028 = vshrl.u32 %v509, 16
        %v1030 = vrot.slane %v1028, 7
        %v1031 = vrot.slane %v1030, 1
        %v1033 = vshll.u32 %v512, 16
        %v1035 = vsel %vm607, %v1031, %v1033
        %v1036 = vshrl.u32 %v512, 16
        %v1038 = vrot.slane %v1036, 7
        %v1039 = vrot.slane %v1038, 1
        %v1041 = vshll.u32 %v515, 16
        %v1043 = vsel %vm607, %v1039, %v1041
        %v1044 = vshrl.u32 %v515, 16
        %v1046 = vrot.slane %v1044, 7
        %v1047 = vrot.slane %v1046, 1
        %v1049 = vshll.u32 %v518, 16
        %v1051 = vsel %vm607, %v1047, %v1049
        %v1052 = vshrl.u32 %v518, 16
        %v1054 = vrot.slane %v1052, 7
        %v1055 = vrot.slane %v1054, 1
        %v1056 = vshll.u32 %v521, 16
        %v1058 = vsel %vm607, %v1055, %v1056
        %v1059 = vshrl.u32 %v521, 16
        %v1061 = vrot.slane %v1059, 7
        %v1062 = vrot.slane %v1061, 1
        %v1064 = vshll.u32 %v524, 16
        %v1066 = vsel %vm607, %v1062, %v1064
        %v1067 = vshrl.u32 %v524, 16
        %v1069 = vrot.slane %v1067, 7
        %v1070 = vrot.slane %v1069, 1
        %v1072 = vshll.u32 %v527, 16
        %v1074 = vsel %vm607, %v1070, %v1072
        %v1075 = vshrl.u32 %v527, 16
        %v1077 = vrot.slane %v1075, 7
        %v1078 = vrot.slane %v1077, 1
        %v1080 = vshll.u32 %v530, 16
        %v1082 = vsel %vm607, %v1078, %v1080
        %v1083 = vshrl.u32 %v530, 16
        %v1085 = vrot.slane %v1083, 7
        %v1086 = vrot.slane %v1085, 1
        %v1087 = vshll.u32 %v533, 16
        %v1089 = vsel %vm607, %v1086, %v1087
        %v1090 = vshrl.u32 %v533, 16
        %v1092 = vrot.slane %v1090, 7
        %v1093 = vrot.slane %v1092, 1
        %v1095 = vshll.u32 %v589, 16
        %v1097 = vsel %vm607, %v1093, %v1095
        %v1098 = vshrl.u32 %v536, 16
        %v1100 = vrot.slane %v1098, 7
        %v1101 = vrot.slane %v1100, 1
        %v1103 = vshll.u32 %v539, 16
        %v1105 = vsel %vm607, %v1101, %v1103
        %v1106 = vshrl.u32 %v539, 16
        %v1108 = vrot.slane %v1106, 7
        %v1109 = vrot.slane %v1108, 1
        %v1111 = vshll.u32 %v542, 16
        %v1113 = vsel %vm607, %v1109, %v1111
        %v1114 = vshrl.u32 %v542, 16
        %v1116 = vrot.slane %v1114, 7
        %v1117 = vrot.slane %v1116, 1
        %v1119 = vshll.u32 %v545, 16
        %v1121 = vsel %vm607, %v1117, %v1119
        %v1122 = vshrl.u32 %v545, 16
        %v1124 = vrot.slane %v1122, 7
        %v1125 = vrot.slane %v1124, 1
        %v1126 = vshll.u32 %v548, 16
        %v1128 = vsel %vm607, %v1125, %v1126
        %v1129 = vshrl.u32 %v548, 16
        %v1131 = vrot.slane %v1129, 7
        %v1132 = vrot.slane %v1131, 1
        %v1134 = vshll.u32 %v551, 16
        %v1136 = vsel %vm607, %v1132, %v1134
        %v1137 = vshrl.u32 %v551, 16
        %v1139 = vrot.slane %v1137, 7
        %v1140 = vrot.slane %v1139, 1
        %v1142 = vshll.u32 %v554, 16
        %v1144 = vsel %vm607, %v1140, %v1142
        %v1145 = vshrl.u32 %v554, 16
        %v1147 = vrot.slane %v1145, 7
        %v1148 = vrot.slane %v1147, 1
        %v1150 = vshll.u32 %v557, 16
        %v1152 = vsel %vm607, %v1148, %v1150
        %v1153 = vshrl.u32 %v557, 16
        %v1155 = vrot.slane %v1153, 7
        %v1156 = vrot.slane %v1155, 1
        %v1157 = vshll.u32 %v560, 16
        %v1159 = vsel %vm607, %v1156, %v1157
        %v1160 = vshrl.u32 %v560, 16
        %v1162 = vrot.slane %v1160, 7
        %v1163 = vrot.slane %v1162, 1
        %v1165 = vshll.u32 %v592, 16
        %v1167 = vsel %vm607, %v1163, %v1165
        %s1168 = scalar_lea.vmem %s1, 32
        %v1169 = vld [vmem:[%s1168] sm:$0xf]
        %v1170 = vld [vmem:[%s1168 + $0x4] sm:$0xf]
        %v1171 = vld [vmem:[%s1168 + $0x8] sm:$0xf]
        %v1172 = vld [vmem:[%s1168 + $0xc] sm:$0xf]
        %v1173 = vld [vmem:[%s1168 + $0x10] sm:$0xf]
        %v1174 = vld [vmem:[%s1168 + $0x14] sm:$0xf]
        %v1175 = vld [vmem:[%s1168 + $0x18] sm:$0xf]
        %v1176 = vld [vmem:[%s1168 + $0x1c] sm:$0xf]
        %1178 = vst [vmem:[#allocation1] ss:$9 sm:$0xff] %v615
        %s1180 = scalar_lea.vmem [#allocation1], 1
        %1181 = vst [vmem:[%s1180] ss:$9 sm:$0xff] %v623
        %s1183 = scalar_lea.vmem [#allocation1], 2
        %1184 = vst [vmem:[%s1183] ss:$9 sm:$0xff] %v631
        %s1186 = scalar_lea.vmem [#allocation1], 3
        %1187 = vst [vmem:[%s1186] ss:$9 sm:$0xff] %v638
        %s1189 = scalar_lea.vmem [#allocation1], 4
        %1190 = vst [vmem:[%s1189] ss:$9 sm:$0xff] %v646
        %s1192 = scalar_lea.vmem [#allocation1], 5
        %1193 = vst [vmem:[%s1192] ss:$9 sm:$0xff] %v654
        %s1195 = scalar_lea.vmem [#allocation1], 6
        %1196 = vst [vmem:[%s1195] ss:$9 sm:$0xff] %v662
        %s1198 = scalar_lea.vmem [#allocation1], 7
        %1199 = vst [vmem:[%s1198] ss:$9 sm:$0xff] %v669
        %v1200 = vld [vmem:[#allocation1] sm:$0xff]
        %1202 = vst [vmem:[#allocation1] ss:$9 sm:$0xff] %v677
        %1204 = vst [vmem:[%s1180] ss:$9 sm:$0xff] %v685
        %1206 = vst [vmem:[%s1183] ss:$9 sm:$0xff] %v693
        %1208 = vst [vmem:[%s1186] ss:$9 sm:$0xff] %v701
        %1210 = vst [vmem:[%s1189] ss:$9 sm:$0xff] %v708
        %1212 = vst [vmem:[%s1192] ss:$9 sm:$0xff] %v716
        %1214 = vst [vmem:[%s1195] ss:$9 sm:$0xff] %v724
        %1216 = vst [vmem:[%s1198] ss:$9 sm:$0xff] %v732
        %v1217 = vld [vmem:[#allocation1] sm:$0xff]
        %1219 = vst [vmem:[#allocation1] ss:$9 sm:$0xff] %v739
        %1221 = vst [vmem:[%s1180] ss:$9 sm:$0xff] %v747
        %1223 = vst [vmem:[%s1183] ss:$9 sm:$0xff] %v755
        %1225 = vst [vmem:[%s1186] ss:$9 sm:$0xff] %v763
        %1227 = vst [vmem:[%s1189] ss:$9 sm:$0xff] %v771
        %1229 = vst [vmem:[%s1192] ss:$9 sm:$0xff] %v778
        %1231 = vst [vmem:[%s1195] ss:$9 sm:$0xff] %v786
        %1233 = vst [vmem:[%s1198] ss:$9 sm:$0xff] %v794
        %v1234 = vld [vmem:[#allocation1] sm:$0xff]
        %1236 = vst [vmem:[#allocation1] ss:$9 sm:$0xff] %v802
        %1238 = vst [vmem:[%s1180] ss:$9 sm:$0xff] %v809
        %1240 = vst [vmem:[%s1183] ss:$9 sm:$0xff] %v817
        %1242 = vst [vmem:[%s1186] ss:$9 sm:$0xff] %v825
        %1244 = vst [vmem:[%s1189] ss:$9 sm:$0xff] %v833
        %1246 = vst [vmem:[%s1192] ss:$9 sm:$0xff] %v841
        %1248 = vst [vmem:[%s1195] ss:$9 sm:$0xff] %v848
        %1250 = vst [vmem:[%s1198] ss:$9 sm:$0xff] %v856
        %v1251 = vld [vmem:[#allocation1] sm:$0xff]
        %1253 = vst [vmem:[#allocation1] ss:$9 sm:$0xff] %v864
        %1255 = vst [vmem:[%s1180] ss:$9 sm:$0xff] %v872
        %1257 = vst [vmem:[%s1183] ss:$9 sm:$0xff] %v879
        %1259 = vst [vmem:[%s1186] ss:$9 sm:$0xff] %v887
        %1261 = vst [vmem:[%s1189] ss:$9 sm:$0xff] %v895
        %1263 = vst [vmem:[%s1192] ss:$9 sm:$0xff] %v903
        %1265 = vst [vmem:[%s1195] ss:$9 sm:$0xff] %v911
        %1267 = vst [vmem:[%s1198] ss:$9 sm:$0xff] %v918
        %v1268 = vld [vmem:[#allocation1] sm:$0xff]
        %1270 = vst [vmem:[#allocation1] ss:$9 sm:$0xff] %v926
        %1272 = vst [vmem:[%s1180] ss:$9 sm:$0xff] %v934
        %1274 = vst [vmem:[%s1183] ss:$9 sm:$0xff] %v942
        %1276 = vst [vmem:[%s1186] ss:$9 sm:$0xff] %v949
        %1278 = vst [vmem:[%s1189] ss:$9 sm:$0xff] %v957
        %1280 = vst [vmem:[%s1192] ss:$9 sm:$0xff] %v965
        %1282 = vst [vmem:[%s1195] ss:$9 sm:$0xff] %v973
        %1284 = vst [vmem:[%s1198] ss:$9 sm:$0xff] %v981
        %v1285 = vld [vmem:[#allocation1] sm:$0xff]
        %1287 = vst [vmem:[#allocation1] ss:$9 sm:$0xff] %v988
        %1289 = vst [vmem:[%s1180] ss:$9 sm:$0xff] %v996
        %1291 = vst [vmem:[%s1183] ss:$9 sm:$0xff] %v1004
        %1293 = vst [vmem:[%s1186] ss:$9 sm:$0xff] %v1012
        %1295 = vst [vmem:[%s1189] ss:$9 sm:$0xff] %v1019
        %1297 = vst [vmem:[%s1192] ss:$9 sm:$0xff] %v1027
        %1299 = vst [vmem:[%s1195] ss:$9 sm:$0xff] %v1035
        %1301 = vst [vmem:[%s1198] ss:$9 sm:$0xff] %v1043
        %v1302 = vld [vmem:[#allocation1] sm:$0xff]
        %1304 = vst [vmem:[#allocation1] ss:$9 sm:$0xff] %v1051
        %1306 = vst [vmem:[%s1180] ss:$9 sm:$0xff] %v1058
        %1308 = vst [vmem:[%s1183] ss:$9 sm:$0xff] %v1066
        %1310 = vst [vmem:[%s1186] ss:$9 sm:$0xff] %v1074
        %1312 = vst [vmem:[%s1189] ss:$9 sm:$0xff] %v1082
        %1314 = vst [vmem:[%s1192] ss:$9 sm:$0xff] %v1089
        %1316 = vst [vmem:[%s1195] ss:$9 sm:$0xff] %v1097
        %1318 = vst [vmem:[%s1198] ss:$9 sm:$0xff] %v1105
        %v1319 = vld [vmem:[#allocation1] sm:$0xff]
        %1321 = vst [vmem:[#allocation1] ss:$9 sm:$0xff] %v1113
        %1323 = vst [vmem:[%s1180] ss:$9 sm:$0xff] %v1121
        %1325 = vst [vmem:[%s1183] ss:$9 sm:$0xff] %v1128
        %1327 = vst [vmem:[%s1186] ss:$9 sm:$0xff] %v1136
        %1329 = vst [vmem:[%s1189] ss:$9 sm:$0xff] %v1144
        %1331 = vst [vmem:[%s1192] ss:$9 sm:$0xff] %v1152
        %1333 = vst [vmem:[%s1195] ss:$9 sm:$0xff] %v1159
        %1335 = vst [vmem:[%s1198] ss:$9 sm:$0xff] %v1167
        %v1336 = vld [vmem:[#allocation1] sm:$0xff]
        %v1345 = vunpack.c.l.b16 %v1169
        %v1346 = vunpack.c.l.b16 %v1170
        %v1347 = vunpack.c.l.b16 %v1171
        %v1348 = vunpack.c.l.b16 %v1172
        %v1349 = vunpack.c.l.b16 %v1173
        %v1350 = vunpack.c.l.b16 %v1174
        %v1351 = vunpack.c.l.b16 %v1175
        %v1352 = vunpack.c.l.b16 %v1176
        %v1353 = vpack.c.b16 %v1346, %v1345
        %v1354 = vpack.c.b16 %v1348, %v1347
        %v1355 = vpack.c.b16 %v1350, %v1349
        %v1356 = vpack.c.b16 %v1352, %v1351
        %vm1361 = vcmask 523264
        %v1362 = vsel %vm1361, %v1200, 0
        %v1364 = vsel %vm1361, %v1217, 0
        %v1366 = vsel %vm1361, %v1234, 0
        %v1368 = vsel %vm1361, %v1251, 0
        %v1370 = vsel %vm1361, %v1268, 0
        %v1372 = vsel %vm1361, %v1285, 0
        %v1374 = vsel %vm1361, %v1302, 0
        %v1376 = vsel %vm1361, %v1319, 0
        %v1378 = vsel %vm1361, %v1336, 0
        %1380 = vmatpush.bf16.msra.mxu0 0
        %1381 = vmatpush.bf16.msra.mxu0 0
        %1382 = vmatpush.bf16.msra.mxu0 0
        %1383 = vmatpush.bf16.msra.mxu0 0
        %1384 = vmatpush.bf16.msra.mxu0 %v1356
        %1385 = vmatpush.bf16.msra.mxu0 %v1355
        %1386 = vmatpush.bf16.msra.mxu0 %v1354
        %1387 = vmatpush.bf16.msra.mxu0 %v1353
        %1388 = vmatmul.bf16.gmra.mxu0 %v1362
        %v1389 = vpop.f32.mrf.mxu0
        %v1390 = vadd.f32 0.0, %v1389
        %v1391 = vpop.f32.mrf.mxu0
        %v1392 = vadd.f32 0.0, %v1391
        %1393 = vmatmul.bf16.gmra.mxu0 %v1364
        %v1394 = vpop.f32.mrf.mxu0
        %v1395 = vadd.f32 0.0, %v1394
        %v1396 = vpop.f32.mrf.mxu0
        %v1397 = vadd.f32 0.0, %v1396
        %1398 = vmatmul.bf16.gmra.mxu0 %v1366
        %v1399 = vpop.f32.mrf.mxu0
        %v1400 = vadd.f32 0.0, %v1399
        %v1401 = vpop.f32.mrf.mxu0
        %v1402 = vadd.f32 0.0, %v1401
        %1403 = vmatmul.bf16.gmra.mxu0 %v1368
        %v1404 = vpop.f32.mrf.mxu0
        %v1405 = vadd.f32 0.0, %v1404
        %v1406 = vpop.f32.mrf.mxu0
        %v1407 = vadd.f32 0.0, %v1406
        %1408 = vmatmul.bf16.gmra.mxu0 %v1370
        %v1409 = vpop.f32.mrf.mxu0
        %v1410 = vadd.f32 0.0, %v1409
        %v1411 = vpop.f32.mrf.mxu0
        %v1412 = vadd.f32 0.0, %v1411
        %1413 = vmatmul.bf16.gmra.mxu0 %v1372
        %v1414 = vpop.f32.mrf.mxu0
        %v1415 = vadd.f32 0.0, %v1414
        %v1416 = vpop.f32.mrf.mxu0
        %v1417 = vadd.f32 0.0, %v1416
        %1418 = vmatmul.bf16.gmra.mxu0 %v1374
        %v1419 = vpop.f32.mrf.mxu0
        %v1420 = vadd.f32 0.0, %v1419
        %v1421 = vpop.f32.mrf.mxu0
        %v1422 = vadd.f32 0.0, %v1421
        %1423 = vmatmul.bf16.gmra.mxu0 %v1376
        %v1424 = vpop.f32.mrf.mxu0
        %v1425 = vadd.f32 0.0, %v1424
        %v1426 = vpop.f32.mrf.mxu0
        %v1427 = vadd.f32 0.0, %v1426
        %1428 = vmatmul.bf16.gmra.mxu0 %v1378
        %v1429 = vpop.f32.mrf.mxu0
        %v1430 = vadd.f32 0.0, %v1429
        %v1431 = vpop.f32.mrf.mxu0
        %v1432 = vadd.f32 0.0, %v1431
        %1433 = vdwg.mxu0
        %1434 = vst [vmem:[#allocation1] ss:$9 sm:$0xff] %v344
        %s1435 = scalar_lea.vmem [#allocation1], 1
        %1436 = vst [vmem:[%s1435] ss:$9 sm:$0xff] %v348
        %s1437 = scalar_lea.vmem [#allocation1], 2
        %1438 = vst [vmem:[%s1437] ss:$9 sm:$0xff] %v352
        %s1439 = scalar_lea.vmem [#allocation1], 3
        %1440 = vst [vmem:[%s1439] ss:$9 sm:$0xff] %v356
        %s1441 = scalar_lea.vmem [#allocation1], 4
        %1442 = vst [vmem:[%s1441] ss:$9 sm:$0xff] %v359
        %s1443 = scalar_lea.vmem [#allocation1], 5
        %1444 = vst [vmem:[%s1443] ss:$9 sm:$0xff] %v362
        %s1445 = scalar_lea.vmem [#allocation1], 6
        %1446 = vst [vmem:[%s1445] ss:$9 sm:$0xff] %v365
        %s1447 = scalar_lea.vmem [#allocation1], 7
        %1448 = vst [vmem:[%s1447] ss:$9 sm:$0xff] %v368
        %v1449 = vld [vmem:[#allocation1] sm:$0xff]
        %1450 = vst [vmem:[#allocation1] ss:$9 sm:$0xff] %v371
        %1451 = vst [vmem:[%s1435] ss:$9 sm:$0xff] %v374
        %1452 = vst [vmem:[%s1437] ss:$9 sm:$0xff] %v377
        %1453 = vst [vmem:[%s1439] ss:$9 sm:$0xff] %v380
        %1454 = vst [vmem:[%s1441] ss:$9 sm:$0xff] %v383
        %1455 = vst [vmem:[%s1443] ss:$9 sm:$0xff] %v386
        %1456 = vst [vmem:[%s1445] ss:$9 sm:$0xff] %v389
        %1457 = vst [vmem:[%s1447] ss:$9 sm:$0xff] %v392
        %v1458 = vld [vmem:[#allocation1] sm:$0xff]
        %1459 = vst [vmem:[#allocation1] ss:$9 sm:$0xff] %v395
        %1460 = vst [vmem:[%s1435] ss:$9 sm:$0xff] %v398
        %1461 = vst [vmem:[%s1437] ss:$9 sm:$0xff] %v401
        %1462 = vst [vmem:[%s1439] ss:$9 sm:$0xff] %v404
        %1463 = vst [vmem:[%s1441] ss:$9 sm:$0xff] %v407
        %1464 = vst [vmem:[%s1443] ss:$9 sm:$0xff] %v410
        %1465 = vst [vmem:[%s1445] ss:$9 sm:$0xff] %v413
        %1466 = vst [vmem:[%s1447] ss:$9 sm:$0xff] %v416
        %v1467 = vld [vmem:[#allocation1] sm:$0xff]
        %1468 = vst [vmem:[#allocation1] ss:$9 sm:$0xff] %v419
        %1469 = vst [vmem:[%s1435] ss:$9 sm:$0xff] %v422
        %1470 = vst [vmem:[%s1437] ss:$9 sm:$0xff] %v425
        %1471 = vst [vmem:[%s1439] ss:$9 sm:$0xff] %v428
        %1472 = vst [vmem:[%s1441] ss:$9 sm:$0xff] %v431
        %1473 = vst [vmem:[%s1443] ss:$9 sm:$0xff] %v434
        %1474 = vst [vmem:[%s1445] ss:$9 sm:$0xff] %v437
        %1475 = vst [vmem:[%s1447] ss:$9 sm:$0xff] %v440
        %v1476 = vld [vmem:[#allocation1] sm:$0xff]
        %1477 = vst [vmem:[#allocation1] ss:$9 sm:$0xff] %v443
        %1478 = vst [vmem:[%s1435] ss:$9 sm:$0xff] %v446
        %1479 = vst [vmem:[%s1437] ss:$9 sm:$0xff] %v449
        %1480 = vst [vmem:[%s1439] ss:$9 sm:$0xff] %v452
        %1481 = vst [vmem:[%s1441] ss:$9 sm:$0xff] %v455
        %1482 = vst [vmem:[%s1443] ss:$9 sm:$0xff] %v458
        %1483 = vst [vmem:[%s1445] ss:$9 sm:$0xff] %v461
        %1484 = vst [vmem:[%s1447] ss:$9 sm:$0xff] %v464
        %v1485 = vld [vmem:[#allocation1] sm:$0xff]
        %1486 = vst [vmem:[#allocation1] ss:$9 sm:$0xff] %v467
        %1487 = vst [vmem:[%s1435] ss:$9 sm:$0xff] %v470
        %1488 = vst [vmem:[%s1437] ss:$9 sm:$0xff] %v473
        %1489 = vst [vmem:[%s1439] ss:$9 sm:$0xff] %v476
        %1490 = vst [vmem:[%s1441] ss:$9 sm:$0xff] %v479
        %1491 = vst [vmem:[%s1443] ss:$9 sm:$0xff] %v482
        %1492 = vst [vmem:[%s1445] ss:$9 sm:$0xff] %v485
        %1493 = vst [vmem:[%s1447] ss:$9 sm:$0xff] %v488
        %v1494 = vld [vmem:[#allocation1] sm:$0xff]
        %1495 = vst [vmem:[#allocation1] ss:$9 sm:$0xff] %v491
        %1496 = vst [vmem:[%s1435] ss:$9 sm:$0xff] %v494
        %1497 = vst [vmem:[%s1437] ss:$9 sm:$0xff] %v497
        %1498 = vst [vmem:[%s1439] ss:$9 sm:$0xff] %v500
        %1499 = vst [vmem:[%s1441] ss:$9 sm:$0xff] %v503
        %1500 = vst [vmem:[%s1443] ss:$9 sm:$0xff] %v506
        %1501 = vst [vmem:[%s1445] ss:$9 sm:$0xff] %v509
        %1502 = vst [vmem:[%s1447] ss:$9 sm:$0xff] %v512
        %v1503 = vld [vmem:[#allocation1] sm:$0xff]
        %1504 = vst [vmem:[#allocation1] ss:$9 sm:$0xff] %v515
        %1505 = vst [vmem:[%s1435] ss:$9 sm:$0xff] %v518
        %1506 = vst [vmem:[%s1437] ss:$9 sm:$0xff] %v521
        %1507 = vst [vmem:[%s1439] ss:$9 sm:$0xff] %v524
        %1508 = vst [vmem:[%s1441] ss:$9 sm:$0xff] %v527
        %1509 = vst [vmem:[%s1443] ss:$9 sm:$0xff] %v530
        %1510 = vst [vmem:[%s1445] ss:$9 sm:$0xff] %v533
        %1511 = vst [vmem:[%s1447] ss:$9 sm:$0xff] %v536
        %v1512 = vld [vmem:[#allocation1] sm:$0xff]
        %1513 = vst [vmem:[#allocation1] ss:$9 sm:$0xff] %v539
        %1514 = vst [vmem:[%s1435] ss:$9 sm:$0xff] %v542
        %1515 = vst [vmem:[%s1437] ss:$9 sm:$0xff] %v545
        %1516 = vst [vmem:[%s1439] ss:$9 sm:$0xff] %v548
        %1517 = vst [vmem:[%s1441] ss:$9 sm:$0xff] %v551
        %1518 = vst [vmem:[%s1443] ss:$9 sm:$0xff] %v554
        %1519 = vst [vmem:[%s1445] ss:$9 sm:$0xff] %v557
        %1520 = vst [vmem:[%s1447] ss:$9 sm:$0xff] %v560
        %v1521 = vld [vmem:[#allocation1] sm:$0xff]
        %v1530 = vunpack.c.l.b16 %v561
        %v1531 = vunpack.c.l.b16 %v562
        %v1532 = vunpack.c.l.b16 %v563
        %v1533 = vunpack.c.l.b16 %v564
        %v1534 = vunpack.c.l.b16 %v565
        %v1535 = vunpack.c.l.b16 %v566
        %v1536 = vunpack.c.l.b16 %v567
        %v1537 = vunpack.c.l.b16 %v568
        %v1538 = vpack.c.b16 %v1531, %v1530
        %v1539 = vpack.c.b16 %v1533, %v1532
        %v1540 = vpack.c.b16 %v1535, %v1534
        %v1541 = vpack.c.b16 %v1537, %v1536
        %v1546 = vsel %vm1361, %v1449, 0
        %v1548 = vsel %vm1361, %v1458, 0
        %v1550 = vsel %vm1361, %v1467, 0
        %v1552 = vsel %vm1361, %v1476, 0
        %v1554 = vsel %vm1361, %v1485, 0
        %v1556 = vsel %vm1361, %v1494, 0
        %v1558 = vsel %vm1361, %v1503, 0
        %v1560 = vsel %vm1361, %v1512, 0
        %v1562 = vsel %vm1361, %v1521, 0
        %1564 = vmatpush.bf16.msra.mxu0 0
        %1565 = vmatpush.bf16.msra.mxu0 0
        %1566 = vmatpush.bf16.msra.mxu0 0
        %1567 = vmatpush.bf16.msra.mxu0 0
        %1568 = vmatpush.bf16.msra.mxu0 %v1541
        %1569 = vmatpush.bf16.msra.mxu0 %v1540
        %1570 = vmatpush.bf16.msra.mxu0 %v1539
        %1571 = vmatpush.bf16.msra.mxu0 %v1538
        %1572 = vmatmul.bf16.gmra.mxu0 %v1546
        %v1573 = vpop.f32.mrf.mxu0
        %v1574 = vadd.f32 %v1390, %v1573
        %v1575 = vpop.f32.mrf.mxu0
        %v1576 = vadd.f32 %v1392, %v1575
        %1577 = vmatmul.bf16.gmra.mxu0 %v1548
        %v1578 = vpop.f32.mrf.mxu0
        %v1579 = vadd.f32 %v1395, %v1578
        %v1580 = vpop.f32.mrf.mxu0
        %v1581 = vadd.f32 %v1397, %v1580
        %1582 = vmatmul.bf16.gmra.mxu0 %v1550
        %v1583 = vpop.f32.mrf.mxu0
        %v1584 = vadd.f32 %v1400, %v1583
        %v1585 = vpop.f32.mrf.mxu0
        %v1586 = vadd.f32 %v1402, %v1585
        %1587 = vmatmul.bf16.gmra.mxu0 %v1552
        %v1588 = vpop.f32.mrf.mxu0
        %v1589 = vadd.f32 %v1405, %v1588
        %v1590 = vpop.f32.mrf.mxu0
        %v1591 = vadd.f32 %v1407, %v1590
        %1592 = vmatmul.bf16.gmra.mxu0 %v1554
        %v1593 = vpop.f32.mrf.mxu0
        %v1594 = vadd.f32 %v1410, %v1593
        %v1595 = vpop.f32.mrf.mxu0
        %v1596 = vadd.f32 %v1412, %v1595
        %1597 = vmatmul.bf16.gmra.mxu0 %v1556
        %v1598 = vpop.f32.mrf.mxu0
        %v1599 = vadd.f32 %v1415, %v1598
        %v1600 = vpop.f32.mrf.mxu0
        %v1601 = vadd.f32 %v1417, %v1600
        %1602 = vmatmul.bf16.gmra.mxu0 %v1558
        %v1603 = vpop.f32.mrf.mxu0
        %v1604 = vadd.f32 %v1420, %v1603
        %v1605 = vpop.f32.mrf.mxu0
        %v1606 = vadd.f32 %v1422, %v1605
        %1607 = vmatmul.bf16.gmra.mxu0 %v1560
        %v1608 = vpop.f32.mrf.mxu0
        %v1609 = vadd.f32 %v1425, %v1608
        %v1610 = vpop.f32.mrf.mxu0
        %v1611 = vadd.f32 %v1427, %v1610
        %1612 = vmatmul.bf16.gmra.mxu0 %v1562
        %v1613 = vpop.f32.mrf.mxu0
        %v1614 = vadd.f32 %v1430, %v1613
        %v1615 = vpop.f32.mrf.mxu0
        %v1616 = vadd.f32 %v1432, %v1615
        %1617 = vdwg.mxu0
        %1618 = vst [vmem:[#allocation1] sm:$0xff] %v269
        %1619 = vst [vmem:[#allocation1 + $0x20] sm:$0xff] %v270
        %s1620 = scalar_lea.vmem [#allocation1], 1
        %v1621 = vld [vmem:[%s1620] ss:$4 sm:$0xff]
        %s1622 = scalar_lea.vmem [#allocation1], 2
        %v1623 = vld [vmem:[%s1622] ss:$4 sm:$0xff]
        %s1624 = scalar_lea.vmem [#allocation1], 3
        %v1625 = vld [vmem:[%s1624] ss:$4 sm:$0xff]
        %s1626 = scalar_lea.vmem [#allocation1], 32
        %v1627 = vld [vmem:[%s1626] ss:$4 sm:$0xff]
        %s1628 = scalar_lea.vmem [#allocation1], 33
        %v1629 = vld [vmem:[%s1628] ss:$4 sm:$0xff]
        %s1630 = scalar_lea.vmem [#allocation1], 34
        %v1631 = vld [vmem:[%s1630] ss:$4 sm:$0xff]
        %s1632 = scalar_lea.vmem [#allocation1], 35
        %v1633 = vld [vmem:[%s1632] ss:$4 sm:$0xff]
        %1634 = vst [vmem:[#allocation1] sm:$0xff] %v271
        %v1635 = vld [vmem:[#allocation1] ss:$4 sm:$0xff]
        %v1636 = vld [vmem:[%s1620] ss:$4 sm:$0xff]
        %1637 = vst [vmem:[#allocation1 + $0x20] sm:$0xff] %v272
        %v1638 = vld [vmem:[%s1628] ss:$4 sm:$0xff]
        %v1639 = vld [vmem:[%s1630] ss:$4 sm:$0xff]
        %v1640 = vld [vmem:[%s1632] ss:$4 sm:$0xff]
        %1641 = vst [vmem:[#allocation1] sm:$0xff] %v273
        %1642 = vst [vmem:[#allocation1 + $0x20] sm:$0xff] %v274
        %v1643 = vld [vmem:[#allocation1] ss:$4 sm:$0xff]
        %v1644 = vld [vmem:[%s1620] ss:$4 sm:$0xff]
        %v1645 = vld [vmem:[%s1622] ss:$4 sm:$0xff]
        %v1646 = vld [vmem:[%s1624] ss:$4 sm:$0xff]
        %v1647 = vld [vmem:[%s1626] ss:$4 sm:$0xff]
        %v1648 = vld [vmem:[%s1628] ss:$4 sm:$0xff]
        %1649 = vst [vmem:[#allocation1] sm:$0xff] %v275
        %1650 = vst [vmem:[#allocation1 + $0x20] sm:$0xff] %v276
        %v1651 = vld [vmem:[%s1620] ss:$4 sm:$0xff]
        %v1652 = vld [vmem:[%s1622] ss:$4 sm:$0xff]
        %v1653 = vld [vmem:[%s1624] ss:$4 sm:$0xff]
        %v1654 = vld [vmem:[%s1626] ss:$4 sm:$0xff]
        %v1655 = vld [vmem:[%s1628] ss:$4 sm:$0xff]
        %v1656 = vld [vmem:[%s1630] ss:$4 sm:$0xff]
        %v1657 = vld [vmem:[%s1632] ss:$4 sm:$0xff]
        %1658 = vst [vmem:[#allocation1] sm:$0xff] %v277
        %v1659 = vld [vmem:[#allocation1] ss:$4 sm:$0xff]
        %v1660 = vld [vmem:[%s1620] ss:$4 sm:$0xff]
        %1661 = vst [vmem:[#allocation1 + $0x20] sm:$0xff] %v278
        %v1662 = vld [vmem:[%s1628] ss:$4 sm:$0xff]
        %v1663 = vld [vmem:[%s1630] ss:$4 sm:$0xff]
        %v1664 = vld [vmem:[%s1632] ss:$4 sm:$0xff]
        %1665 = vst [vmem:[#allocation1] sm:$0xff] %v279
        %1666 = vst [vmem:[#allocation1 + $0x20] sm:$0xff] %v280
        %v1667 = vld [vmem:[#allocation1] ss:$4 sm:$0xff]
        %v1668 = vld [vmem:[%s1620] ss:$4 sm:$0xff]
        %v1669 = vld [vmem:[%s1622] ss:$4 sm:$0xff]
        %v1670 = vld [vmem:[%s1624] ss:$4 sm:$0xff]
        %v1671 = vld [vmem:[%s1626] ss:$4 sm:$0xff]
        %v1672 = vld [vmem:[%s1628] ss:$4 sm:$0xff]
        %1673 = vst [vmem:[#allocation1] sm:$0xff] %v281
        %1674 = vst [vmem:[#allocation1 + $0x20] sm:$0xff] %v282
        %v1675 = vld [vmem:[%s1620] ss:$4 sm:$0xff]
        %v1676 = vld [vmem:[%s1622] ss:$4 sm:$0xff]
        %v1677 = vld [vmem:[%s1624] ss:$4 sm:$0xff]
        %v1678 = vld [vmem:[%s1626] ss:$4 sm:$0xff]
        %v1679 = vld [vmem:[%s1628] ss:$4 sm:$0xff]
        %v1680 = vld [vmem:[%s1630] ss:$4 sm:$0xff]
        %v1681 = vld [vmem:[%s1632] ss:$4 sm:$0xff]
        %1682 = vst [vmem:[#allocation1] sm:$0xff] %v283
        %v1683 = vld [vmem:[#allocation1] ss:$4 sm:$0xff]
        %v1684 = vld [vmem:[%s1620] ss:$4 sm:$0xff]
        %1685 = vst [vmem:[#allocation1 + $0x20] sm:$0xff] %v284
        %v1686 = vld [vmem:[%s1628] ss:$4 sm:$0xff]
        %v1687 = vld [vmem:[%s1630] ss:$4 sm:$0xff]
        %v1688 = vld [vmem:[%s1632] ss:$4 sm:$0xff]
        %1689 = vst [vmem:[#allocation1] sm:$0xff] %v285
        %1690 = vst [vmem:[#allocation1 + $0x20] sm:$0xff] %v286
        %v1691 = vld [vmem:[#allocation1] ss:$4 sm:$0xff]
        %v1692 = vld [vmem:[%s1620] ss:$4 sm:$0xff]
        %v1693 = vld [vmem:[%s1622] ss:$4 sm:$0xff]
        %v1694 = vld [vmem:[%s1624] ss:$4 sm:$0xff]
        %v1695 = vld [vmem:[%s1626] ss:$4 sm:$0xff]
        %v1696 = vld [vmem:[%s1628] ss:$4 sm:$0xff]
        %1697 = vst [vmem:[#allocation1] sm:$0xff] %v287
        %1698 = vst [vmem:[#allocation1 + $0x20] sm:$0xff] %v288
        %v1699 = vld [vmem:[%s1620] ss:$4 sm:$0xff]
        %v1700 = vld [vmem:[%s1622] ss:$4 sm:$0xff]
        %v1701 = vld [vmem:[%s1624] ss:$4 sm:$0xff]
        %v1702 = vld [vmem:[%s1626] ss:$4 sm:$0xff]
        %v1703 = vld [vmem:[%s1628] ss:$4 sm:$0xff]
        %v1704 = vld [vmem:[%s1630] ss:$4 sm:$0xff]
        %v1705 = vld [vmem:[%s1632] ss:$4 sm:$0xff]
        %1706 = vst [vmem:[#allocation1] sm:$0xff] %v289
        %v1707 = vld [vmem:[#allocation1] ss:$4 sm:$0xff]
        %v1708 = vld [vmem:[%s1620] ss:$4 sm:$0xff]
        %1709 = vst [vmem:[#allocation1 + $0x20] sm:$0xff] %v290
        %v1710 = vld [vmem:[%s1628] ss:$4 sm:$0xff]
        %v1711 = vld [vmem:[%s1630] ss:$4 sm:$0xff]
        %v1712 = vld [vmem:[%s1632] ss:$4 sm:$0xff]
        %1713 = vst [vmem:[#allocation1] sm:$0xff] %v291
        %1714 = vst [vmem:[#allocation1 + $0x20] sm:$0xff] %v292
        %v1715 = vld [vmem:[#allocation1] ss:$4 sm:$0xff]
        %v1716 = vld [vmem:[%s1620] ss:$4 sm:$0xff]
        %v1717 = vld [vmem:[%s1622] ss:$4 sm:$0xff]
        %v1718 = vld [vmem:[%s1624] ss:$4 sm:$0xff]
        %v1719 = vld [vmem:[%s1626] ss:$4 sm:$0xff]
        %v1720 = vld [vmem:[%s1628] ss:$4 sm:$0xff]
        %s1721 = scalar_lea.vmem %s1, 64
        %v1722 = vld [vmem:[%s1721] sm:$0xf]
        %v1723 = vld [vmem:[%s1721 + $0x4] sm:$0xf]
        %v1724 = vld [vmem:[%s1721 + $0x8] sm:$0xf]
        %v1725 = vld [vmem:[%s1721 + $0xc] sm:$0xf]
        %v1726 = vld [vmem:[%s1721 + $0x10] sm:$0xf]
        %v1727 = vld [vmem:[%s1721 + $0x14] sm:$0xf]
        %v1728 = vld [vmem:[%s1721 + $0x18] sm:$0xf]
        %v1729 = vld [vmem:[%s1721 + $0x1c] sm:$0xf]
        %1730 = vst [vmem:[#allocation1] ss:$9 sm:$0xff] %v1621
        %s1731 = scalar_lea.vmem [#allocation1], 1
        %1732 = vst [vmem:[%s1731] ss:$9 sm:$0xff] %v1623
        %s1733 = scalar_lea.vmem [#allocation1], 2
        %1734 = vst [vmem:[%s1733] ss:$9 sm:$0xff] %v1625
        %s1735 = scalar_lea.vmem [#allocation1], 3
        %1736 = vst [vmem:[%s1735] ss:$9 sm:$0xff] %v1627
        %s1737 = scalar_lea.vmem [#allocation1], 4
        %1738 = vst [vmem:[%s1737] ss:$9 sm:$0xff] %v1629
        %s1739 = scalar_lea.vmem [#allocation1], 5
        %1740 = vst [vmem:[%s1739] ss:$9 sm:$0xff] %v1631
        %s1741 = scalar_lea.vmem [#allocation1], 6
        %1742 = vst [vmem:[%s1741] ss:$9 sm:$0xff] %v1633
        %s1743 = scalar_lea.vmem [#allocation1], 7
        %1744 = vst [vmem:[%s1743] ss:$9 sm:$0xff] %v1635
        %v1745 = vld [vmem:[#allocation1] sm:$0xff]
        %1746 = vst [vmem:[#allocation1] ss:$9 sm:$0xff] %v1636
        %1747 = vst [vmem:[%s1731] ss:$9 sm:$0xff] %v1638
        %1748 = vst [vmem:[%s1733] ss:$9 sm:$0xff] %v1639
        %1749 = vst [vmem:[%s1735] ss:$9 sm:$0xff] %v1640
        %1750 = vst [vmem:[%s1737] ss:$9 sm:$0xff] %v1643
        %1751 = vst [vmem:[%s1739] ss:$9 sm:$0xff] %v1644
        %1752 = vst [vmem:[%s1741] ss:$9 sm:$0xff] %v1645
        %1753 = vst [vmem:[%s1743] ss:$9 sm:$0xff] %v1646
        %v1754 = vld [vmem:[#allocation1] sm:$0xff]
        %1755 = vst [vmem:[#allocation1] ss:$9 sm:$0xff] %v1647
        %1756 = vst [vmem:[%s1731] ss:$9 sm:$0xff] %v1648
        %1757 = vst [vmem:[%s1733] ss:$9 sm:$0xff] %v1651
        %1758 = vst [vmem:[%s1735] ss:$9 sm:$0xff] %v1652
        %1759 = vst [vmem:[%s1737] ss:$9 sm:$0xff] %v1653
        %1760 = vst [vmem:[%s1739] ss:$9 sm:$0xff] %v1654
        %1761 = vst [vmem:[%s1741] ss:$9 sm:$0xff] %v1655
        %1762 = vst [vmem:[%s1743] ss:$9 sm:$0xff] %v1656
        %v1763 = vld [vmem:[#allocation1] sm:$0xff]
        %1764 = vst [vmem:[#allocation1] ss:$9 sm:$0xff] %v1657
        %1765 = vst [vmem:[%s1731] ss:$9 sm:$0xff] %v1659
        %1766 = vst [vmem:[%s1733] ss:$9 sm:$0xff] %v1660
        %1767 = vst [vmem:[%s1735] ss:$9 sm:$0xff] %v1662
        %1768 = vst [vmem:[%s1737] ss:$9 sm:$0xff] %v1663
        %1769 = vst [vmem:[%s1739] ss:$9 sm:$0xff] %v1664
        %1770 = vst [vmem:[%s1741] ss:$9 sm:$0xff] %v1667
        %1771 = vst [vmem:[%s1743] ss:$9 sm:$0xff] %v1668
        %v1772 = vld [vmem:[#allocation1] sm:$0xff]
        %1773 = vst [vmem:[#allocation1] ss:$9 sm:$0xff] %v1669
        %1774 = vst [vmem:[%s1731] ss:$9 sm:$0xff] %v1670
        %1775 = vst [vmem:[%s1733] ss:$9 sm:$0xff] %v1671
        %1776 = vst [vmem:[%s1735] ss:$9 sm:$0xff] %v1672
        %1777 = vst [vmem:[%s1737] ss:$9 sm:$0xff] %v1675
        %1778 = vst [vmem:[%s1739] ss:$9 sm:$0xff] %v1676
        %1779 = vst [vmem:[%s1741] ss:$9 sm:$0xff] %v1677
        %1780 = vst [vmem:[%s1743] ss:$9 sm:$0xff] %v1678
        %v1781 = vld [vmem:[#allocation1] sm:$0xff]
        %1782 = vst [vmem:[#allocation1] ss:$9 sm:$0xff] %v1679
        %1783 = vst [vmem:[%s1731] ss:$9 sm:$0xff] %v1680
        %1784 = vst [vmem:[%s1733] ss:$9 sm:$0xff] %v1681
        %1785 = vst [vmem:[%s1735] ss:$9 sm:$0xff] %v1683
        %1786 = vst [vmem:[%s1737] ss:$9 sm:$0xff] %v1684
        %1787 = vst [vmem:[%s1739] ss:$9 sm:$0xff] %v1686
        %1788 = vst [vmem:[%s1741] ss:$9 sm:$0xff] %v1687
        %1789 = vst [vmem:[%s1743] ss:$9 sm:$0xff] %v1688
        %v1790 = vld [vmem:[#allocation1] sm:$0xff]
        %1791 = vst [vmem:[#allocation1] ss:$9 sm:$0xff] %v1691
        %1792 = vst [vmem:[%s1731] ss:$9 sm:$0xff] %v1692
        %1793 = vst [vmem:[%s1733] ss:$9 sm:$0xff] %v1693
        %1794 = vst [vmem:[%s1735] ss:$9 sm:$0xff] %v1694
        %1795 = vst [vmem:[%s1737] ss:$9 sm:$0xff] %v1695
        %1796 = vst [vmem:[%s1739] ss:$9 sm:$0xff] %v1696
        %1797 = vst [vmem:[%s1741] ss:$9 sm:$0xff] %v1699
        %1798 = vst [vmem:[%s1743] ss:$9 sm:$0xff] %v1700
        %v1799 = vld [vmem:[#allocation1] sm:$0xff]
        %1800 = vst [vmem:[#allocation1] ss:$9 sm:$0xff] %v1701
        %1801 = vst [vmem:[%s1731] ss:$9 sm:$0xff] %v1702
        %1802 = vst [vmem:[%s1733] ss:$9 sm:$0xff] %v1703
        %1803 = vst [vmem:[%s1735] ss:$9 sm:$0xff] %v1704
        %1804 = vst [vmem:[%s1737] ss:$9 sm:$0xff] %v1705
        %1805 = vst [vmem:[%s1739] ss:$9 sm:$0xff] %v1707
        %1806 = vst [vmem:[%s1741] ss:$9 sm:$0xff] %v1708
        %1807 = vst [vmem:[%s1743] ss:$9 sm:$0xff] %v1710
        %v1808 = vld [vmem:[#allocation1] sm:$0xff]
        %1809 = vst [vmem:[#allocation1] ss:$9 sm:$0xff] %v1711
        %1810 = vst [vmem:[%s1731] ss:$9 sm:$0xff] %v1712
        %1811 = vst [vmem:[%s1733] ss:$9 sm:$0xff] %v1715
        %1812 = vst [vmem:[%s1735] ss:$9 sm:$0xff] %v1716
        %1813 = vst [vmem:[%s1737] ss:$9 sm:$0xff] %v1717
        %1814 = vst [vmem:[%s1739] ss:$9 sm:$0xff] %v1718
        %1815 = vst [vmem:[%s1741] ss:$9 sm:$0xff] %v1719
        %1816 = vst [vmem:[%s1743] ss:$9 sm:$0xff] %v1720
        %v1817 = vld [vmem:[#allocation1] sm:$0xff]
        %v1826 = vunpack.c.l.b16 %v1722
        %v1827 = vunpack.c.l.b16 %v1723
        %v1828 = vunpack.c.l.b16 %v1724
        %v1829 = vunpack.c.l.b16 %v1725
        %v1830 = vunpack.c.l.b16 %v1726
        %v1831 = vunpack.c.l.b16 %v1727
        %v1832 = vunpack.c.l.b16 %v1728
        %v1833 = vunpack.c.l.b16 %v1729
        %v1834 = vpack.c.b16 %v1827, %v1826
        %v1835 = vpack.c.b16 %v1829, %v1828
        %v1836 = vpack.c.b16 %v1831, %v1830
        %v1837 = vpack.c.b16 %v1833, %v1832
        %v1842 = vsel %vm1361, %v1745, 0
        %v1844 = vsel %vm1361, %v1754, 0
        %v1846 = vsel %vm1361, %v1763, 0
        %v1848 = vsel %vm1361, %v1772, 0
        %v1850 = vsel %vm1361, %v1781, 0
        %v1852 = vsel %vm1361, %v1790, 0
        %v1854 = vsel %vm1361, %v1799, 0
        %v1856 = vsel %vm1361, %v1808, 0
        %v1858 = vsel %vm1361, %v1817, 0
        %1860 = vmatpush.bf16.msra.mxu0 0
        %1861 = vmatpush.bf16.msra.mxu0 0
        %1862 = vmatpush.bf16.msra.mxu0 0
        %1863 = vmatpush.bf16.msra.mxu0 0
        %1864 = vmatpush.bf16.msra.mxu0 %v1837
        %1865 = vmatpush.bf16.msra.mxu0 %v1836
        %1866 = vmatpush.bf16.msra.mxu0 %v1835
        %1867 = vmatpush.bf16.msra.mxu0 %v1834
        %1868 = vmatmul.bf16.gmra.mxu0 %v1842
        %v1869 = vpop.f32.mrf.mxu0
        %v1870 = vadd.f32 0.0, %v1869
        %v1871 = vpop.f32.mrf.mxu0
        %v1872 = vadd.f32 0.0, %v1871
        %1873 = vmatmul.bf16.gmra.mxu0 %v1844
        %v1874 = vpop.f32.mrf.mxu0
        %v1875 = vadd.f32 0.0, %v1874
        %v1876 = vpop.f32.mrf.mxu0
        %v1877 = vadd.f32 0.0, %v1876
        %1878 = vmatmul.bf16.gmra.mxu0 %v1846
        %v1879 = vpop.f32.mrf.mxu0
        %v1880 = vadd.f32 0.0, %v1879
        %v1881 = vpop.f32.mrf.mxu0
        %v1882 = vadd.f32 0.0, %v1881
        %1883 = vmatmul.bf16.gmra.mxu0 %v1848
        %v1884 = vpop.f32.mrf.mxu0
        %v1885 = vadd.f32 0.0, %v1884
        %v1886 = vpop.f32.mrf.mxu0
        %v1887 = vadd.f32 0.0, %v1886
        %1888 = vmatmul.bf16.gmra.mxu0 %v1850
        %v1889 = vpop.f32.mrf.mxu0
        %v1890 = vadd.f32 0.0, %v1889
        %v1891 = vpop.f32.mrf.mxu0
        %v1892 = vadd.f32 0.0, %v1891
        %1893 = vmatmul.bf16.gmra.mxu0 %v1852
        %v1894 = vpop.f32.mrf.mxu0
        %v1895 = vadd.f32 0.0, %v1894
        %v1896 = vpop.f32.mrf.mxu0
        %v1897 = vadd.f32 0.0, %v1896
        %1898 = vmatmul.bf16.gmra.mxu0 %v1854
        %v1899 = vpop.f32.mrf.mxu0
        %v1900 = vadd.f32 0.0, %v1899
        %v1901 = vpop.f32.mrf.mxu0
        %v1902 = vadd.f32 0.0, %v1901
        %1903 = vmatmul.bf16.gmra.mxu0 %v1856
        %v1904 = vpop.f32.mrf.mxu0
        %v1905 = vadd.f32 0.0, %v1904
        %v1906 = vpop.f32.mrf.mxu0
        %v1907 = vadd.f32 0.0, %v1906
        %1908 = vmatmul.bf16.gmra.mxu0 %v1858
        %v1909 = vpop.f32.mrf.mxu0
        %v1910 = vadd.f32 0.0, %v1909
        %v1911 = vpop.f32.mrf.mxu0
        %v1912 = vadd.f32 0.0, %v1911
        %1913 = vdwg.mxu0
        %v1914 = vadd.f32 %v1574, %v1870
        %v1915 = vadd.f32 %v1576, %v1872
        %v1916 = vadd.f32 %v1579, %v1875
        %v1917 = vadd.f32 %v1581, %v1877
        %v1918 = vadd.f32 %v1584, %v1880
        %v1919 = vadd.f32 %v1586, %v1882
        %v1920 = vadd.f32 %v1589, %v1885
        %v1921 = vadd.f32 %v1591, %v1887
        %v1922 = vadd.f32 %v1594, %v1890
        %v1923 = vadd.f32 %v1596, %v1892
        %v1924 = vadd.f32 %v1599, %v1895
        %v1925 = vadd.f32 %v1601, %v1897
        %v1926 = vadd.f32 %v1604, %v1900
        %v1927 = vadd.f32 %v1606, %v1902
        %v1928 = vadd.f32 %v1609, %v1905
        %v1929 = vadd.f32 %v1611, %v1907
        %v1930 = vadd.f32 %v1614, %v1910
        %v1931 = vadd.f32 %v1616, %v1912
        %v1950 = vrot.slane %v1914, 2
        %v1951 = vrot.slane %v1914, 4
        %v1952 = vrot.slane %v1914, 6
        %v1953 = vrot.slane %v1915, 2
        %v1954 = vrot.slane %v1915, 4
        %v1955 = vrot.slane %v1915, 6
        %v1956 = vrot.slane %v1916, 2
        %v1957 = vrot.slane %v1916, 4
        %v1958 = vrot.slane %v1916, 6
        %v1959 = vrot.slane %v1917, 2
        %v1960 = vrot.slane %v1917, 4
        %v1961 = vrot.slane %v1917, 6
        %v1962 = vrot.slane %v1918, 2
        %v1963 = vrot.slane %v1918, 4
        %v1964 = vrot.slane %v1918, 6
        %v1965 = vrot.slane %v1919, 2
        %v1966 = vrot.slane %v1919, 4
        %v1967 = vrot.slane %v1919, 6
        %v1968 = vrot.slane %v1920, 2
        %v1969 = vrot.slane %v1920, 4
        %v1970 = vrot.slane %v1920, 6
        %v1971 = vrot.slane %v1921, 2
        %v1972 = vrot.slane %v1921, 4
        %v1973 = vrot.slane %v1921, 6
        %v1974 = vrot.slane %v1922, 2
        %v1975 = vrot.slane %v1922, 4
        %v1976 = vrot.slane %v1922, 6
        %v1977 = vrot.slane %v1923, 2
        %v1978 = vrot.slane %v1923, 4
        %v1979 = vrot.slane %v1923, 6
        %v1980 = vrot.slane %v1924, 2
        %v1981 = vrot.slane %v1924, 4
        %v1982 = vrot.slane %v1924, 6
        %v1983 = vrot.slane %v1925, 2
        %v1984 = vrot.slane %v1925, 4
        %v1985 = vrot.slane %v1925, 6
        %v1986 = vrot.slane %v1926, 2
        %v1987 = vrot.slane %v1926, 4
        %v1988 = vrot.slane %v1926, 6
        %v1989 = vrot.slane %v1927, 2
        %v1990 = vrot.slane %v1927, 4
        %v1991 = vrot.slane %v1927, 6
        %v1992 = vrot.slane %v1928, 2
        %v1993 = vrot.slane %v1928, 4
        %v1994 = vrot.slane %v1928, 6
        %v1995 = vrot.slane %v1929, 2
        %v1996 = vrot.slane %v1929, 4
        %v1997 = vrot.slane %v1929, 6
        %v1998 = vrot.slane %v1930, 2
        %v1999 = vrot.slane %v1930, 4
        %v2000 = vrot.slane %v1930, 6
        %v2001 = vrot.slane %v1931, 2
        %v2002 = vrot.slane %v1931, 4
        %v2003 = vrot.slane %v1931, 6
        %v2058 = vld [vmem:[%s2] sm:$0x1]
        %v2060 = vperm.slane %v2058, 0
        %v2062 = vrot.slane %v2060, 2
        %v2063 = vrot.slane %v2060, 4
        %v2064 = vrot.slane %v2060, 6
        %v2068 = vadd.f32 %v1914, %v2060
        %v2069 = vadd.f32 %v1950, %v2062
        %v2070 = vadd.f32 %v1951, %v2063
        %v2071 = vadd.f32 %v1952, %v2064
        %v2072 = vadd.f32 %v1915, %v2060
        %v2073 = vadd.f32 %v1953, %v2062
        %v2074 = vadd.f32 %v1954, %v2063
        %v2075 = vadd.f32 %v1955, %v2064
        %v2076 = vadd.f32 %v1916, %v2060
        %v2077 = vadd.f32 %v1956, %v2060
        %v2078 = vadd.f32 %v1957, %v2062
        %v2079 = vadd.f32 %v1958, %v2063
        %v2080 = vadd.f32 %v1917, %v2064
        %v2081 = vadd.f32 %v1959, %v2060
        %v2082 = vadd.f32 %v1960, %v2062
        %v2083 = vadd.f32 %v1961, %v2063
        %v2084 = vadd.f32 %v1918, %v2064
        %v2085 = vadd.f32 %v1962, %v2060
        %v2086 = vadd.f32 %v1963, %v2060
        %v2087 = vadd.f32 %v1964, %v2062
        %v2088 = vadd.f32 %v1919, %v2063
        %v2089 = vadd.f32 %v1965, %v2064
        %v2090 = vadd.f32 %v1966, %v2060
        %v2091 = vadd.f32 %v1967, %v2062
        %v2092 = vadd.f32 %v1920, %v2063
        %v2093 = vadd.f32 %v1968, %v2064
        %v2094 = vadd.f32 %v1969, %v2060
        %v2095 = vadd.f32 %v1970, %v2060
        %v2096 = vadd.f32 %v1921, %v2062
        %v2097 = vadd.f32 %v1971, %v2063
        %v2098 = vadd.f32 %v1972, %v2064
        %v2099 = vadd.f32 %v1973, %v2060
        %v2100 = vadd.f32 %v1922, %v2062
        %v2101 = vadd.f32 %v1974, %v2063
        %v2102 = vadd.f32 %v1975, %v2064
        %v2103 = vadd.f32 %v1976, %v2060
        %v2104 = vadd.f32 %v1923, %v2060
        %v2105 = vadd.f32 %v1977, %v2062
        %v2106 = vadd.f32 %v1978, %v2063
        %v2107 = vadd.f32 %v1979, %v2064
        %v2108 = vadd.f32 %v1924, %v2060
        %v2109 = vadd.f32 %v1980, %v2062
        %v2110 = vadd.f32 %v1981, %v2063
        %v2111 = vadd.f32 %v1982, %v2064
        %v2112 = vadd.f32 %v1925, %v2060
        %v2113 = vadd.f32 %v1983, %v2060
        %v2114 = vadd.f32 %v1984, %v2062
        %v2115 = vadd.f32 %v1985, %v2063
        %v2116 = vadd.f32 %v1926, %v2064
        %v2117 = vadd.f32 %v1986, %v2060
        %v2118 = vadd.f32 %v1987, %v2062
        %v2119 = vadd.f32 %v1988, %v2063
        %v2120 = vadd.f32 %v1927, %v2064
        %v2121 = vadd.f32 %v1989, %v2060
        %v2122 = vadd.f32 %v1990, %v2060
        %v2123 = vadd.f32 %v1991, %v2062
        %v2124 = vadd.f32 %v1928, %v2063
        %v2125 = vadd.f32 %v1992, %v2064
        %v2126 = vadd.f32 %v1993, %v2060
        %v2127 = vadd.f32 %v1994, %v2062
        %v2128 = vadd.f32 %v1929, %v2063
        %v2129 = vadd.f32 %v1995, %v2064
        %v2130 = vadd.f32 %v1996, %v2060
        %v2131 = vadd.f32 %v1997, %v2060
        %v2132 = vadd.f32 %v1930, %v2062
        %v2133 = vadd.f32 %v1998, %v2063
        %v2134 = vadd.f32 %v1999, %v2064
        %v2135 = vadd.f32 %v2000, %v2060
        %v2136 = vadd.f32 %v1931, %v2062
        %v2137 = vadd.f32 %v2001, %v2063
        %v2138 = vadd.f32 %v2002, %v2064
        %v2139 = vadd.f32 %v2003, %v2060
        %v2140 = vmax.f32 %v2068, 0.0
        %v2141 = vmax.f32 %v2069, 0.0
        %v2142 = vmax.f32 %v2070, 0.0
        %v2143 = vmax.f32 %v2071, 0.0
        %v2144 = vmax.f32 %v2072, 0.0
        %v2145 = vmax.f32 %v2073, 0.0
        %v2146 = vmax.f32 %v2074, 0.0
        %v2147 = vmax.f32 %v2075, 0.0
        %v2148 = vmax.f32 %v2076, 0.0
        %v2149 = vmax.f32 %v2077, 0.0
        %v2150 = vmax.f32 %v2078, 0.0
        %v2151 = vmax.f32 %v2079, 0.0
        %v2152 = vmax.f32 %v2080, 0.0
        %v2153 = vmax.f32 %v2081, 0.0
        %v2154 = vmax.f32 %v2082, 0.0
        %v2155 = vmax.f32 %v2083, 0.0
        %v2156 = vmax.f32 %v2084, 0.0
        %v2157 = vmax.f32 %v2085, 0.0
        %v2158 = vmax.f32 %v2086, 0.0
        %v2159 = vmax.f32 %v2087, 0.0
        %v2160 = vmax.f32 %v2088, 0.0
        %v2161 = vmax.f32 %v2089, 0.0
        %v2162 = vmax.f32 %v2090, 0.0
        %v2163 = vmax.f32 %v2091, 0.0
        %v2164 = vmax.f32 %v2092, 0.0
        %v2165 = vmax.f32 %v2093, 0.0
        %v2166 = vmax.f32 %v2094, 0.0
        %v2167 = vmax.f32 %v2095, 0.0
        %v2168 = vmax.f32 %v2096, 0.0
        %v2169 = vmax.f32 %v2097, 0.0
        %v2170 = vmax.f32 %v2098, 0.0
        %v2171 = vmax.f32 %v2099, 0.0
        %v2172 = vmax.f32 %v2100, 0.0
        %v2173 = vmax.f32 %v2101, 0.0
        %v2174 = vmax.f32 %v2102, 0.0
        %v2175 = vmax.f32 %v2103, 0.0
        %v2176 = vmax.f32 %v2104, 0.0
        %v2177 = vmax.f32 %v2105, 0.0
        %v2178 = vmax.f32 %v2106, 0.0
        %v2179 = vmax.f32 %v2107, 0.0
        %v2180 = vmax.f32 %v2108, 0.0
        %v2181 = vmax.f32 %v2109, 0.0
        %v2182 = vmax.f32 %v2110, 0.0
        %v2183 = vmax.f32 %v2111, 0.0
        %v2184 = vmax.f32 %v2112, 0.0
        %v2185 = vmax.f32 %v2113, 0.0
        %v2186 = vmax.f32 %v2114, 0.0
        %v2187 = vmax.f32 %v2115, 0.0
        %v2188 = vmax.f32 %v2116, 0.0
        %v2189 = vmax.f32 %v2117, 0.0
        %v2190 = vmax.f32 %v2118, 0.0
        %v2191 = vmax.f32 %v2119, 0.0
        %v2192 = vmax.f32 %v2120, 0.0
        %v2193 = vmax.f32 %v2121, 0.0
        %v2194 = vmax.f32 %v2122, 0.0
        %v2195 = vmax.f32 %v2123, 0.0
        %v2196 = vmax.f32 %v2124, 0.0
        %v2197 = vmax.f32 %v2125, 0.0
        %v2198 = vmax.f32 %v2126, 0.0
        %v2199 = vmax.f32 %v2127, 0.0
        %v2200 = vmax.f32 %v2128, 0.0
        %v2201 = vmax.f32 %v2129, 0.0
        %v2202 = vmax.f32 %v2130, 0.0
        %v2203 = vmax.f32 %v2131, 0.0
        %v2204 = vmax.f32 %v2132, 0.0
        %v2205 = vmax.f32 %v2133, 0.0
        %v2206 = vmax.f32 %v2134, 0.0
        %v2207 = vmax.f32 %v2135, 0.0
        %v2208 = vmax.f32 %v2136, 0.0
        %v2209 = vmax.f32 %v2137, 0.0
        %v2210 = vmax.f32 %v2138, 0.0
        %v2211 = vmax.f32 %v2139, 0.0
        %v2212 = vlaneseq
        %v2213 = vshrl.u32 %v2212, 7
        %v2214 = vadd.s32 %v2213, 8
        %v2215 = vadd.s32 %v2213, 16
        %vm2216 = vcmp.ge.s32.totalorder %v2213, 1
        %vm2217 = vcmp.ge.s32.totalorder %v2214, 1
        %vm2218 = vcmp.ge.s32.totalorder %v2215, 1
        %vm2219 = vcmp.le.s32.totalorder %v2213, 16
        %vm2220 = vcmp.le.s32.totalorder %v2214, 16
        %vm2221 = vcmp.le.s32.totalorder %v2215, 16
        %vm2222 = vmand %vm2216, %vm2219
        %vm2223 = vmand %vm2217, %vm2220
        %vm2224 = vmand %vm2218, %vm2221
        %2297 = vst [vmem:[#allocation1] ss:$4 sm:$0xff] %v2140
        %s2298 = scalar_lea.vmem [#allocation1], 1
        %2299 = vst [vmem:[%s2298] ss:$4 sm:$0xff] %v2141
        %s2300 = scalar_lea.vmem [#allocation1], 2
        %2301 = vst [vmem:[%s2300] ss:$4 sm:$0xff] %v2142
        %s2302 = scalar_lea.vmem [#allocation1], 3
        %2303 = vst [vmem:[%s2302] ss:$4 sm:$0xff] %v2143
        %s2304 = scalar_lea.vmem [#allocation1], 32
        %2305 = vst [vmem:[%s2304] ss:$4 sm:$0xff] %v2144
        %s2306 = scalar_lea.vmem [#allocation1], 33
        %2307 = vst [vmem:[%s2306] ss:$4 sm:$0xff] %v2145
        %s2308 = scalar_lea.vmem [#allocation1], 34
        %2309 = vst [vmem:[%s2308] ss:$4 sm:$0xff] %v2146
        %s2310 = scalar_lea.vmem [#allocation1], 35
        %2311 = vst [vmem:[%s2310] ss:$4 sm:$0xff] %v2147
        %v2312 = vld.sshfl [vmem:[#allocation1] sm:$0xff pattern:$0x73625140]
        %v2313 = vld.sshfl [vmem:[#allocation1 + $0x20] sm:$0xff pattern:$0x73625140]
        %2314 = vst [vmem:[#allocation1] ss:$4 sm:$0xff] %v2148
        %v2315 = vld.sshfl [vmem:[#allocation1] sm:$0xff pattern:$0x73625140]
        %2316 = vst [vmem:[%s2304] ss:$4 sm:$0xff] %v2149
        %2317 = vst [vmem:[%s2306] ss:$4 sm:$0xff] %v2150
        %2318 = vst [vmem:[%s2308] ss:$4 sm:$0xff] %v2151
        %2319 = vst [vmem:[%s2310] ss:$4 sm:$0xff] %v2152
        %v2320 = vld.sshfl [vmem:[#allocation1 + $0x20] sm:$0xff pattern:$0x73625140]
        %2321 = vst [vmem:[#allocation1] ss:$4 sm:$0xff] %v2153
        %2322 = vst [vmem:[%s2298] ss:$4 sm:$0xff] %v2154
        %2323 = vst [vmem:[%s2300] ss:$4 sm:$0xff] %v2155
        %2324 = vst [vmem:[%s2302] ss:$4 sm:$0xff] %v2156
        %2325 = vst [vmem:[%s2304] ss:$4 sm:$0xff] %v2157
        %v2326 = vld.sshfl [vmem:[#allocation1] sm:$0xff pattern:$0x73625140]
        %v2327 = vld.sshfl [vmem:[#allocation1 + $0x20] sm:$0xff pattern:$0x73625140]
        %2328 = vst [vmem:[#allocation1] ss:$4 sm:$0xff] %v2158
        %2329 = vst [vmem:[%s2298] ss:$4 sm:$0xff] %v2159
        %2330 = vst [vmem:[%s2300] ss:$4 sm:$0xff] %v2160
        %2331 = vst [vmem:[%s2302] ss:$4 sm:$0xff] %v2161
        %2332 = vst [vmem:[%s2304] ss:$4 sm:$0xff] %v2162
        %2333 = vst [vmem:[%s2306] ss:$4 sm:$0xff] %v2163
        %2334 = vst [vmem:[%s2308] ss:$4 sm:$0xff] %v2164
        %2335 = vst [vmem:[%s2310] ss:$4 sm:$0xff] %v2165
        %v2336 = vld.sshfl [vmem:[#allocation1] sm:$0xff pattern:$0x73625140]
        %v2337 = vld.sshfl [vmem:[#allocation1 + $0x20] sm:$0xff pattern:$0x73625140]
        %2338 = vst [vmem:[#allocation1] ss:$4 sm:$0xff] %v2166
        %v2339 = vld.sshfl [vmem:[#allocation1] sm:$0xff pattern:$0x73625140]
        %2340 = vst [vmem:[%s2304] ss:$4 sm:$0xff] %v2167
        %2341 = vst [vmem:[%s2306] ss:$4 sm:$0xff] %v2168
        %2342 = vst [vmem:[%s2308] ss:$4 sm:$0xff] %v2169
        %2343 = vst [vmem:[%s2310] ss:$4 sm:$0xff] %v2170
        %v2344 = vld.sshfl [vmem:[#allocation1 + $0x20] sm:$0xff pattern:$0x73625140]
        %2345 = vst [vmem:[#allocation1] ss:$4 sm:$0xff] %v2171
        %2346 = vst [vmem:[%s2298] ss:$4 sm:$0xff] %v2172
        %2347 = vst [vmem:[%s2300] ss:$4 sm:$0xff] %v2173
        %2348 = vst [vmem:[%s2302] ss:$4 sm:$0xff] %v2174
        %2349 = vst [vmem:[%s2304] ss:$4 sm:$0xff] %v2175
        %v2350 = vld.sshfl [vmem:[#allocation1] sm:$0xff pattern:$0x73625140]
        %v2351 = vld.sshfl [vmem:[#allocation1 + $0x20] sm:$0xff pattern:$0x73625140]
        %2352 = vst [vmem:[#allocation1] ss:$4 sm:$0xff] %v2176
        %2353 = vst [vmem:[%s2298] ss:$4 sm:$0xff] %v2177
        %2354 = vst [vmem:[%s2300] ss:$4 sm:$0xff] %v2178
        %2355 = vst [vmem:[%s2302] ss:$4 sm:$0xff] %v2179
        %2356 = vst [vmem:[%s2304] ss:$4 sm:$0xff] %v2180
        %2357 = vst [vmem:[%s2306] ss:$4 sm:$0xff] %v2181
        %2358 = vst [vmem:[%s2308] ss:$4 sm:$0xff] %v2182
        %2359 = vst [vmem:[%s2310] ss:$4 sm:$0xff] %v2183
        %v2360 = vld.sshfl [vmem:[#allocation1] sm:$0xff pattern:$0x73625140]
        %v2361 = vld.sshfl [vmem:[#allocation1 + $0x20] sm:$0xff pattern:$0x73625140]
        %2362 = vst [vmem:[#allocation1] ss:$4 sm:$0xff] %v2184
        %v2363 = vld.sshfl [vmem:[#allocation1] sm:$0xff pattern:$0x73625140]
        %2364 = vst [vmem:[%s2304] ss:$4 sm:$0xff] %v2185
        %2365 = vst [vmem:[%s2306] ss:$4 sm:$0xff] %v2186
        %2366 = vst [vmem:[%s2308] ss:$4 sm:$0xff] %v2187
        %2367 = vst [vmem:[%s2310] ss:$4 sm:$0xff] %v2188
        %v2368 = vld.sshfl [vmem:[#allocation1 + $0x20] sm:$0xff pattern:$0x73625140]
        %2369 = vst [vmem:[#allocation1] ss:$4 sm:$0xff] %v2189
        %2370 = vst [vmem:[%s2298] ss:$4 sm:$0xff] %v2190
        %2371 = vst [vmem:[%s2300] ss:$4 sm:$0xff] %v2191
        %2372 = vst [vmem:[%s2302] ss:$4 sm:$0xff] %v2192
        %2373 = vst [vmem:[%s2304] ss:$4 sm:$0xff] %v2193
        %v2374 = vld.sshfl [vmem:[#allocation1] sm:$0xff pattern:$0x73625140]
        %v2375 = vld.sshfl [vmem:[#allocation1 + $0x20] sm:$0xff pattern:$0x73625140]
        %2376 = vst [vmem:[#allocation1] ss:$4 sm:$0xff] %v2194
        %2377 = vst [vmem:[%s2298] ss:$4 sm:$0xff] %v2195
        %2378 = vst [vmem:[%s2300] ss:$4 sm:$0xff] %v2196
        %2379 = vst [vmem:[%s2302] ss:$4 sm:$0xff] %v2197
        %2380 = vst [vmem:[%s2304] ss:$4 sm:$0xff] %v2198
        %2381 = vst [vmem:[%s2306] ss:$4 sm:$0xff] %v2199
        %2382 = vst [vmem:[%s2308] ss:$4 sm:$0xff] %v2200
        %2383 = vst [vmem:[%s2310] ss:$4 sm:$0xff] %v2201
        %v2384 = vld.sshfl [vmem:[#allocation1] sm:$0xff pattern:$0x73625140]
        %v2385 = vld.sshfl [vmem:[#allocation1 + $0x20] sm:$0xff pattern:$0x73625140]
        %2386 = vst [vmem:[#allocation1] ss:$4 sm:$0xff] %v2202
        %v2387 = vld.sshfl [vmem:[#allocation1] sm:$0xff pattern:$0x73625140]
        %2388 = vst [vmem:[%s2304] ss:$4 sm:$0xff] %v2203
        %2389 = vst [vmem:[%s2306] ss:$4 sm:$0xff] %v2204
        %2390 = vst [vmem:[%s2308] ss:$4 sm:$0xff] %v2205
        %2391 = vst [vmem:[%s2310] ss:$4 sm:$0xff] %v2206
        %v2392 = vld.sshfl [vmem:[#allocation1 + $0x20] sm:$0xff pattern:$0x73625140]
        %2393 = vst [vmem:[#allocation1] ss:$4 sm:$0xff] %v2207
        %2394 = vst [vmem:[%s2298] ss:$4 sm:$0xff] %v2208
        %2395 = vst [vmem:[%s2300] ss:$4 sm:$0xff] %v2209
        %2396 = vst [vmem:[%s2302] ss:$4 sm:$0xff] %v2210
        %2397 = vst [vmem:[%s2304] ss:$4 sm:$0xff] %v2211
        %v2398 = vld.sshfl [vmem:[#allocation1] sm:$0xff pattern:$0x73625140]
        %v2399 = vld.sshfl [vmem:[#allocation1 + $0x20] sm:$0xff pattern:$0x73625140]
        %v2424 = vsel %vm2222, %v2312, 0.0
        %v2425 = vsel %vm2223, %v2313, 0.0
        %v2426 = vsel %vm2224, %v2315, 0.0
        %v2427 = vsel %vm2222, %v2320, 0.0
        %v2428 = vsel %vm2223, %v2326, 0.0
        %v2429 = vsel %vm2224, %v2327, 0.0
        %v2430 = vsel %vm2222, %v2336, 0.0
        %v2431 = vsel %vm2223, %v2337, 0.0
        %v2432 = vsel %vm2224, %v2339, 0.0
        %v2433 = vsel %vm2222, %v2344, 0.0
        %v2434 = vsel %vm2223, %v2350, 0.0
        %v2435 = vsel %vm2224, %v2351, 0.0
        %v2436 = vsel %vm2222, %v2360, 0.0
        %v2437 = vsel %vm2223, %v2361, 0.0
        %v2438 = vsel %vm2224, %v2363, 0.0
        %v2439 = vsel %vm2222, %v2368, 0.0
        %v2440 = vsel %vm2223, %v2374, 0.0
        %v2441 = vsel %vm2224, %v2375, 0.0
        %v2442 = vsel %vm2222, %v2384, 0.0
        %v2443 = vsel %vm2223, %v2385, 0.0
        %v2444 = vsel %vm2224, %v2387, 0.0
        %v2445 = vsel %vm2222, %v2392, 0.0
        %v2446 = vsel %vm2223, %v2398, 0.0
        %v2447 = vsel %vm2224, %v2399, 0.0
        %v2448 = vpack.c.bf16 %v2424, %v2424
        %v2449 = vpack.c.bf16 %v2425, %v2425
        %v2450 = vpack.c.bf16 %v2426, %v2426
        %v2451 = vpack.c.bf16 %v2427, %v2427
        %v2452 = vpack.c.bf16 %v2428, %v2428
        %v2453 = vpack.c.bf16 %v2429, %v2429
        %v2454 = vpack.c.bf16 %v2430, %v2430
        %v2455 = vpack.c.bf16 %v2431, %v2431
        %v2456 = vpack.c.bf16 %v2432, %v2432
        %v2457 = vpack.c.bf16 %v2433, %v2433
        %v2458 = vpack.c.bf16 %v2434, %v2434
        %v2459 = vpack.c.bf16 %v2435, %v2435
        %v2460 = vpack.c.bf16 %v2436, %v2436
        %v2461 = vpack.c.bf16 %v2437, %v2437
        %v2462 = vpack.c.bf16 %v2438, %v2438
        %v2463 = vpack.c.bf16 %v2439, %v2439
        %v2464 = vpack.c.bf16 %v2440, %v2440
        %v2465 = vpack.c.bf16 %v2441, %v2441
        %v2466 = vpack.c.bf16 %v2442, %v2442
        %v2467 = vpack.c.bf16 %v2443, %v2443
        %v2468 = vpack.c.bf16 %v2444, %v2444
        %v2469 = vpack.c.bf16 %v2445, %v2445
        %v2470 = vpack.c.bf16 %v2446, %v2446
        %v2471 = vpack.c.bf16 %v2447, %v2447
        %v2472 = vld [vmem:[%s3] sm:$0xf]
        %v2473 = vld [vmem:[%s3 + $0x4] sm:$0xf]
        %v2474 = vld [vmem:[%s3 + $0x8] sm:$0xf]
        %v2475 = vld [vmem:[%s3 + $0xc] sm:$0xf]
        %v2476 = vld [vmem:[%s3 + $0x10] sm:$0xf]
        %v2477 = vld [vmem:[%s3 + $0x14] sm:$0xf]
        %v2478 = vld [vmem:[%s3 + $0x18] sm:$0xf]
        %v2479 = vld [vmem:[%s3 + $0x1c] sm:$0xf]
        %v2480 = vld [vmem:[%s3 + $0x20] sm:$0xf]
        %v2481 = vld [vmem:[%s3 + $0x24] sm:$0xf]
        %v2482 = vld [vmem:[%s3 + $0x28] sm:$0xf]
        %v2483 = vld [vmem:[%s3 + $0x2c] sm:$0xf]
        %v2484 = vld [vmem:[%s3 + $0x30] sm:$0xf]
        %v2485 = vld [vmem:[%s3 + $0x34] sm:$0xf]
        %v2486 = vld [vmem:[%s3 + $0x38] sm:$0xf]
        %v2487 = vld [vmem:[%s3 + $0x3c] sm:$0xf]
        %vm2488 = vsmask.f32 3328
        %vm2489 = vsmask.f32 7440
        %vm2490 = vmor %vm2488, %vm2489
        %v2492 = vshrl.u32 %v2448, 16
        %v2494 = vrot.slane %v2492, 4
        %v2495 = vshll.u32 %v2448, 16
        %v2497 = vrot.slane %v2495, 5
        %v2498 = vor.u32 %v2494, %v2497
        %v2499 = vrot.slane %v2498, 4
        %v2501 = vshll.u32 %v2449, 16
        %v2503 = vrot.slane %v2501, 5
        %v2504 = vsel %vm2490, %v2499, %v2503
        %v2505 = vshrl.u32 %v2449, 16
        %v2507 = vrot.slane %v2505, 4
        %v2508 = vor.u32 %v2507, %v2503
        %v2509 = vrot.slane %v2508, 4
        %v2511 = vshll.u32 %v2450, 16
        %v2513 = vrot.slane %v2511, 5
        %v2514 = vsel %vm2490, %v2509, %v2513
        %v2516 = vshrl.u32 %v2451, 16
        %v2518 = vrot.slane %v2516, 4
        %v2519 = vshll.u32 %v2451, 16
        %v2521 = vrot.slane %v2519, 5
        %v2522 = vor.u32 %v2518, %v2521
        %v2523 = vrot.slane %v2522, 4
        %v2525 = vshll.u32 %v2452, 16
        %v2527 = vrot.slane %v2525, 5
        %v2528 = vsel %vm2490, %v2523, %v2527
        %v2529 = vshrl.u32 %v2452, 16
        %v2531 = vrot.slane %v2529, 4
        %v2532 = vor.u32 %v2531, %v2527
        %v2533 = vrot.slane %v2532, 4
        %v2535 = vshll.u32 %v2453, 16
        %v2537 = vrot.slane %v2535, 5
        %v2538 = vsel %vm2490, %v2533, %v2537
        %v2540 = vshrl.u32 %v2454, 16
        %v2542 = vrot.slane %v2540, 4
        %v2543 = vshll.u32 %v2454, 16
        %v2545 = vrot.slane %v2543, 5
        %v2546 = vor.u32 %v2542, %v2545
        %v2547 = vrot.slane %v2546, 4
        %v2549 = vshll.u32 %v2455, 16
        %v2551 = vrot.slane %v2549, 5
        %v2552 = vsel %vm2490, %v2547, %v2551
        %v2553 = vshrl.u32 %v2455, 16
        %v2555 = vrot.slane %v2553, 4
        %v2556 = vor.u32 %v2555, %v2551
        %v2557 = vrot.slane %v2556, 4
        %v2559 = vshll.u32 %v2456, 16
        %v2561 = vrot.slane %v2559, 5
        %v2562 = vsel %vm2490, %v2557, %v2561
        %v2564 = vshrl.u32 %v2457, 16
        %v2566 = vrot.slane %v2564, 4
        %v2567 = vshll.u32 %v2457, 16
        %v2569 = vrot.slane %v2567, 5
        %v2570 = vor.u32 %v2566, %v2569
        %v2571 = vrot.slane %v2570, 4
        %v2573 = vshll.u32 %v2458, 16
        %v2575 = vrot.slane %v2573, 5
        %v2576 = vsel %vm2490, %v2571, %v2575
        %v2577 = vshrl.u32 %v2458, 16
        %v2579 = vrot.slane %v2577, 4
        %v2580 = vor.u32 %v2579, %v2575
        %v2581 = vrot.slane %v2580, 4
        %v2583 = vshll.u32 %v2459, 16
        %v2585 = vrot.slane %v2583, 5
        %v2586 = vsel %vm2490, %v2581, %v2585
        %v2588 = vshrl.u32 %v2460, 16
        %v2590 = vrot.slane %v2588, 4
        %v2591 = vshll.u32 %v2460, 16
        %v2593 = vrot.slane %v2591, 5
        %v2594 = vor.u32 %v2590, %v2593
        %v2595 = vrot.slane %v2594, 4
        %v2597 = vshll.u32 %v2461, 16
        %v2599 = vrot.slane %v2597, 5
        %v2600 = vsel %vm2490, %v2595, %v2599
        %v2601 = vshrl.u32 %v2461, 16
        %v2603 = vrot.slane %v2601, 4
        %v2604 = vor.u32 %v2603, %v2599
        %v2605 = vrot.slane %v2604, 4
        %v2607 = vshll.u32 %v2462, 16
        %v2609 = vrot.slane %v2607, 5
        %v2610 = vsel %vm2490, %v2605, %v2609
        %v2612 = vshrl.u32 %v2463, 16
        %v2614 = vrot.slane %v2612, 4
        %v2615 = vshll.u32 %v2463, 16
        %v2617 = vrot.slane %v2615, 5
        %v2618 = vor.u32 %v2614, %v2617
        %v2619 = vrot.slane %v2618, 4
        %v2621 = vshll.u32 %v2464, 16
        %v2623 = vrot.slane %v2621, 5
        %v2624 = vsel %vm2490, %v2619, %v2623
        %v2625 = vshrl.u32 %v2464, 16
        %v2627 = vrot.slane %v2625, 4
        %v2628 = vor.u32 %v2627, %v2623
        %v2629 = vrot.slane %v2628, 4
        %v2631 = vshll.u32 %v2465, 16
        %v2633 = vrot.slane %v2631, 5
        %v2634 = vsel %vm2490, %v2629, %v2633
        %v2636 = vshrl.u32 %v2466, 16
        %v2638 = vrot.slane %v2636, 4
        %v2639 = vshll.u32 %v2466, 16
        %v2641 = vrot.slane %v2639, 5
        %v2642 = vor.u32 %v2638, %v2641
        %v2643 = vrot.slane %v2642, 4
        %v2645 = vshll.u32 %v2467, 16
        %v2647 = vrot.slane %v2645, 5
        %v2648 = vsel %vm2490, %v2643, %v2647
        %v2649 = vshrl.u32 %v2467, 16
        %v2651 = vrot.slane %v2649, 4
        %v2652 = vor.u32 %v2651, %v2647
        %v2653 = vrot.slane %v2652, 4
        %v2655 = vshll.u32 %v2468, 16
        %v2657 = vrot.slane %v2655, 5
        %v2658 = vsel %vm2490, %v2653, %v2657
        %v2660 = vshrl.u32 %v2469, 16
        %v2662 = vrot.slane %v2660, 4
        %v2663 = vshll.u32 %v2469, 16
        %v2665 = vrot.slane %v2663, 5
        %v2666 = vor.u32 %v2662, %v2665
        %v2667 = vrot.slane %v2666, 4
        %v2669 = vshll.u32 %v2470, 16
        %v2671 = vrot.slane %v2669, 5
        %v2672 = vsel %vm2490, %v2667, %v2671
        %v2673 = vshrl.u32 %v2470, 16
        %v2675 = vrot.slane %v2673, 4
        %v2676 = vor.u32 %v2675, %v2671
        %v2677 = vrot.slane %v2676, 4
        %v2679 = vshll.u32 %v2471, 16
        %v2681 = vrot.slane %v2679, 5
        %v2682 = vsel %vm2490, %v2677, %v2681
        %s2683 = scalar_lea.vmem %s3, 64
        %v2684 = vld [vmem:[%s2683] sm:$0xf]
        %v2685 = vld [vmem:[%s2683 + $0x4] sm:$0xf]
        %v2686 = vld [vmem:[%s2683 + $0x8] sm:$0xf]
        %v2687 = vld [vmem:[%s2683 + $0xc] sm:$0xf]
        %v2688 = vld [vmem:[%s2683 + $0x10] sm:$0xf]
        %v2689 = vld [vmem:[%s2683 + $0x14] sm:$0xf]
        %v2690 = vld [vmem:[%s2683 + $0x18] sm:$0xf]
        %v2691 = vld [vmem:[%s2683 + $0x1c] sm:$0xf]
        %v2692 = vld [vmem:[%s2683 + $0x20] sm:$0xf]
        %v2693 = vld [vmem:[%s2683 + $0x24] sm:$0xf]
        %v2694 = vld [vmem:[%s2683 + $0x28] sm:$0xf]
        %v2695 = vld [vmem:[%s2683 + $0x2c] sm:$0xf]
        %v2696 = vld [vmem:[%s2683 + $0x30] sm:$0xf]
        %v2697 = vld [vmem:[%s2683 + $0x34] sm:$0xf]
        %v2698 = vld [vmem:[%s2683 + $0x38] sm:$0xf]
        %v2699 = vld [vmem:[%s2683 + $0x3c] sm:$0xf]
        %v2700 = vunpack.c.l.b16 %v2504
        %v2701 = vunpack.c.l.b16 %v2514
        %v2702 = vunpack.c.l.b16 %v2528
        %v2703 = vunpack.c.l.b16 %v2538
        %v2704 = vunpack.c.l.b16 %v2552
        %v2705 = vunpack.c.l.b16 %v2562
        %v2706 = vunpack.c.l.b16 %v2576
        %v2707 = vunpack.c.l.b16 %v2586
        %v2708 = vunpack.c.l.b16 %v2600
        %v2709 = vunpack.c.l.b16 %v2610
        %v2710 = vunpack.c.l.b16 %v2624
        %v2711 = vunpack.c.l.b16 %v2634
        %v2712 = vunpack.c.l.b16 %v2648
        %v2713 = vunpack.c.l.b16 %v2658
        %v2714 = vunpack.c.l.b16 %v2672
        %v2715 = vunpack.c.l.b16 %v2682
        %v2716 = vpack.c.b16 %v2701, %v2700
        %v2717 = vpack.c.b16 %v2703, %v2702
        %v2718 = vpack.c.b16 %v2705, %v2704
        %v2719 = vpack.c.b16 %v2707, %v2706
        %v2720 = vpack.c.b16 %v2709, %v2708
        %v2721 = vpack.c.b16 %v2711, %v2710
        %v2722 = vpack.c.b16 %v2713, %v2712
        %v2723 = vpack.c.b16 %v2715, %v2714
        %v2748 = vunpack.c.l.b16 %v2684
        %v2749 = vunpack.c.l.b16 %v2685
        %v2750 = vunpack.c.l.b16 %v2686
        %v2751 = vunpack.c.l.b16 %v2687
        %v2752 = vunpack.c.l.b16 %v2688
        %v2753 = vunpack.c.l.b16 %v2689
        %v2754 = vunpack.c.l.b16 %v2690
        %v2755 = vunpack.c.l.b16 %v2691
        %v2756 = vunpack.c.l.b16 %v2692
        %v2757 = vunpack.c.l.b16 %v2693
        %v2758 = vunpack.c.l.b16 %v2694
        %v2759 = vunpack.c.l.b16 %v2695
        %v2760 = vunpack.c.l.b16 %v2696
        %v2761 = vunpack.c.l.b16 %v2697
        %v2762 = vunpack.c.l.b16 %v2698
        %v2763 = vunpack.c.l.b16 %v2699
        %v2764 = vpack.c.b16 %v2749, %v2748
        %v2765 = vpack.c.b16 %v2751, %v2750
        %v2766 = vpack.c.b16 %v2753, %v2752
        %v2767 = vpack.c.b16 %v2755, %v2754
        %v2768 = vpack.c.b16 %v2757, %v2756
        %v2769 = vpack.c.b16 %v2759, %v2758
        %v2770 = vpack.c.b16 %v2761, %v2760
        %v2771 = vpack.c.b16 %v2763, %v2762
        %2780 = vmatpush.bf16.msra.mxu0 %v2771
        %2781 = vmatpush.bf16.msra.mxu0 %v2770
        %2782 = vmatpush.bf16.msra.mxu0 %v2769
        %2783 = vmatpush.bf16.msra.mxu0 %v2768
        %2784 = vmatpush.bf16.msra.mxu0 %v2767
        %2785 = vmatpush.bf16.msra.mxu0 %v2766
        %2786 = vmatpush.bf16.msra.mxu0 %v2765
        %2787 = vmatpush.bf16.msra.mxu0 %v2764
        %2788 = vmatmul.bf16.gmra.mxu0 %v2716
        %v2789 = vpop.f32.mrf.mxu0
        %v2790 = vadd.f32 0.0, %v2789
        %v2791 = vpop.f32.mrf.mxu0
        %v2792 = vadd.f32 0.0, %v2791
        %2793 = vmatmul.bf16.gmra.mxu0 %v2717
        %v2794 = vpop.f32.mrf.mxu0
        %v2795 = vadd.f32 0.0, %v2794
        %v2796 = vpop.f32.mrf.mxu0
        %v2797 = vadd.f32 0.0, %v2796
        %2798 = vmatmul.bf16.gmra.mxu0 %v2718
        %v2799 = vpop.f32.mrf.mxu0
        %v2800 = vadd.f32 0.0, %v2799
        %v2801 = vpop.f32.mrf.mxu0
        %v2802 = vadd.f32 0.0, %v2801
        %2803 = vmatmul.bf16.gmra.mxu0 %v2719
        %v2804 = vpop.f32.mrf.mxu0
        %v2805 = vadd.f32 0.0, %v2804
        %v2806 = vpop.f32.mrf.mxu0
        %v2807 = vadd.f32 0.0, %v2806
        %2808 = vmatmul.bf16.gmra.mxu0 %v2720
        %v2809 = vpop.f32.mrf.mxu0
        %v2810 = vadd.f32 0.0, %v2809
        %v2811 = vpop.f32.mrf.mxu0
        %v2812 = vadd.f32 0.0, %v2811
        %2813 = vmatmul.bf16.gmra.mxu0 %v2721
        %v2814 = vpop.f32.mrf.mxu0
        %v2815 = vadd.f32 0.0, %v2814
        %v2816 = vpop.f32.mrf.mxu0
        %v2817 = vadd.f32 0.0, %v2816
        %2818 = vmatmul.bf16.gmra.mxu0 %v2722
        %v2819 = vpop.f32.mrf.mxu0
        %v2820 = vadd.f32 0.0, %v2819
        %v2821 = vpop.f32.mrf.mxu0
        %v2822 = vadd.f32 0.0, %v2821
        %2823 = vmatmul.bf16.gmra.mxu0 %v2723
        %v2824 = vpop.f32.mrf.mxu0
        %v2825 = vadd.f32 0.0, %v2824
        %v2826 = vpop.f32.mrf.mxu0
        %v2827 = vadd.f32 0.0, %v2826
        %2828 = vdwg.mxu0
        %v2845 = vunpack.c.l.b16 %v2448
        %v2846 = vunpack.c.l.b16 %v2449
        %v2847 = vunpack.c.l.b16 %v2451
        %v2848 = vunpack.c.l.b16 %v2452
        %v2849 = vunpack.c.l.b16 %v2454
        %v2850 = vunpack.c.l.b16 %v2455
        %v2851 = vunpack.c.l.b16 %v2457
        %v2852 = vunpack.c.l.b16 %v2458
        %v2853 = vunpack.c.l.b16 %v2460
        %v2854 = vunpack.c.l.b16 %v2461
        %v2855 = vunpack.c.l.b16 %v2463
        %v2856 = vunpack.c.l.b16 %v2464
        %v2857 = vunpack.c.l.b16 %v2466
        %v2858 = vunpack.c.l.b16 %v2467
        %v2859 = vunpack.c.l.b16 %v2469
        %v2860 = vunpack.c.l.b16 %v2470
        %v2861 = vpack.c.b16 %v2846, %v2845
        %v2862 = vpack.c.b16 %v2848, %v2847
        %v2863 = vpack.c.b16 %v2850, %v2849
        %v2864 = vpack.c.b16 %v2852, %v2851
        %v2865 = vpack.c.b16 %v2854, %v2853
        %v2866 = vpack.c.b16 %v2856, %v2855
        %v2867 = vpack.c.b16 %v2858, %v2857
        %v2868 = vpack.c.b16 %v2860, %v2859
        %v2893 = vunpack.c.l.b16 %v2472
        %v2894 = vunpack.c.l.b16 %v2473
        %v2895 = vunpack.c.l.b16 %v2474
        %v2896 = vunpack.c.l.b16 %v2475
        %v2897 = vunpack.c.l.b16 %v2476
        %v2898 = vunpack.c.l.b16 %v2477
        %v2899 = vunpack.c.l.b16 %v2478
        %v2900 = vunpack.c.l.b16 %v2479
        %v2901 = vunpack.c.l.b16 %v2480
        %v2902 = vunpack.c.l.b16 %v2481
        %v2903 = vunpack.c.l.b16 %v2482
        %v2904 = vunpack.c.l.b16 %v2483
        %v2905 = vunpack.c.l.b16 %v2484
        %v2906 = vunpack.c.l.b16 %v2485
        %v2907 = vunpack.c.l.b16 %v2486
        %v2908 = vunpack.c.l.b16 %v2487
        %v2909 = vpack.c.b16 %v2894, %v2893
        %v2910 = vpack.c.b16 %v2896, %v2895
        %v2911 = vpack.c.b16 %v2898, %v2897
        %v2912 = vpack.c.b16 %v2900, %v2899
        %v2913 = vpack.c.b16 %v2902, %v2901
        %v2914 = vpack.c.b16 %v2904, %v2903
        %v2915 = vpack.c.b16 %v2906, %v2905
        %v2916 = vpack.c.b16 %v2908, %v2907
        %2925 = vmatpush.bf16.msra.mxu0 %v2916
        %2926 = vmatpush.bf16.msra.mxu0 %v2915
        %2927 = vmatpush.bf16.msra.mxu0 %v2914
        %2928 = vmatpush.bf16.msra.mxu0 %v2913
        %2929 = vmatpush.bf16.msra.mxu0 %v2912
        %2930 = vmatpush.bf16.msra.mxu0 %v2911
        %2931 = vmatpush.bf16.msra.mxu0 %v2910
        %2932 = vmatpush.bf16.msra.mxu0 %v2909
        %2933 = vmatmul.bf16.gmra.mxu0 %v2861
        %v2934 = vpop.f32.mrf.mxu0
        %v2935 = vadd.f32 %v2790, %v2934
        %v2936 = vpop.f32.mrf.mxu0
        %v2937 = vadd.f32 %v2792, %v2936
        %2938 = vmatmul.bf16.gmra.mxu0 %v2862
        %v2939 = vpop.f32.mrf.mxu0
        %v2940 = vadd.f32 %v2795, %v2939
        %v2941 = vpop.f32.mrf.mxu0
        %v2942 = vadd.f32 %v2797, %v2941
        %2943 = vmatmul.bf16.gmra.mxu0 %v2863
        %v2944 = vpop.f32.mrf.mxu0
        %v2945 = vadd.f32 %v2800, %v2944
        %v2946 = vpop.f32.mrf.mxu0
        %v2947 = vadd.f32 %v2802, %v2946
        %2948 = vmatmul.bf16.gmra.mxu0 %v2864
        %v2949 = vpop.f32.mrf.mxu0
        %v2950 = vadd.f32 %v2805, %v2949
        %v2951 = vpop.f32.mrf.mxu0
        %v2952 = vadd.f32 %v2807, %v2951
        %2953 = vmatmul.bf16.gmra.mxu0 %v2865
        %v2954 = vpop.f32.mrf.mxu0
        %v2955 = vadd.f32 %v2810, %v2954
        %v2956 = vpop.f32.mrf.mxu0
        %v2957 = vadd.f32 %v2812, %v2956
        %2958 = vmatmul.bf16.gmra.mxu0 %v2866
        %v2959 = vpop.f32.mrf.mxu0
        %v2960 = vadd.f32 %v2815, %v2959
        %v2961 = vpop.f32.mrf.mxu0
        %v2962 = vadd.f32 %v2817, %v2961
        %2963 = vmatmul.bf16.gmra.mxu0 %v2867
        %v2964 = vpop.f32.mrf.mxu0
        %v2965 = vadd.f32 %v2820, %v2964
        %v2966 = vpop.f32.mrf.mxu0
        %v2967 = vadd.f32 %v2822, %v2966
        %2968 = vmatmul.bf16.gmra.mxu0 %v2868
        %v2969 = vpop.f32.mrf.mxu0
        %v2970 = vadd.f32 %v2825, %v2969
        %v2971 = vpop.f32.mrf.mxu0
        %v2972 = vadd.f32 %v2827, %v2971
        %2973 = vdwg.mxu0
        %vm2982 = vcmask 1042432
        %vm2983 = vcmask 1046532
        %vm2984 = vmor %vm2982, %vm2983
        %v2985 = vrot.slane %v2448, 5
        %v2986 = vrot.slane %v2985, 4
        %v2987 = vrot.slane %v2449, 5
        %v2988 = vsel %vm2984, %v2986, %v2987
        %v2989 = vrot.slane %v2987, 4
        %v2990 = vrot.slane %v2450, 5
        %v2991 = vsel %vm2984, %v2989, %v2990
        %v2992 = vrot.slane %v2451, 5
        %v2993 = vrot.slane %v2992, 4
        %v2994 = vrot.slane %v2452, 5
        %v2995 = vsel %vm2984, %v2993, %v2994
        %v2996 = vrot.slane %v2994, 4
        %v2997 = vrot.slane %v2453, 5
        %v2998 = vsel %vm2984, %v2996, %v2997
        %v2999 = vrot.slane %v2454, 5
        %v3000 = vrot.slane %v2999, 4
        %v3001 = vrot.slane %v2455, 5
        %v3002 = vsel %vm2984, %v3000, %v3001
        %v3003 = vrot.slane %v3001, 4
        %v3004 = vrot.slane %v2456, 5
        %v3005 = vsel %vm2984, %v3003, %v3004
        %v3006 = vrot.slane %v2457, 5
        %v3007 = vrot.slane %v3006, 4
        %v3008 = vrot.slane %v2458, 5
        %v3009 = vsel %vm2984, %v3007, %v3008
        %v3010 = vrot.slane %v3008, 4
        %v3011 = vrot.slane %v2459, 5
        %v3012 = vsel %vm2984, %v3010, %v3011
        %v3013 = vrot.slane %v2460, 5
        %v3014 = vrot.slane %v3013, 4
        %v3015 = vrot.slane %v2461, 5
        %v3016 = vsel %vm2984, %v3014, %v3015
        %v3017 = vrot.slane %v3015, 4
        %v3018 = vrot.slane %v2462, 5
        %v3019 = vsel %vm2984, %v3017, %v3018
        %v3020 = vrot.slane %v2463, 5
        %v3021 = vrot.slane %v3020, 4
        %v3022 = vrot.slane %v2464, 5
        %v3023 = vsel %vm2984, %v3021, %v3022
        %v3024 = vrot.slane %v3022, 4
        %v3025 = vrot.slane %v2465, 5
        %v3026 = vsel %vm2984, %v3024, %v3025
        %v3027 = vrot.slane %v2466, 5
        %v3028 = vrot.slane %v3027, 4
        %v3029 = vrot.slane %v2467, 5
        %v3030 = vsel %vm2984, %v3028, %v3029
        %v3031 = vrot.slane %v3029, 4
        %v3032 = vrot.slane %v2468, 5
        %v3033 = vsel %vm2984, %v3031, %v3032
        %v3034 = vrot.slane %v2469, 5
        %v3035 = vrot.slane %v3034, 4
        %v3036 = vrot.slane %v2470, 5
        %v3037 = vsel %vm2984, %v3035, %v3036
        %v3038 = vrot.slane %v3036, 4
        %v3039 = vrot.slane %v2471, 5
        %v3040 = vsel %vm2984, %v3038, %v3039
        %s3041 = scalar_lea.vmem %s3, 128
        %v3042 = vld [vmem:[%s3041] sm:$0xf]
        %v3043 = vld [vmem:[%s3041 + $0x4] sm:$0xf]
        %v3044 = vld [vmem:[%s3041 + $0x8] sm:$0xf]
        %v3045 = vld [vmem:[%s3041 + $0xc] sm:$0xf]
        %v3046 = vld [vmem:[%s3041 + $0x10] sm:$0xf]
        %v3047 = vld [vmem:[%s3041 + $0x14] sm:$0xf]
        %v3048 = vld [vmem:[%s3041 + $0x18] sm:$0xf]
        %v3049 = vld [vmem:[%s3041 + $0x1c] sm:$0xf]
        %v3050 = vld [vmem:[%s3041 + $0x20] sm:$0xf]
        %v3051 = vld [vmem:[%s3041 + $0x24] sm:$0xf]
        %v3052 = vld [vmem:[%s3041 + $0x28] sm:$0xf]
        %v3053 = vld [vmem:[%s3041 + $0x2c] sm:$0xf]
        %v3054 = vld [vmem:[%s3041 + $0x30] sm:$0xf]
        %v3055 = vld [vmem:[%s3041 + $0x34] sm:$0xf]
        %v3056 = vld [vmem:[%s3041 + $0x38] sm:$0xf]
        %v3057 = vld [vmem:[%s3041 + $0x3c] sm:$0xf]
        %v3058 = vunpack.c.l.b16 %v2988
        %v3059 = vunpack.c.l.b16 %v2991
        %v3060 = vunpack.c.l.b16 %v2995
        %v3061 = vunpack.c.l.b16 %v2998
        %v3062 = vunpack.c.l.b16 %v3002
        %v3063 = vunpack.c.l.b16 %v3005
        %v3064 = vunpack.c.l.b16 %v3009
        %v3065 = vunpack.c.l.b16 %v3012
        %v3066 = vunpack.c.l.b16 %v3016
        %v3067 = vunpack.c.l.b16 %v3019
        %v3068 = vunpack.c.l.b16 %v3023
        %v3069 = vunpack.c.l.b16 %v3026
        %v3070 = vunpack.c.l.b16 %v3030
        %v3071 = vunpack.c.l.b16 %v3033
        %v3072 = vunpack.c.l.b16 %v3037
        %v3073 = vunpack.c.l.b16 %v3040
        %v3074 = vpack.c.b16 %v3059, %v3058
        %v3075 = vpack.c.b16 %v3061, %v3060
        %v3076 = vpack.c.b16 %v3063, %v3062
        %v3077 = vpack.c.b16 %v3065, %v3064
        %v3078 = vpack.c.b16 %v3067, %v3066
        %v3079 = vpack.c.b16 %v3069, %v3068
        %v3080 = vpack.c.b16 %v3071, %v3070
        %v3081 = vpack.c.b16 %v3073, %v3072
        %v3106 = vunpack.c.l.b16 %v3042
        %v3107 = vunpack.c.l.b16 %v3043
        %v3108 = vunpack.c.l.b16 %v3044
        %v3109 = vunpack.c.l.b16 %v3045
        %v3110 = vunpack.c.l.b16 %v3046
        %v3111 = vunpack.c.l.b16 %v3047
        %v3112 = vunpack.c.l.b16 %v3048
        %v3113 = vunpack.c.l.b16 %v3049
        %v3114 = vunpack.c.l.b16 %v3050
        %v3115 = vunpack.c.l.b16 %v3051
        %v3116 = vunpack.c.l.b16 %v3052
        %v3117 = vunpack.c.l.b16 %v3053
        %v3118 = vunpack.c.l.b16 %v3054
        %v3119 = vunpack.c.l.b16 %v3055
        %v3120 = vunpack.c.l.b16 %v3056
        %v3121 = vunpack.c.l.b16 %v3057
        %v3122 = vpack.c.b16 %v3107, %v3106
        %v3123 = vpack.c.b16 %v3109, %v3108
        %v3124 = vpack.c.b16 %v3111, %v3110
        %v3125 = vpack.c.b16 %v3113, %v3112
        %v3126 = vpack.c.b16 %v3115, %v3114
        %v3127 = vpack.c.b16 %v3117, %v3116
        %v3128 = vpack.c.b16 %v3119, %v3118
        %v3129 = vpack.c.b16 %v3121, %v3120
        %3138 = vmatpush.bf16.msra.mxu0 %v3129
        %3139 = vmatpush.bf16.msra.mxu0 %v3128
        %3140 = vmatpush.bf16.msra.mxu0 %v3127
        %3141 = vmatpush.bf16.msra.mxu0 %v3126
        %3142 = vmatpush.bf16.msra.mxu0 %v3125
        %3143 = vmatpush.bf16.msra.mxu0 %v3124
        %3144 = vmatpush.bf16.msra.mxu0 %v3123
        %3145 = vmatpush.bf16.msra.mxu0 %v3122
        %3146 = vmatmul.bf16.gmra.mxu0 %v3074
        %v3147 = vpop.f32.mrf.mxu0
        %v3148 = vadd.f32 0.0, %v3147
        %v3149 = vpop.f32.mrf.mxu0
        %v3150 = vadd.f32 0.0, %v3149
        %3151 = vmatmul.bf16.gmra.mxu0 %v3075
        %v3152 = vpop.f32.mrf.mxu0
        %v3153 = vadd.f32 0.0, %v3152
        %v3154 = vpop.f32.mrf.mxu0
        %v3155 = vadd.f32 0.0, %v3154
        %3156 = vmatmul.bf16.gmra.mxu0 %v3076
        %v3157 = vpop.f32.mrf.mxu0
        %v3158 = vadd.f32 0.0, %v3157
        %v3159 = vpop.f32.mrf.mxu0
        %v3160 = vadd.f32 0.0, %v3159
        %3161 = vmatmul.bf16.gmra.mxu0 %v3077
        %v3162 = vpop.f32.mrf.mxu0
        %v3163 = vadd.f32 0.0, %v3162
        %v3164 = vpop.f32.mrf.mxu0
        %v3165 = vadd.f32 0.0, %v3164
        %3166 = vmatmul.bf16.gmra.mxu0 %v3078
        %v3167 = vpop.f32.mrf.mxu0
        %v3168 = vadd.f32 0.0, %v3167
        %v3169 = vpop.f32.mrf.mxu0
        %v3170 = vadd.f32 0.0, %v3169
        %3171 = vmatmul.bf16.gmra.mxu0 %v3079
        %v3172 = vpop.f32.mrf.mxu0
        %v3173 = vadd.f32 0.0, %v3172
        %v3174 = vpop.f32.mrf.mxu0
        %v3175 = vadd.f32 0.0, %v3174
        %3176 = vmatmul.bf16.gmra.mxu0 %v3080
        %v3177 = vpop.f32.mrf.mxu0
        %v3178 = vadd.f32 0.0, %v3177
        %v3179 = vpop.f32.mrf.mxu0
        %v3180 = vadd.f32 0.0, %v3179
        %3181 = vmatmul.bf16.gmra.mxu0 %v3081
        %v3182 = vpop.f32.mrf.mxu0
        %v3183 = vadd.f32 0.0, %v3182
        %v3184 = vpop.f32.mrf.mxu0
        %v3185 = vadd.f32 0.0, %v3184
        %3186 = vdwg.mxu0
        %v3187 = vadd.f32 %v2935, %v3148
        %v3188 = vadd.f32 %v2937, %v3150
        %v3189 = vadd.f32 %v2940, %v3153
        %v3190 = vadd.f32 %v2942, %v3155
        %v3191 = vadd.f32 %v2945, %v3158
        %v3192 = vadd.f32 %v2947, %v3160
        %v3193 = vadd.f32 %v2950, %v3163
        %v3194 = vadd.f32 %v2952, %v3165
        %v3195 = vadd.f32 %v2955, %v3168
        %v3196 = vadd.f32 %v2957, %v3170
        %v3197 = vadd.f32 %v2960, %v3173
        %v3198 = vadd.f32 %v2962, %v3175
        %v3199 = vadd.f32 %v2965, %v3178
        %v3200 = vadd.f32 %v2967, %v3180
        %v3201 = vadd.f32 %v2970, %v3183
        %v3202 = vadd.f32 %v2972, %v3185
        %v3203 = vld [vmem:[%s4] sm:$0x1]
        %v3205 = vperm.slane %v3203, 0
        %v3207 = vadd.f32 %v3187, %v3205
        %v3208 = vadd.f32 %v3188, %v3205
        %v3209 = vadd.f32 %v3189, %v3205
        %v3210 = vadd.f32 %v3190, %v3205
        %v3211 = vadd.f32 %v3191, %v3205
        %v3212 = vadd.f32 %v3192, %v3205
        %v3213 = vadd.f32 %v3193, %v3205
        %v3214 = vadd.f32 %v3194, %v3205
        %v3215 = vadd.f32 %v3195, %v3205
        %v3216 = vadd.f32 %v3196, %v3205
        %v3217 = vadd.f32 %v3197, %v3205
        %v3218 = vadd.f32 %v3198, %v3205
        %v3219 = vadd.f32 %v3199, %v3205
        %v3220 = vadd.f32 %v3200, %v3205
        %v3221 = vadd.f32 %v3201, %v3205
        %v3222 = vadd.f32 %v3202, %v3205
        %v3223 = vmax.f32 %v3207, 0.0
        %v3224 = vmax.f32 %v3208, 0.0
        %v3225 = vmax.f32 %v3209, 0.0
        %v3226 = vmax.f32 %v3210, 0.0
        %v3227 = vmax.f32 %v3211, 0.0
        %v3228 = vmax.f32 %v3212, 0.0
        %v3229 = vmax.f32 %v3213, 0.0
        %v3230 = vmax.f32 %v3214, 0.0
        %v3231 = vmax.f32 %v3215, 0.0
        %v3232 = vmax.f32 %v3216, 0.0
        %v3233 = vmax.f32 %v3217, 0.0
        %v3234 = vmax.f32 %v3218, 0.0
        %v3235 = vmax.f32 %v3219, 0.0
        %v3236 = vmax.f32 %v3220, 0.0
        %v3237 = vmax.f32 %v3221, 0.0
        %v3238 = vmax.f32 %v3222, 0.0
        %3239 = vst [vmem:[%s251] sm:$0xff] %v3223
        %3240 = vst [vmem:[%s251 + $0x8] sm:$0xff] %v3224
        %3241 = vst [vmem:[%s251 + $0x10] sm:$0xff] %v3225
        %3242 = vst [vmem:[%s251 + $0x18] sm:$0xff] %v3226
        %3243 = vst [vmem:[%s251 + $0x20] sm:$0xff] %v3227
        %3244 = vst [vmem:[%s251 + $0x28] sm:$0xff] %v3228
        %3245 = vst [vmem:[%s251 + $0x30] sm:$0xff] %v3229
        %3246 = vst [vmem:[%s251 + $0x38] sm:$0xff] %v3230
        %3247 = vst [vmem:[%s251 + $0x40] sm:$0xff] %v3231
        %3248 = vst [vmem:[%s251 + $0x48] sm:$0xff] %v3232
        %3249 = vst [vmem:[%s251 + $0x50] sm:$0xff] %v3233
        %3250 = vst [vmem:[%s251 + $0x58] sm:$0xff] %v3234
        %3251 = vst [vmem:[%s251 + $0x60] sm:$0xff] %v3235
        %3252 = vst [vmem:[%s251 + $0x68] sm:$0xff] %v3236
        %3253 = vst [vmem:[%s251 + $0x70] sm:$0xff] %v3237
        %3254 = vst [vmem:[%s251 + $0x78] sm:$0xff] %v3238
        %v3271 = vrot.slane %v3223, 2
        %v3272 = vrot.slane %v3223, 4
        %v3273 = vrot.slane %v3223, 6
        %v3274 = vrot.slane %v3224, 2
        %v3275 = vrot.slane %v3224, 4
        %v3276 = vrot.slane %v3224, 6
        %v3277 = vrot.slane %v3225, 2
        %v3278 = vrot.slane %v3225, 4
        %v3279 = vrot.slane %v3225, 6
        %v3280 = vrot.slane %v3226, 2
        %v3281 = vrot.slane %v3226, 4
        %v3282 = vrot.slane %v3226, 6
        %v3283 = vrot.slane %v3227, 2
        %v3284 = vrot.slane %v3227, 4
        %v3285 = vrot.slane %v3227, 6
        %v3286 = vrot.slane %v3228, 2
        %v3287 = vrot.slane %v3228, 4
        %v3288 = vrot.slane %v3228, 6
        %v3289 = vrot.slane %v3229, 2
        %v3290 = vrot.slane %v3229, 4
        %v3291 = vrot.slane %v3229, 6
        %v3292 = vrot.slane %v3230, 2
        %v3293 = vrot.slane %v3230, 4
        %v3294 = vrot.slane %v3230, 6
        %v3295 = vrot.slane %v3231, 2
        %v3296 = vrot.slane %v3231, 4
        %v3297 = vrot.slane %v3231, 6
        %v3298 = vrot.slane %v3232, 2
        %v3299 = vrot.slane %v3232, 4
        %v3300 = vrot.slane %v3232, 6
        %v3301 = vrot.slane %v3233, 2
        %v3302 = vrot.slane %v3233, 4
        %v3303 = vrot.slane %v3233, 6
        %v3304 = vrot.slane %v3234, 2
        %v3305 = vrot.slane %v3234, 4
        %v3306 = vrot.slane %v3234, 6
        %v3307 = vrot.slane %v3235, 2
        %v3308 = vrot.slane %v3235, 4
        %v3309 = vrot.slane %v3235, 6
        %v3310 = vrot.slane %v3236, 2
        %v3311 = vrot.slane %v3236, 4
        %v3312 = vrot.slane %v3236, 6
        %v3313 = vrot.slane %v3237, 2
        %v3314 = vrot.slane %v3237, 4
        %v3315 = vrot.slane %v3237, 6
        %v3316 = vrot.slane %v3238, 2
        %v3317 = vrot.slane %v3238, 4
        %v3318 = vrot.slane %v3238, 6
        %v3367 = vrot.slane %v3223, 7
        %v3368 = vrot.slane %v3367, 2
        %v3369 = vrot.slane %v3271, 7
        %v3370 = vrot.slane %v3369, 2
        %v3371 = vrot.slane %v3272, 7
        %v3372 = vrot.slane %v3371, 2
        %v3373 = vrot.slane %v3273, 7
        %v3374 = vrot.slane %v3373, 2
        %v3375 = vrot.slane %v3224, 7
        %v3376 = vrot.slane %v3375, 2
        %v3377 = vrot.slane %v3274, 7
        %v3378 = vrot.slane %v3377, 2
        %v3379 = vrot.slane %v3275, 7
        %v3380 = vrot.slane %v3379, 2
        %v3381 = vrot.slane %v3276, 7
        %v3382 = vrot.slane %v3381, 2
        %v3383 = vrot.slane %v3225, 7
        %v3384 = vrot.slane %v3383, 2
        %v3385 = vrot.slane %v3277, 7
        %v3386 = vrot.slane %v3385, 2
        %v3387 = vrot.slane %v3278, 7
        %v3388 = vrot.slane %v3387, 2
        %v3389 = vrot.slane %v3279, 7
        %v3390 = vrot.slane %v3389, 2
        %v3391 = vrot.slane %v3226, 7
        %v3392 = vrot.slane %v3391, 2
        %v3393 = vrot.slane %v3280, 7
        %v3394 = vrot.slane %v3393, 2
        %v3395 = vrot.slane %v3281, 7
        %v3396 = vrot.slane %v3395, 2
        %v3397 = vrot.slane %v3282, 7
        %v3398 = vrot.slane %v3397, 2
        %v3399 = vrot.slane %v3227, 7
        %v3400 = vrot.slane %v3399, 2
        %v3401 = vrot.slane %v3283, 7
        %v3402 = vrot.slane %v3401, 2
        %v3403 = vrot.slane %v3284, 7
        %v3404 = vrot.slane %v3403, 2
        %v3405 = vrot.slane %v3285, 7
        %v3406 = vrot.slane %v3405, 2
        %v3407 = vrot.slane %v3228, 7
        %v3408 = vrot.slane %v3407, 2
        %v3409 = vrot.slane %v3286, 7
        %v3410 = vrot.slane %v3409, 2
        %v3411 = vrot.slane %v3287, 7
        %v3412 = vrot.slane %v3411, 2
        %v3413 = vrot.slane %v3288, 7
        %v3414 = vrot.slane %v3413, 2
        %v3415 = vrot.slane %v3229, 7
        %v3416 = vrot.slane %v3415, 2
        %v3417 = vrot.slane %v3289, 7
        %v3418 = vrot.slane %v3417, 2
        %v3419 = vrot.slane %v3290, 7
        %v3420 = vrot.slane %v3419, 2
        %v3421 = vrot.slane %v3291, 7
        %v3422 = vrot.slane %v3421, 2
        %v3423 = vrot.slane %v3230, 7
        %v3424 = vrot.slane %v3423, 2
        %v3425 = vrot.slane %v3292, 7
        %v3426 = vrot.slane %v3425, 2
        %v3427 = vrot.slane %v3293, 7
        %v3428 = vrot.slane %v3427, 2
        %v3429 = vrot.slane %v3294, 7
        %v3430 = vrot.slane %v3429, 2
        %v3431 = vrot.slane %v3231, 7
        %v3432 = vrot.slane %v3431, 2
        %v3433 = vrot.slane %v3295, 7
        %v3434 = vrot.slane %v3433, 2
        %v3435 = vrot.slane %v3296, 7
        %v3436 = vrot.slane %v3435, 2
        %v3437 = vrot.slane %v3297, 7
        %v3438 = vrot.slane %v3437, 2
        %v3439 = vrot.slane %v3232, 7
        %v3440 = vrot.slane %v3439, 2
        %v3441 = vrot.slane %v3298, 7
        %v3442 = vrot.slane %v3441, 2
        %v3443 = vrot.slane %v3299, 7
        %v3444 = vrot.slane %v3443, 2
        %v3445 = vrot.slane %v3300, 7
        %v3446 = vrot.slane %v3445, 2
        %v3447 = vrot.slane %v3233, 7
        %v3448 = vrot.slane %v3447, 2
        %v3449 = vrot.slane %v3301, 7
        %v3450 = vrot.slane %v3449, 2
        %v3451 = vrot.slane %v3302, 7
        %v3452 = vrot.slane %v3451, 2
        %v3453 = vrot.slane %v3303, 7
        %v3454 = vrot.slane %v3453, 2
        %v3455 = vrot.slane %v3234, 7
        %v3456 = vrot.slane %v3455, 2
        %v3457 = vrot.slane %v3304, 7
        %v3458 = vrot.slane %v3457, 2
        %v3459 = vrot.slane %v3305, 7
        %v3460 = vrot.slane %v3459, 2
        %v3461 = vrot.slane %v3306, 7
        %v3462 = vrot.slane %v3461, 2
        %v3463 = vrot.slane %v3235, 7
        %v3464 = vrot.slane %v3463, 2
        %v3465 = vrot.slane %v3307, 7
        %v3466 = vrot.slane %v3465, 2
        %v3467 = vrot.slane %v3308, 7
        %v3468 = vrot.slane %v3467, 2
        %v3469 = vrot.slane %v3309, 7
        %v3470 = vrot.slane %v3469, 2
        %v3471 = vrot.slane %v3236, 7
        %v3472 = vrot.slane %v3471, 2
        %v3473 = vrot.slane %v3310, 7
        %v3474 = vrot.slane %v3473, 2
        %v3475 = vrot.slane %v3311, 7
        %v3476 = vrot.slane %v3475, 2
        %v3477 = vrot.slane %v3312, 7
        %v3478 = vrot.slane %v3477, 2
        %v3479 = vrot.slane %v3237, 7
        %v3480 = vrot.slane %v3479, 2
        %v3481 = vrot.slane %v3313, 7
        %v3482 = vrot.slane %v3481, 2
        %v3483 = vrot.slane %v3314, 7
        %v3484 = vrot.slane %v3483, 2
        %v3485 = vrot.slane %v3315, 7
        %v3486 = vrot.slane %v3485, 2
        %v3487 = vrot.slane %v3238, 7
        %v3488 = vrot.slane %v3487, 2
        %v3489 = vrot.slane %v3316, 7
        %v3490 = vrot.slane %v3489, 2
        %v3491 = vrot.slane %v3317, 7
        %v3492 = vrot.slane %v3491, 2
        %v3493 = vrot.slane %v3318, 7
        %v3494 = vrot.slane %v3493, 2
        %v3559 = vmax.f32 %v3223, %v3368
        %v3560 = vmax.f32 %v3271, %v3370
        %v3561 = vmax.f32 %v3272, %v3372
        %v3562 = vmax.f32 %v3273, %v3374
        %v3563 = vmax.f32 %v3224, %v3376
        %v3564 = vmax.f32 %v3274, %v3378
        %v3565 = vmax.f32 %v3275, %v3380
        %v3566 = vmax.f32 %v3276, %v3382
        %v3567 = vmax.f32 %v3225, %v3384
        %v3568 = vmax.f32 %v3277, %v3386
        %v3569 = vmax.f32 %v3278, %v3388
        %v3570 = vmax.f32 %v3279, %v3390
        %v3571 = vmax.f32 %v3226, %v3392
        %v3572 = vmax.f32 %v3280, %v3394
        %v3573 = vmax.f32 %v3281, %v3396
        %v3574 = vmax.f32 %v3282, %v3398
        %v3575 = vmax.f32 %v3227, %v3400
        %v3576 = vmax.f32 %v3283, %v3402
        %v3577 = vmax.f32 %v3284, %v3404
        %v3578 = vmax.f32 %v3285, %v3406
        %v3579 = vmax.f32 %v3228, %v3408
        %v3580 = vmax.f32 %v3286, %v3410
        %v3581 = vmax.f32 %v3287, %v3412
        %v3582 = vmax.f32 %v3288, %v3414
        %v3583 = vmax.f32 %v3229, %v3416
        %v3584 = vmax.f32 %v3289, %v3418
        %v3585 = vmax.f32 %v3290, %v3420
        %v3586 = vmax.f32 %v3291, %v3422
        %v3587 = vmax.f32 %v3230, %v3424
        %v3588 = vmax.f32 %v3292, %v3426
        %v3589 = vmax.f32 %v3293, %v3428
        %v3590 = vmax.f32 %v3294, %v3430
        %v3591 = vmax.f32 %v3231, %v3432
        %v3592 = vmax.f32 %v3295, %v3434
        %v3593 = vmax.f32 %v3296, %v3436
        %v3594 = vmax.f32 %v3297, %v3438
        %v3595 = vmax.f32 %v3232, %v3440
        %v3596 = vmax.f32 %v3298, %v3442
        %v3597 = vmax.f32 %v3299, %v3444
        %v3598 = vmax.f32 %v3300, %v3446
        %v3599 = vmax.f32 %v3233, %v3448
        %v3600 = vmax.f32 %v3301, %v3450
        %v3601 = vmax.f32 %v3302, %v3452
        %v3602 = vmax.f32 %v3303, %v3454
        %v3603 = vmax.f32 %v3234, %v3456
        %v3604 = vmax.f32 %v3304, %v3458
        %v3605 = vmax.f32 %v3305, %v3460
        %v3606 = vmax.f32 %v3306, %v3462
        %v3607 = vmax.f32 %v3235, %v3464
        %v3608 = vmax.f32 %v3307, %v3466
        %v3609 = vmax.f32 %v3308, %v3468
        %v3610 = vmax.f32 %v3309, %v3470
        %v3611 = vmax.f32 %v3236, %v3472
        %v3612 = vmax.f32 %v3310, %v3474
        %v3613 = vmax.f32 %v3311, %v3476
        %v3614 = vmax.f32 %v3312, %v3478
        %v3615 = vmax.f32 %v3237, %v3480
        %v3616 = vmax.f32 %v3313, %v3482
        %v3617 = vmax.f32 %v3314, %v3484
        %v3618 = vmax.f32 %v3315, %v3486
        %v3619 = vmax.f32 %v3238, %v3488
        %v3620 = vmax.f32 %v3316, %v3490
        %v3621 = vmax.f32 %v3317, %v3492
        %v3622 = vmax.f32 %v3318, %v3494
        %v3687 = vperm.slane %v3559, 0
        %v3688 = vperm.slane %v3560, 0
        %v3689 = vperm.slane %v3561, 0
        %v3690 = vperm.slane %v3562, 0
        %v3691 = vperm.slane %v3563, 0
        %v3692 = vperm.slane %v3564, 0
        %v3693 = vperm.slane %v3565, 0
        %v3694 = vperm.slane %v3566, 0
        %v3695 = vperm.slane %v3567, 0
        %v3696 = vperm.slane %v3568, 0
        %v3697 = vperm.slane %v3569, 0
        %v3698 = vperm.slane %v3570, 0
        %v3699 = vperm.slane %v3571, 0
        %v3700 = vperm.slane %v3572, 0
        %v3701 = vperm.slane %v3573, 0
        %v3702 = vperm.slane %v3574, 0
        %v3703 = vperm.slane %v3575, 0
        %v3704 = vperm.slane %v3576, 0
        %v3705 = vperm.slane %v3577, 0
        %v3706 = vperm.slane %v3578, 0
        %v3707 = vperm.slane %v3579, 0
        %v3708 = vperm.slane %v3580, 0
        %v3709 = vperm.slane %v3581, 0
        %v3710 = vperm.slane %v3582, 0
        %v3711 = vperm.slane %v3583, 0
        %v3712 = vperm.slane %v3584, 0
        %v3713 = vperm.slane %v3585, 0
        %v3714 = vperm.slane %v3586, 0
        %v3715 = vperm.slane %v3587, 0
        %v3716 = vperm.slane %v3588, 0
        %v3717 = vperm.slane %v3589, 0
        %v3718 = vperm.slane %v3590, 0
        %v3719 = vperm.slane %v3591, 0
        %v3720 = vperm.slane %v3592, 0
        %v3721 = vperm.slane %v3593, 0
        %v3722 = vperm.slane %v3594, 0
        %v3723 = vperm.slane %v3595, 0
        %v3724 = vperm.slane %v3596, 0
        %v3725 = vperm.slane %v3597, 0
        %v3726 = vperm.slane %v3598, 0
        %v3727 = vperm.slane %v3599, 0
        %v3728 = vperm.slane %v3600, 0
        %v3729 = vperm.slane %v3601, 0
        %v3730 = vperm.slane %v3602, 0
        %v3731 = vperm.slane %v3603, 0
        %v3732 = vperm.slane %v3604, 0
        %v3733 = vperm.slane %v3605, 0
        %v3734 = vperm.slane %v3606, 0
        %v3735 = vperm.slane %v3607, 0
        %v3736 = vperm.slane %v3608, 0
        %v3737 = vperm.slane %v3609, 0
        %v3738 = vperm.slane %v3610, 0
        %v3739 = vperm.slane %v3611, 0
        %v3740 = vperm.slane %v3612, 0
        %v3741 = vperm.slane %v3613, 0
        %v3742 = vperm.slane %v3614, 0
        %v3743 = vperm.slane %v3615, 0
        %v3744 = vperm.slane %v3616, 0
        %v3745 = vperm.slane %v3617, 0
        %v3746 = vperm.slane %v3618, 0
        %v3747 = vperm.slane %v3619, 0
        %v3748 = vperm.slane %v3620, 0
        %v3749 = vperm.slane %v3621, 0
        %v3750 = vperm.slane %v3622, 0
        %v3751 = vsel %vm345, %v3688, %v3687
        %v3752 = vsel %vm349, %v3689, %v3751
        %v3753 = vsel %vm353, %v3690, %v3752
        %vm3754 = vcmask 1044484
        %v3755 = vsel %vm3754, %v3691, %v3753
        %vm3756 = vcmask 1045509
        %v3757 = vsel %vm3756, %v3692, %v3755
        %vm3758 = vcmask 1046534
        %v3759 = vsel %vm3758, %v3693, %v3757
        %vm3760 = vcmask 1047559
        %v3761 = vsel %vm3760, %v3694, %v3759
        %v3762 = vsel %vm345, %v3696, %v3695
        %v3763 = vsel %vm349, %v3697, %v3762
        %v3764 = vsel %vm353, %v3698, %v3763
        %v3765 = vsel %vm3754, %v3699, %v3764
        %v3766 = vsel %vm3756, %v3700, %v3765
        %v3767 = vsel %vm3758, %v3701, %v3766
        %v3768 = vsel %vm3760, %v3702, %v3767
        %v3769 = vsel %vm345, %v3704, %v3703
        %v3770 = vsel %vm349, %v3705, %v3769
        %v3771 = vsel %vm353, %v3706, %v3770
        %v3772 = vsel %vm3754, %v3707, %v3771
        %v3773 = vsel %vm3756, %v3708, %v3772
        %v3774 = vsel %vm3758, %v3709, %v3773
        %v3775 = vsel %vm3760, %v3710, %v3774
        %v3776 = vsel %vm345, %v3712, %v3711
        %v3777 = vsel %vm349, %v3713, %v3776
        %v3778 = vsel %vm353, %v3714, %v3777
        %v3779 = vsel %vm3754, %v3715, %v3778
        %v3780 = vsel %vm3756, %v3716, %v3779
        %v3781 = vsel %vm3758, %v3717, %v3780
        %v3782 = vsel %vm3760, %v3718, %v3781
        %v3783 = vsel %vm345, %v3720, %v3719
        %v3784 = vsel %vm349, %v3721, %v3783
        %v3785 = vsel %vm353, %v3722, %v3784
        %v3786 = vsel %vm3754, %v3723, %v3785
        %v3787 = vsel %vm3756, %v3724, %v3786
        %v3788 = vsel %vm3758, %v3725, %v3787
        %v3789 = vsel %vm3760, %v3726, %v3788
        %v3790 = vsel %vm345, %v3728, %v3727
        %v3791 = vsel %vm349, %v3729, %v3790
        %v3792 = vsel %vm353, %v3730, %v3791
        %v3793 = vsel %vm3754, %v3731, %v3792
        %v3794 = vsel %vm3756, %v3732, %v3793
        %v3795 = vsel %vm3758, %v3733, %v3794
        %v3796 = vsel %vm3760, %v3734, %v3795
        %v3797 = vsel %vm345, %v3736, %v3735
        %v3798 = vsel %vm349, %v3737, %v3797
        %v3799 = vsel %vm353, %v3738, %v3798
        %v3800 = vsel %vm3754, %v3739, %v3799
        %v3801 = vsel %vm3756, %v3740, %v3800
        %v3802 = vsel %vm3758, %v3741, %v3801
        %v3803 = vsel %vm3760, %v3742, %v3802
        %v3804 = vsel %vm345, %v3744, %v3743
        %v3805 = vsel %vm349, %v3745, %v3804
        %v3806 = vsel %vm353, %v3746, %v3805
        %v3807 = vsel %vm3754, %v3747, %v3806
        %v3808 = vsel %vm3756, %v3748, %v3807
        %v3809 = vsel %vm3758, %v3749, %v3808
        %v3810 = vsel %vm3760, %v3750, %v3809
        %3819 = vrot.lane.b32.xlu0 %v3761, 8
        %v3820 = vpop.permute.xlu0 %3819
        %3821 = vrot.lane.b32.xlu0 %v3768, 8
        %v3822 = vpop.permute.xlu0 %3821
        %3823 = vrot.lane.b32.xlu0 %v3775, 8
        %v3824 = vpop.permute.xlu0 %3823
        %3825 = vrot.lane.b32.xlu0 %v3782, 8
        %v3826 = vpop.permute.xlu0 %3825
        %3827 = vrot.lane.b32.xlu0 %v3789, 8
        %v3828 = vpop.permute.xlu0 %3827
        %3829 = vrot.lane.b32.xlu0 %v3796, 8
        %v3830 = vpop.permute.xlu0 %3829
        %3831 = vrot.lane.b32.xlu0 %v3803, 8
        %v3832 = vpop.permute.xlu0 %3831
        %3833 = vrot.lane.b32.xlu0 %v3810, 8
        %v3834 = vpop.permute.xlu0 %3833
        %v3843 = vrot.slane %v3820, 2
        %v3844 = vrot.slane %v3820, 4
        %v3845 = vrot.slane %v3820, 6
        %v3846 = vrot.slane %v3822, 2
        %v3847 = vrot.slane %v3822, 4
        %v3848 = vrot.slane %v3822, 6
        %v3849 = vrot.slane %v3824, 2
        %v3850 = vrot.slane %v3824, 4
        %v3851 = vrot.slane %v3824, 6
        %v3852 = vrot.slane %v3826, 2
        %v3853 = vrot.slane %v3826, 4
        %v3854 = vrot.slane %v3826, 6
        %v3855 = vrot.slane %v3828, 2
        %v3856 = vrot.slane %v3828, 4
        %v3857 = vrot.slane %v3828, 6
        %v3858 = vrot.slane %v3830, 2
        %v3859 = vrot.slane %v3830, 4
        %v3860 = vrot.slane %v3830, 6
        %v3861 = vrot.slane %v3832, 2
        %v3862 = vrot.slane %v3832, 4
        %v3863 = vrot.slane %v3832, 6
        %v3864 = vrot.slane %v3834, 2
        %v3865 = vrot.slane %v3834, 4
        %v3866 = vrot.slane %v3834, 6
        %v3867 = vrot.slane %v3820, 1
        %v3868 = vrot.slane %v3843, 1
        %v3869 = vrot.slane %v3844, 1
        %v3870 = vrot.slane %v3845, 1
        %v3871 = vrot.slane %v3822, 1
        %v3872 = vrot.slane %v3846, 1
        %v3873 = vrot.slane %v3847, 1
        %v3874 = vrot.slane %v3848, 1
        %v3875 = vrot.slane %v3824, 1
        %v3876 = vrot.slane %v3849, 1
        %v3877 = vrot.slane %v3850, 1
        %v3878 = vrot.slane %v3851, 1
        %v3879 = vrot.slane %v3826, 1
        %v3880 = vrot.slane %v3852, 1
        %v3881 = vrot.slane %v3853, 1
        %v3882 = vrot.slane %v3854, 1
        %v3883 = vrot.slane %v3828, 1
        %v3884 = vrot.slane %v3855, 1
        %v3885 = vrot.slane %v3856, 1
        %v3886 = vrot.slane %v3857, 1
        %v3887 = vrot.slane %v3830, 1
        %v3888 = vrot.slane %v3858, 1
        %v3889 = vrot.slane %v3859, 1
        %v3890 = vrot.slane %v3860, 1
        %v3891 = vrot.slane %v3832, 1
        %v3892 = vrot.slane %v3861, 1
        %v3893 = vrot.slane %v3862, 1
        %v3894 = vrot.slane %v3863, 1
        %v3895 = vrot.slane %v3834, 1
        %v3896 = vrot.slane %v3864, 1
        %v3897 = vrot.slane %v3865, 1
        %v3898 = vrot.slane %v3866, 1
        %v3963 = vmax.f32 %v3559, %v3820
        %v3964 = vmax.f32 %v3560, %v3867
        %v3965 = vmax.f32 %v3561, %v3843
        %v3966 = vmax.f32 %v3562, %v3868
        %v3967 = vmax.f32 %v3563, %v3844
        %v3968 = vmax.f32 %v3564, %v3869
        %v3969 = vmax.f32 %v3565, %v3845
        %v3970 = vmax.f32 %v3566, %v3870
        %v3971 = vmax.f32 %v3567, %v3822
        %v3972 = vmax.f32 %v3568, %v3871
        %v3973 = vmax.f32 %v3569, %v3846
        %v3974 = vmax.f32 %v3570, %v3872
        %v3975 = vmax.f32 %v3571, %v3847
        %v3976 = vmax.f32 %v3572, %v3873
        %v3977 = vmax.f32 %v3573, %v3848
        %v3978 = vmax.f32 %v3574, %v3874
        %v3979 = vmax.f32 %v3575, %v3824
        %v3980 = vmax.f32 %v3576, %v3875
        %v3981 = vmax.f32 %v3577, %v3849
        %v3982 = vmax.f32 %v3578, %v3876
        %v3983 = vmax.f32 %v3579, %v3850
        %v3984 = vmax.f32 %v3580, %v3877
        %v3985 = vmax.f32 %v3581, %v3851
        %v3986 = vmax.f32 %v3582, %v3878
        %v3987 = vmax.f32 %v3583, %v3826
        %v3988 = vmax.f32 %v3584, %v3879
        %v3989 = vmax.f32 %v3585, %v3852
        %v3990 = vmax.f32 %v3586, %v3880
        %v3991 = vmax.f32 %v3587, %v3853
        %v3992 = vmax.f32 %v3588, %v3881
        %v3993 = vmax.f32 %v3589, %v3854
        %v3994 = vmax.f32 %v3590, %v3882
        %v3995 = vmax.f32 %v3591, %v3828
        %v3996 = vmax.f32 %v3592, %v3883
        %v3997 = vmax.f32 %v3593, %v3855
        %v3998 = vmax.f32 %v3594, %v3884
        %v3999 = vmax.f32 %v3595, %v3856
        %v4000 = vmax.f32 %v3596, %v3885
        %v4001 = vmax.f32 %v3597, %v3857
        %v4002 = vmax.f32 %v3598, %v3886
        %v4003 = vmax.f32 %v3599, %v3830
        %v4004 = vmax.f32 %v3600, %v3887
        %v4005 = vmax.f32 %v3601, %v3858
        %v4006 = vmax.f32 %v3602, %v3888
        %v4007 = vmax.f32 %v3603, %v3859
        %v4008 = vmax.f32 %v3604, %v3889
        %v4009 = vmax.f32 %v3605, %v3860
        %v4010 = vmax.f32 %v3606, %v3890
        %v4011 = vmax.f32 %v3607, %v3832
        %v4012 = vmax.f32 %v3608, %v3891
        %v4013 = vmax.f32 %v3609, %v3861
        %v4014 = vmax.f32 %v3610, %v3892
        %v4015 = vmax.f32 %v3611, %v3862
        %v4016 = vmax.f32 %v3612, %v3893
        %v4017 = vmax.f32 %v3613, %v3863
        %v4018 = vmax.f32 %v3614, %v3894
        %v4019 = vmax.f32 %v3615, %v3834
        %v4020 = vmax.f32 %v3616, %v3895
        %v4021 = vmax.f32 %v3617, %v3864
        %v4022 = vmax.f32 %v3618, %v3896
        %v4023 = vmax.f32 %v3619, %v3865
        %v4024 = vmax.f32 %v3620, %v3897
        %v4025 = vmax.f32 %v3621, %v3866
        %v4026 = vmax.f32 %v3622, %v3898
        %v4091 = vperm.slane %v3963, 0
        %v4092 = vperm.slane %v3964, 0
        %v4093 = vperm.slane %v3965, 0
        %v4094 = vperm.slane %v3966, 0
        %v4095 = vperm.slane %v3967, 0
        %v4096 = vperm.slane %v3968, 0
        %v4097 = vperm.slane %v3969, 0
        %v4098 = vperm.slane %v3970, 0
        %v4099 = vperm.slane %v3971, 0
        %v4100 = vperm.slane %v3972, 0
        %v4101 = vperm.slane %v3973, 0
        %v4102 = vperm.slane %v3974, 0
        %v4103 = vperm.slane %v3975, 0
        %v4104 = vperm.slane %v3976, 0
        %v4105 = vperm.slane %v3977, 0
        %v4106 = vperm.slane %v3978, 0
        %v4107 = vperm.slane %v3979, 0
        %v4108 = vperm.slane %v3980, 0
        %v4109 = vperm.slane %v3981, 0
        %v4110 = vperm.slane %v3982, 0
        %v4111 = vperm.slane %v3983, 0
        %v4112 = vperm.slane %v3984, 0
        %v4113 = vperm.slane %v3985, 0
        %v4114 = vperm.slane %v3986, 0
        %v4115 = vperm.slane %v3987, 0
        %v4116 = vperm.slane %v3988, 0
        %v4117 = vperm.slane %v3989, 0
        %v4118 = vperm.slane %v3990, 0
        %v4119 = vperm.slane %v3991, 0
        %v4120 = vperm.slane %v3992, 0
        %v4121 = vperm.slane %v3993, 0
        %v4122 = vperm.slane %v3994, 0
        %v4123 = vperm.slane %v3995, 0
        %v4124 = vperm.slane %v3996, 0
        %v4125 = vperm.slane %v3997, 0
        %v4126 = vperm.slane %v3998, 0
        %v4127 = vperm.slane %v3999, 0
        %v4128 = vperm.slane %v4000, 0
        %v4129 = vperm.slane %v4001, 0
        %v4130 = vperm.slane %v4002, 0
        %v4131 = vperm.slane %v4003, 0
        %v4132 = vperm.slane %v4004, 0
        %v4133 = vperm.slane %v4005, 0
        %v4134 = vperm.slane %v4006, 0
        %v4135 = vperm.slane %v4007, 0
        %v4136 = vperm.slane %v4008, 0
        %v4137 = vperm.slane %v4009, 0
        %v4138 = vperm.slane %v4010, 0
        %v4139 = vperm.slane %v4011, 0
        %v4140 = vperm.slane %v4012, 0
        %v4141 = vperm.slane %v4013, 0
        %v4142 = vperm.slane %v4014, 0
        %v4143 = vperm.slane %v4015, 0
        %v4144 = vperm.slane %v4016, 0
        %v4145 = vperm.slane %v4017, 0
        %v4146 = vperm.slane %v4018, 0
        %v4147 = vperm.slane %v4019, 0
        %v4148 = vperm.slane %v4020, 0
        %v4149 = vperm.slane %v4021, 0
        %v4150 = vperm.slane %v4022, 0
        %v4151 = vperm.slane %v4023, 0
        %v4152 = vperm.slane %v4024, 0
        %v4153 = vperm.slane %v4025, 0
        %v4154 = vperm.slane %v4026, 0
        %v4155 = vsel %vm345, %v4092, %v4091
        %v4156 = vsel %vm349, %v4093, %v4155
        %v4157 = vsel %vm353, %v4094, %v4156
        %v4158 = vsel %vm3754, %v4095, %v4157
        %v4159 = vsel %vm3756, %v4096, %v4158
        %v4160 = vsel %vm3758, %v4097, %v4159
        %v4161 = vsel %vm3760, %v4098, %v4160
        %v4162 = vsel %vm345, %v4100, %v4099
        %v4163 = vsel %vm349, %v4101, %v4162
        %v4164 = vsel %vm353, %v4102, %v4163
        %v4165 = vsel %vm3754, %v4103, %v4164
        %v4166 = vsel %vm3756, %v4104, %v4165
        %v4167 = vsel %vm3758, %v4105, %v4166
        %v4168 = vsel %vm3760, %v4106, %v4167
        %v4169 = vsel %vm345, %v4108, %v4107
        %v4170 = vsel %vm349, %v4109, %v4169
        %v4171 = vsel %vm353, %v4110, %v4170
        %v4172 = vsel %vm3754, %v4111, %v4171
        %v4173 = vsel %vm3756, %v4112, %v4172
        %v4174 = vsel %vm3758, %v4113, %v4173
        %v4175 = vsel %vm3760, %v4114, %v4174
        %v4176 = vsel %vm345, %v4116, %v4115
        %v4177 = vsel %vm349, %v4117, %v4176
        %v4178 = vsel %vm353, %v4118, %v4177
        %v4179 = vsel %vm3754, %v4119, %v4178
        %v4180 = vsel %vm3756, %v4120, %v4179
        %v4181 = vsel %vm3758, %v4121, %v4180
        %v4182 = vsel %vm3760, %v4122, %v4181
        %v4183 = vsel %vm345, %v4124, %v4123
        %v4184 = vsel %vm349, %v4125, %v4183
        %v4185 = vsel %vm353, %v4126, %v4184
        %v4186 = vsel %vm3754, %v4127, %v4185
        %v4187 = vsel %vm3756, %v4128, %v4186
        %v4188 = vsel %vm3758, %v4129, %v4187
        %v4189 = vsel %vm3760, %v4130, %v4188
        %v4190 = vsel %vm345, %v4132, %v4131
        %v4191 = vsel %vm349, %v4133, %v4190
        %v4192 = vsel %vm353, %v4134, %v4191
        %v4193 = vsel %vm3754, %v4135, %v4192
        %v4194 = vsel %vm3756, %v4136, %v4193
        %v4195 = vsel %vm3758, %v4137, %v4194
        %v4196 = vsel %vm3760, %v4138, %v4195
        %v4197 = vsel %vm345, %v4140, %v4139
        %v4198 = vsel %vm349, %v4141, %v4197
        %v4199 = vsel %vm353, %v4142, %v4198
        %v4200 = vsel %vm3754, %v4143, %v4199
        %v4201 = vsel %vm3756, %v4144, %v4200
        %v4202 = vsel %vm3758, %v4145, %v4201
        %v4203 = vsel %vm3760, %v4146, %v4202
        %v4204 = vsel %vm345, %v4148, %v4147
        %v4205 = vsel %vm349, %v4149, %v4204
        %v4206 = vsel %vm353, %v4150, %v4205
        %v4207 = vsel %vm3754, %v4151, %v4206
        %v4208 = vsel %vm3756, %v4152, %v4207
        %v4209 = vsel %vm3758, %v4153, %v4208
        %v4210 = vsel %vm3760, %v4154, %v4209
        %4219 = vst [vmem:[%s258] sm:$0xff] %v4161
        %4220 = vst [vmem:[%s258 + $0x8] sm:$0xff] %v4168
        %4221 = vst [vmem:[%s258 + $0x10] sm:$0xff] %v4175
        %4222 = vst [vmem:[%s258 + $0x18] sm:$0xff] %v4182
        %4223 = vst [vmem:[%s258 + $0x20] sm:$0xff] %v4189
        %4224 = vst [vmem:[%s258 + $0x28] sm:$0xff] %v4196
        %4225 = vst [vmem:[%s258 + $0x30] sm:$0xff] %v4203
        %4226 = vst [vmem:[%s258 + $0x38] sm:$0xff] %v4210
        %s4227 = sand.u32 %s142, 1
        %s4228 = scalar_lea.sflag [#allocation3], %s4227
        %s4229 = sand.u32 %s142, 1
        %s4230 = smul.addr %s4229, 128
        %s4231 = scalar_lea.vmem [#allocation2], %s4230
        %s4232 = sand.u32 %s168, 1
        %s4233 = scalar_lea.sflag [#allocation5], %s4232
        %s4234 = sand.u32 %s168, 1
        %s4235 = smul.addr %s4234, 64
        %s4236 = scalar_lea.vmem [#allocation4], %s4235
        // Predicated region
        $region41: #{tpu_custom_call.1} parent=39 // pred_check
          %p4237 = pneg %p152
        $region42: #{tpu_custom_call.1} parent=39 // pred_check_branch
          %4239 = sbr.rel (%p4237) target = $region44
        $region43: #{tpu_custom_call.1} parent=39 // pred_region
          %s4240 = smul.u32 8, %s24
          %4242 = vsyncadd %s4228, 0
          %s4243 = smul.addr %s4240, 2
          %s4244 = smul.addr %s4243, 8
          %s4245 = scalar_lea.hbm %s5, %s4244
          %s4246 = sshll.u32 %s4231, 4
          %s4247 = int_to_ptr.vmem [resolvable:$true] %s4246
          %s4248 = sshll.u32 %s4245, 4
          %s4249 = int_to_ptr.hbm [resolvable:$true] %s4248
          %4254 = dma.vmem_to_hbm [thread:$0]  %s4247, 2048, %s4249, %s4228, 128, 128, 8
        $region44: #{tpu_custom_call.1} parent=39 // pred_fallthru
          _
        // Predicated region
        $region45: #{tpu_custom_call.1} parent=39 // pred_check
          %p4255 = pneg %p178
        $region46: #{tpu_custom_call.1} parent=39 // pred_check_branch
          %4257 = sbr.rel (%p4255) target = $region48
        $region47: #{tpu_custom_call.1} parent=39 // pred_region
          %s4258 = smul.u32 8, %s24
          %4260 = vsyncadd %s4233, 0
          %s4261 = smul.addr %s4258, 8
          %s4262 = scalar_lea.hbm %s6, %s4261
          %s4263 = sshll.u32 %s4236, 4
          %s4264 = int_to_ptr.vmem [resolvable:$true] %s4263
          %s4265 = sshll.u32 %s4262, 4
          %s4266 = int_to_ptr.hbm [resolvable:$true] %s4265
          %4271 = dma.vmem_to_hbm [thread:$0]  %s4264, 1024, %s4266, %s4233, 128, 128, 8
        $region48: #{tpu_custom_call.1} parent=39 // pred_fallthru
          _
      $region40: #{tpu_custom_call.1} parent=5 // pred_fallthru
        _
      %p4272 = scmp.le.s32.totalorder 2, %s19
      // Predicated region
      $region49: #{tpu_custom_call.1} parent=5 // pred_check
        %p4273 = pneg %p4272
      $region50: #{tpu_custom_call.1} parent=5 // pred_check_branch
        %4275 = sbr.rel (%p4273) target = $region52
      $region51: #{tpu_custom_call.1} parent=5 // pred_region
        %s4276 = ssub.s32 %s19, 2
        // Predicated region
        $region53: #{tpu_custom_call.1} parent=51 // pred_check
          %p4277 = pneg %p158
        $region54: #{tpu_custom_call.1} parent=51 // pred_check_branch
          %4279 = sbr.rel (%p4277) target = $region56
        $region55: #{tpu_custom_call.1} parent=51 // pred_region
          %s4280 = sand.u32 %s143, 1
          %s4281 = scalar_lea.sflag [#allocation3], %s4280
          %s4282 = sand.u32 %s143, 1
          %s4283 = smul.addr %s4282, 128
          %s4284 = scalar_lea.vmem [#allocation2], %s4283
          %4286 = dma.done %s4281, 2048
        $region56: #{tpu_custom_call.1} parent=51 // pred_fallthru
          _
        // Predicated region
        $region57: #{tpu_custom_call.1} parent=51 // pred_check
          %p4287 = pneg %p184
        $region58: #{tpu_custom_call.1} parent=51 // pred_check_branch
          %4289 = sbr.rel (%p4287) target = $region60
        $region59: #{tpu_custom_call.1} parent=51 // pred_region
          %s4290 = sand.u32 %s169, 1
          %s4291 = scalar_lea.sflag [#allocation5], %s4290
          %s4292 = sand.u32 %s169, 1
          %s4293 = smul.addr %s4292, 64
          %s4294 = scalar_lea.vmem [#allocation4], %s4293
          %4296 = dma.done %s4291, 1024
        $region60: #{tpu_custom_call.1} parent=51 // pred_fallthru
          _
      $region52: #{tpu_custom_call.1} parent=5 // pred_fallthru
        _
    $region6: #{tpu_custom_call.1} parent=1 // loop_footer
      %s23 = sadd.s32 1, %s19
    $region7: #{tpu_custom_call.1} parent=1 // loop_footer_branch
      %18 = sbr.rel target = $region3
    $region8: #{tpu_custom_call.1} parent=1 // loop_exit
      _
    %4297 = vsyncpa [#allocation3], 1
    %s4298 = scalar_lea.sflag [#allocation3], 1
    %4299 = vsyncpa %s4298, 1
    %4300 = vsyncpa [#allocation5], 1
    %s4301 = scalar_lea.sflag [#allocation5], 1
    %4302 = vsyncpa %s4301, 1

</llo_original>
